<compile_context>
chip_gen: v5e
topology: v5e:2x2
jax: 0.10.0
libtpu: 0.0.40
codegen_flags: <defaults>
</compile_context>

<pallas_src>
import math

import jax
import jax.numpy as jnp
from jax.experimental import pallas as pl
from jax.experimental.pallas import tpu as pltpu

BN_EPS = 1e-5


def _round_up(v, m):
    return -(-v // m) * m


def _gelu(x):
    # Exact nn.GELU (erf form).  erf via Abramowitz & Stegun 7.1.26
    # (|abs err| <= 1.5e-7).  The 1/(1+p*|z|) divide runs on the EUP
    # (approx reciprocal + one Newton refinement -> ~f32 accuracy).
    z = x * 0.7071067811865476
    az = jnp.abs(z)
    d = 1.0 + 0.3275911 * az
    t0 = pl.reciprocal(d, approx=True)
    t = t0 * (2.0 - d * t0)                      # Newton step, error ~eps^2
    poly = t * (0.254829592 + t * (-0.284496736 + t * (1.421413741
              + t * (-1.453152027 + t * 1.061405429))))
    erf_abs = 1.0 - poly * jnp.exp(-az * az)
    erf_z = jnp.where(z < 0.0, -erf_abs, erf_abs)
    return 0.5 * x * (1.0 + erf_z)


# ---------------------------------------------------------------------------
# fused forward pass
# ---------------------------------------------------------------------------
def cae4_bn_forward(x, params):
    """CAE_4_bn forward (x -> (out, extra_out)) as one fused Pallas kernel."""
    n_b, c_in, length = x.shape
    k = params["conv1"]["w"].shape[2]
    fm = params["conv1"]["w"].shape[0]
    c1, c2, c3, c4 = fm, 2 * fm, 4 * fm, 8 * fm

    # ---- static geometry ---------------------------------------------------
    l1 = (length - k) // 2 + 1          # conv1, stride 2
    l2 = (l1 - k) // 2 + 1              # conv2, stride 2
    l3 = l2 - k + 1                     # conv3, stride 1
    l4 = l3 - k + 1                     # conv4, stride 1
    m4 = l4 + k - 1                     # deconv4, stride 1 (== l3)
    m3 = m4 + k - 1                     # deconv3, stride 1 (== l2)
    lz = (m3 - 1) * 2 + k               # deconv2, stride 2, output_padding 0
    ly = (lz - 1) * 2 + k + 1           # deconv1, stride 2, output_padding 1
    assert min(l1, l2, l3, l4) >= 1, "input length too small for kernel_size"

    p1 = ((l1 + 1) // 2, l1 // 2)       # conv1 output phase lengths (even/odd)
    zp = ((lz + 1) // 2, lz // 2)       # deconv2 output phase lengths
    wp = tuple((ly - p + 3) // 4 for p in range(4))   # deconv1 mod-4 phase lens
    lq = -(-length // 4)                # x is fed as 4 polyphase slices, len lq

    # Per-buffer left pads.  Valid data of batch n lives at columns
    # [n*BC + PAD, n*BC + PAD + L); pads shrink along the decoder chain so all
    # fused-tap slice offsets stay >= 0 and the transposed convs read zeros.
    D1 = (((k - 1) // 2) + 1) // 2      # deconv1 max left tap reach
    D2 = (k - 1) // 2                   # deconv2 max left tap reach
    PAD_Z = D1
    PAD_D3 = PAD_Z + D2
    PAD_D4 = PAD_D3 + (k - 1)
    PAD_H = PAD_D4 + (k - 1)            # x / h1 / h2 / h3 / h4 share this pad

    # Per-batch block stride, chosen so the stored width n_b*BC is a multiple
    # of 128 lanes (lane-dense unmasked stores, the biggest store-path lever).
    bc_min = max(PAD_H + lq, PAD_H + max(p1), PAD_H + l2, PAD_H + l3,
                 PAD_H + m4, PAD_D4 + m3, PAD_D3 + zp[0], PAD_Z + wp[0], wp[0])
    BC = _round_up(bc_min, 128 // math.gcd(n_b, 128))
    W = n_b * BC                        # computed / stored width of every layer
    WBUF = W + k                        # + tail so shifted tap slices stay in-bounds

    # ---- the single fused kernel -------------------------------------------
    def kernel(xq0, xq1, xq2, xq3,
               w1s, b1, g1, be1, w2s, b2, g2, be2,
               w3s, b3, g3, be3, w4s, b4, g4, be4,
               u4s, d4b, d4g, d4be, u3s, d3b, d3g, d3be,
               u2e, u2o, d2b, d2g, d2be, u1e, u1o, d1b,
               extra_ref, y0_ref, y1_ref, y2_ref, y3_ref,
               s_h1e, s_h1o, s_h2, s_h3, s_h4, s_d4, s_d3, s_ze, s_zo, stage):
        xqs = (xq0, xq1, xq2, xq3)
        yrefs = (y0_ref, y1_ref, y2_ref, y3_ref)

        # column index within each per-batch block (for valid-column masks)
        col = jax.lax.broadcasted_iota(jnp.int32, (1, W), 1)
        colb = col
        for n in range(1, n_b):
            colb = jnp.where(col >= n * BC, col - n * BC, colb)

        def vmask(pad_l, ln):
            return jnp.logical_and(colb >= pad_l, colb < pad_l + ln)

        def fused_conv(taps, wref, bref):
            # taps: list of (src_ref, static column offset, C_in).  One staged
            # (sum C_in, W) block + ONE MXU matmul per layer/phase, covering
            # every batch at once.
            row = 0
            for src, off, ci in taps:
                stage[row:row + ci, :] = src[:, off:off + W]
                row += ci
            return jnp.dot(wref[...], stage[0:row, :],
                           preferred_element_type=jnp.float32) + bref[...]

        def gelu_bn_store(blocks, masks, lens, dsts, gref, beref, extra=None):
            # conv(+bias) -> GELU -> BatchNorm1d (training batch stats, biased
            # variance, eps=1e-5).  Pad / garbage columns are select-masked out
            # of the statistics and stored as exact zeros (so no scratch
            # zero-init is needed and the full-conv layers read true zeros).
            acts = [_gelu(b) for b in blocks]
            inv_m = 1.0 / float(n_b * sum(lens))
            ssum = None
            ssq = None
            for a, mk in zip(acts, masks):
                am = jnp.where(mk, a, 0.0)
                s1 = jnp.sum(am, axis=1, keepdims=True)
                s2 = jnp.sum(am * am, axis=1, keepdims=True)
                ssum = s1 if ssum is None else ssum + s1
                ssq = s2 if ssq is None else ssq + s2
            mean = ssum * inv_m
            var = jnp.maximum(ssq * inv_m - mean * mean, 0.0)
            scale = jax.lax.rsqrt(var + BN_EPS) * gref[...]
            shift = beref[...] - mean * scale
            for a, mk, dst in zip(acts, masks, dsts):
                out = jnp.where(mk, a * scale + shift, 0.0)
                dst[:, 0:W] = out                     # lane-dense, width = n_b*BC
                if extra is not None:
                    extra[...] = out                  # extra_out written in-place

        # ---- conv1 (stride 2): two output phases, reads 4 x polyphase bufs
        blocks, masks, lens, dsts = [], [], [], []
        for r in range(2):
            taps = [(xqs[(2 * r + j) % 4], (2 * r + j) // 4, c_in)
                    for j in range(k)]
            blocks.append(fused_conv(taps, w1s, b1))
            masks.append(vmask(PAD_H, p1[r]))
            lens.append(p1[r])
            dsts.append(s_h1e if r == 0 else s_h1o)
        gelu_bn_store(blocks, masks, lens, dsts, g1, be1)

        # ---- conv2 (stride 2): reads the two h1 phase buffers
        taps = [((s_h1e if j % 2 == 0 else s_h1o), j // 2, c1) for j in range(k)]
        gelu_bn_store([fused_conv(taps, w2s, b2)], [vmask(PAD_H, l2)], [l2],
                      [s_h2], g2, be2)

        # ---- conv3 / conv4 (stride 1); conv4 epilogue also writes extra_out
        taps = [(s_h2, j, c2) for j in range(k)]
        gelu_bn_store([fused_conv(taps, w3s, b3)], [vmask(PAD_H, l3)], [l3],
                      [s_h3], g3, be3)
        taps = [(s_h3, j, c3) for j in range(k)]
        gelu_bn_store([fused_conv(taps, w4s, b4)], [vmask(PAD_H, l4)], [l4],
                      [s_h4], g4, be4, extra=extra_ref)

        # ---- deconv4 / deconv3 (stride-1 transposed == full conv, weights
        #      pre-flipped and pre-stacked; pad chain keeps offsets >= 0)
        taps = [(s_h4, j, c4) for j in range(k)]
        gelu_bn_store([fused_conv(taps, u4s, d4b)], [vmask(PAD_D4, m4)], [m4],
                      [s_d4], d4g, d4be)
        taps = [(s_d4, j, c3) for j in range(k)]
        gelu_bn_store([fused_conv(taps, u3s, d3b)], [vmask(PAD_D3, m3)], [m3],
                      [s_d3], d3g, d3be)

        # ---- deconv2 (stride-2 transposed): per output phase, no zero-insert
        blocks, masks, lens, dsts = [], [], [], []
        for r in range(2):
            taps = [(s_d3, D2 - a, c2) for a, _ in enumerate(range(r, k, 2))]
            blocks.append(fused_conv(taps, (u2e if r == 0 else u2o), d2b))
            masks.append(vmask(PAD_Z, zp[r]))
            lens.append(zp[r])
            dsts.append(s_ze if r == 0 else s_zo)
        gelu_bn_store(blocks, masks, lens, dsts, d2g, d2be)

        # ---- deconv1 (stride-2 transposed, output_padding=1) + sigmoid:
        #      4 output phases computed straight from the two z phase buffers
        for ph in range(4):
            r1, r2 = ph % 2, ph // 2
            taps = []
            for i in range(r1, k, 2):
                a = (i - r1) // 2
                q = (r2 - a) % 2
                d = (r2 - a) // 2                     # floor division
                taps.append(((s_ze if q == 0 else s_zo), PAD_Z + d, c1))
            blk = fused_conv(taps, (u1e if r1 == 0 else u1o), d1b)
            yrefs[ph][...] = jax.nn.sigmoid(blk)

    # ---- one-time XLA-side layout prep (polyphase split, weight stacking) ---
    f32 = jnp.float32
    xpad = jnp.pad(x.astype(f32), ((0, 0), (0, 0), (0, 4 * lq - length)))
    xt = jnp.transpose(xpad, (1, 0, 2)).reshape(c_in, n_b, lq, 4)
    xqs = []
    for q in range(4):
        buf = jnp.zeros((c_in, n_b, BC), f32)
        buf = buf.at[:, :, PAD_H:PAD_H + lq].set(xt[:, :, :, q])
        xqs.append(jnp.pad(buf.reshape(c_in, W), ((0, 0), (0, WBUF - W))))

    def stack_conv(w):          # (C_out, C_in, k) -> (C_out, k*C_in), tap-major
        co, ci, _ = w.shape
        return jnp.transpose(w, (0, 2, 1)).reshape(co, k * ci).astype(f32)

    def stack_deconv_full(w):   # (C_in, C_out, k) -> flipped full-conv taps
        ci, co, _ = w.shape
        return jnp.transpose(w[:, :, ::-1], (1, 2, 0)).reshape(co, k * ci).astype(f32)

    def stack_deconv_phase(w, parity):   # raw taps i = parity, parity+2, ...
        ci, co, _ = w.shape
        wt = jnp.stack([w[:, :, i].T for i in range(parity, k, 2)], axis=1)
        return wt.reshape(co, -1).astype(f32)

    def col(v):
        return v.reshape(-1, 1).astype(f32)

    inputs = list(xqs)
    for name in ("conv1", "conv2", "conv3", "conv4"):
        p = params[name]
        inputs += [stack_conv(p["w"]), col(p["b"]), col(p["gamma"]), col(p["beta"])]
    for name in ("deconv4", "deconv3"):
        p = params[name]
        inputs += [stack_deconv_full(p["w"]), col(p["b"]),
                   col(p["gamma"]), col(p["beta"])]
    p = params["deconv2"]
    inputs += [stack_deconv_phase(p["w"], 0), stack_deconv_phase(p["w"], 1),
               col(p["b"]), col(p["gamma"]), col(p["beta"])]
    p = params["deconv1"]
    inputs += [stack_deconv_phase(p["w"], 0), stack_deconv_phase(p["w"], 1),
               col(p["b"])]

    vmem = pl.BlockSpec(memory_space=pltpu.MemorySpace.VMEM)
    out_shape = (
        jax.ShapeDtypeStruct((c4, W), f32),       # extra_out (padded layout)
        jax.ShapeDtypeStruct((c_in, W), f32),     # y phase 0
        jax.ShapeDtypeStruct((c_in, W), f32),     # y phase 1
        jax.ShapeDtypeStruct((c_in, W), f32),     # y phase 2
        jax.ShapeDtypeStruct((c_in, W), f32),     # y phase 3
    )
    scratch_shapes = [
        pltpu.VMEM((c1, WBUF), f32), pltpu.VMEM((c1, WBUF), f32),   # h1 even/odd
        pltpu.VMEM((c2, WBUF), f32),                                # h2
        pltpu.VMEM((c3, WBUF), f32),                                # h3
        pltpu.VMEM((c4, WBUF), f32),                                # h4
        pltpu.VMEM((c3, WBUF), f32),                                # d4
        pltpu.VMEM((c2, WBUF), f32),                                # d3
        pltpu.VMEM((c1, WBUF), f32), pltpu.VMEM((c1, WBUF), f32),   # z even/odd
        pltpu.VMEM((k * c4, W), f32),                               # tap staging
    ]
    fused = pl.pallas_call(
        kernel,
        out_shape=out_shape,
        in_specs=[vmem] * len(inputs),
        out_specs=tuple([vmem] * len(out_shape)),
        scratch_shapes=scratch_shapes,
    )
    extra2d, y0, y1, y2, y3 = fused(*inputs)

    # ---- slice the valid columns back out and de-interleave output phases ---
    extra = jnp.transpose(
        extra2d.reshape(c4, n_b, BC)[:, :, PAD_H:PAD_H + l4], (1, 0, 2))
    wmax = wp[0]
    phases = []
    for ph, yp in enumerate((y0, y1, y2, y3)):
        ypn = yp.reshape(c_in, n_b, BC)[:, :, 0:wp[ph]]
        if wp[ph] < wmax:
            ypn = jnp.pad(ypn, ((0, 0), (0, 0), (0, wmax - wp[ph])))
        phases.append(ypn)
    ystack = jnp.stack(phases, axis=-1)                        # (C, N, wmax, 4)
    out = jnp.transpose(ystack, (1, 0, 2, 3)).reshape(n_b, c_in, wmax * 4)[:, :, :ly]
    return out, extra


# ---------------------------------------------------------------------------
# pure-JAX reference (faithful port of the PyTorch forward) for verification
# ---------------------------------------------------------------------------
def _ref_conv1d(x, w, b, stride):
    n, ci, l = x.shape
    co, _, k = w.shape
    lo = (l - k) // stride + 1
    cols = jnp.stack(
        [x[:, :, j: j + stride * (lo - 1) + 1: stride] for j in range(k)], axis=-1)
    y = jnp.einsum("nclk,ock->nol", cols, w,
                   precision=jax.lax.Precision.HIGHEST)
    return y + b[None, :, None]


def _ref_deconv1d(x, w, b, stride, out_pad):
    n, ci, l = x.shape
    _, co, k = w.shape
    lz = (l - 1) * stride + 1
    xz = jnp.zeros((n, ci, lz), x.dtype).at[:, :, ::stride].set(x)
    xp = jnp.pad(xz, ((0, 0), (0, 0), (k - 1, k - 1 + out_pad)))
    wflip = jnp.transpose(w[:, :, ::-1], (1, 0, 2))
    return _ref_conv1d(xp, wflip, b, 1)


def _reference_forward(x, params):
    def act(v):
        return jax.nn.gelu(v, approximate=False)      # exact nn.GELU

    def bn(v, p):
        mean = jnp.mean(v, axis=(0, 2), keepdims=True)
        var = jnp.mean((v - mean) ** 2, axis=(0, 2), keepdims=True)
        g = p["gamma"][None, :, None]
        b = p["beta"][None, :, None]
        return (v - mean) * jax.lax.rsqrt(var + BN_EPS) * g + b

    h = x
    for name, stride in (("conv1", 2), ("conv2", 2), ("conv3", 1), ("conv4", 1)):
        p = params[name]
        h = bn(act(_ref_conv1d(h, p["w"], p["b"], stride)), p)
    extra = h
    for name, stride, op in (("deconv4", 1, 0), ("deconv3", 1, 0), ("deconv2", 2, 0)):
        p = params[name]
        h = bn(act(_ref_deconv1d(h, p["w"], p["b"], stride, op)), p)
    p = params["deconv1"]
    h = jax.nn.sigmoid(_ref_deconv1d(h, p["w"], p["b"], 2, 1))
    return h, extra


# ---------------------------------------------------------------------------
# deterministic parameter init (PyTorch-style uniform bounds; BN affine = 1/0)
# ---------------------------------------------------------------------------
def _init_layer(key, c_out, c_in, k, transpose=False, bn=True):
    kw, kb = jax.random.split(key)
    bound = 1.0 / float(c_in * k) ** 0.5
    shape = (c_in, c_out, k) if transpose else (c_out, c_in, k)
    p = {"w": jax.random.uniform(kw, shape, jnp.float32, -bound, bound),
         "b": jax.random.uniform(kb, (c_out,), jnp.float32, -bound, bound)}
    if bn:
        p["gamma"] = jnp.ones((c_out,), jnp.float32)
        p["beta"] = jnp.zeros((c_out,), jnp.float32)
    return p


def init_params(key, input_channels, fm, k):
    ks = jax.random.split(key, 8)
    return {
        "conv1": _init_layer(ks[0], fm, input_channels, k),
        "conv2": _init_layer(ks[1], 2 * fm, fm, k),
        "conv3": _init_layer(ks[2], 4 * fm, 2 * fm, k),
        "conv4": _init_layer(ks[3], 8 * fm, 4 * fm, k),
        "deconv4": _init_layer(ks[4], 4 * fm, 8 * fm, k, transpose=True),
        "deconv3": _init_layer(ks[5], 2 * fm, 4 * fm, k, transpose=True),
        "deconv2": _init_layer(ks[6], fm, 2 * fm, k, transpose=True),
        "deconv1": _init_layer(ks[7], input_channels, fm, k, transpose=True, bn=False),
    }


if __name__ == "__main__":
    batch, input_channels, length = 2, 4, 64
    filter_multiplier, kernel_size = 4, 5

    key = jax.random.PRNGKey(0)
    kp, kx = jax.random.split(key)
    params = init_params(kp, input_channels, filter_multiplier, kernel_size)
    x = jax.random.uniform(kx, (batch, input_channels, length), jnp.float32)

    fwd = jax.jit(cae4_bn_forward)
    out, extra = fwd(x, params)
    jax.block_until_ready((out, extra))

    # PyTorch-equivalent output lengths for L=64, k=5: out length 62, code length 5
    assert out.shape == (batch, input_channels, 62), out.shape
    assert extra.shape == (batch, filter_multiplier * 8, 5), extra.shape
    assert bool(jnp.all(jnp.isfinite(out))) and bool(jnp.all(jnp.isfinite(extra)))

    # verify against a faithful pure-JAX port of the PyTorch module
    ref_out, ref_extra = _reference_forward(x, params)
    assert float(jnp.max(jnp.abs(out - ref_out))) < 2e-3
    assert float(jnp.max(jnp.abs(extra - ref_extra))) < 2e-3

    print("KERNEL_OK")
</pallas_src>

<mosaic_0001>
module attributes {stable_mosaic.version = 11 : i64} {
  func.func @kernel(%arg0: memref<4x133xf32, #tpu.memory_space<vmem>>, %arg1: memref<4x133xf32, #tpu.memory_space<vmem>>, %arg2: memref<4x133xf32, #tpu.memory_space<vmem>>, %arg3: memref<4x133xf32, #tpu.memory_space<vmem>>, %arg4: memref<4x20xf32, #tpu.memory_space<vmem>>, %arg5: memref<4x1xf32, #tpu.memory_space<vmem>>, %arg6: memref<4x1xf32, #tpu.memory_space<vmem>>, %arg7: memref<4x1xf32, #tpu.memory_space<vmem>>, %arg8: memref<8x20xf32, #tpu.memory_space<vmem>>, %arg9: memref<8x1xf32, #tpu.memory_space<vmem>>, %arg10: memref<8x1xf32, #tpu.memory_space<vmem>>, %arg11: memref<8x1xf32, #tpu.memory_space<vmem>>, %arg12: memref<16x40xf32, #tpu.memory_space<vmem>>, %arg13: memref<16x1xf32, #tpu.memory_space<vmem>>, %arg14: memref<16x1xf32, #tpu.memory_space<vmem>>, %arg15: memref<16x1xf32, #tpu.memory_space<vmem>>, %arg16: memref<32x80xf32, #tpu.memory_space<vmem>>, %arg17: memref<32x1xf32, #tpu.memory_space<vmem>>, %arg18: memref<32x1xf32, #tpu.memory_space<vmem>>, %arg19: memref<32x1xf32, #tpu.memory_space<vmem>>, %arg20: memref<16x160xf32, #tpu.memory_space<vmem>>, %arg21: memref<16x1xf32, #tpu.memory_space<vmem>>, %arg22: memref<16x1xf32, #tpu.memory_space<vmem>>, %arg23: memref<16x1xf32, #tpu.memory_space<vmem>>, %arg24: memref<8x80xf32, #tpu.memory_space<vmem>>, %arg25: memref<8x1xf32, #tpu.memory_space<vmem>>, %arg26: memref<8x1xf32, #tpu.memory_space<vmem>>, %arg27: memref<8x1xf32, #tpu.memory_space<vmem>>, %arg28: memref<4x24xf32, #tpu.memory_space<vmem>>, %arg29: memref<4x16xf32, #tpu.memory_space<vmem>>, %arg30: memref<4x1xf32, #tpu.memory_space<vmem>>, %arg31: memref<4x1xf32, #tpu.memory_space<vmem>>, %arg32: memref<4x1xf32, #tpu.memory_space<vmem>>, %arg33: memref<4x12xf32, #tpu.memory_space<vmem>>, %arg34: memref<4x8xf32, #tpu.memory_space<vmem>>, %arg35: memref<4x1xf32, #tpu.memory_space<vmem>>, %arg36: memref<32x128xf32, #tpu.memory_space<vmem>>, %arg37: memref<4x128xf32, #tpu.memory_space<vmem>>, %arg38: memref<4x128xf32, #tpu.memory_space<vmem>>, %arg39: memref<4x128xf32, #tpu.memory_space<vmem>>, %arg40: memref<4x128xf32, #tpu.memory_space<vmem>>, %arg41: memref<4x133xf32, #tpu.memory_space<vmem>>, %arg42: memref<4x133xf32, #tpu.memory_space<vmem>>, %arg43: memref<8x133xf32, #tpu.memory_space<vmem>>, %arg44: memref<16x133xf32, #tpu.memory_space<vmem>>, %arg45: memref<32x133xf32, #tpu.memory_space<vmem>>, %arg46: memref<16x133xf32, #tpu.memory_space<vmem>>, %arg47: memref<8x133xf32, #tpu.memory_space<vmem>>, %arg48: memref<4x133xf32, #tpu.memory_space<vmem>>, %arg49: memref<4x133xf32, #tpu.memory_space<vmem>>, %arg50: memref<160x128xf32, #tpu.memory_space<vmem>>) attributes {dimension_semantics = [], scalar_prefetch = 0 : i64, scratch_operands = 10 : i64, tpu.core_type = #tpu.core_type<tc>} {
    %0 = tpu.iota {dimensions = array<i32: 1>} : vector<1x128xi32>
    %c64_i32 = arith.constant 64 : i32
    %1 = vector.broadcast %c64_i32 : i32 to vector<1x128xi32>
    %2 = arith.cmpi sge, %0, %1 : vector<1x128xi32>
    %c64_i32_0 = arith.constant 64 : i32
    %3 = vector.broadcast %c64_i32_0 : i32 to vector<1x128xi32>
    %4 = arith.subi %0, %3 : vector<1x128xi32>
    %5 = arith.select %2, %4, %0 : vector<1x128xi1>, vector<1x128xi32>
    %c0 = arith.constant 0 : index
    %c0_1 = arith.constant 0 : index
    %6 = vector.load %arg0[%c0, %c0_1] : memref<4x133xf32, #tpu.memory_space<vmem>>, vector<4x128xf32>
    %c0_2 = arith.constant 0 : index
    %c0_3 = arith.constant 0 : index
    %7 = vector.load %arg50[%c0_2, %c0_3] : memref<160x128xf32, #tpu.memory_space<vmem>>, vector<4x128xf32>
    tpu.vector_store %arg50[%c0_2, %c0_3], %6 {strides = array<i32>} : memref<160x128xf32, #tpu.memory_space<vmem>>, vector<4x128xf32>,
    %c0_4 = arith.constant 0 : index
    %c0_5 = arith.constant 0 : index
    %8 = vector.load %arg1[%c0_4, %c0_5] : memref<4x133xf32, #tpu.memory_space<vmem>>, vector<4x128xf32>
    %c4 = arith.constant 4 : index
    %c0_6 = arith.constant 0 : index
    %9 = vector.load %arg50[%c4, %c0_6] : memref<160x128xf32, #tpu.memory_space<vmem>>, vector<4x128xf32>
    tpu.vector_store %arg50[%c4, %c0_6], %8 {strides = array<i32>} : memref<160x128xf32, #tpu.memory_space<vmem>>, vector<4x128xf32>,
    %c0_7 = arith.constant 0 : index
    %c0_8 = arith.constant 0 : index
    %10 = vector.load %arg2[%c0_7, %c0_8] : memref<4x133xf32, #tpu.memory_space<vmem>>, vector<4x128xf32>
    %c8 = arith.constant 8 : index
    %c0_9 = arith.constant 0 : index
    %11 = vector.load %arg50[%c8, %c0_9] : memref<160x128xf32, #tpu.memory_space<vmem>>, vector<4x128xf32>
    tpu.vector_store %arg50[%c8, %c0_9], %10 {strides = array<i32>} : memref<160x128xf32, #tpu.memory_space<vmem>>, vector<4x128xf32>,
    %c0_10 = arith.constant 0 : index
    %c0_11 = arith.constant 0 : index
    %12 = vector.load %arg3[%c0_10, %c0_11] : memref<4x133xf32, #tpu.memory_space<vmem>>, vector<4x128xf32>
    %c12 = arith.constant 12 : index
    %c0_12 = arith.constant 0 : index
    %13 = vector.load %arg50[%c12, %c0_12] : memref<160x128xf32, #tpu.memory_space<vmem>>, vector<4x128xf32>
    tpu.vector_store %arg50[%c12, %c0_12], %12 {strides = array<i32>} : memref<160x128xf32, #tpu.memory_space<vmem>>, vector<4x128xf32>,
    %c0_13 = arith.constant 0 : index
    %c1 = arith.constant 1 : index
    %14 = vector.load %arg0[%c0_13, %c1] : memref<4x133xf32, #tpu.memory_space<vmem>>, vector<4x128xf32>
    %c16 = arith.constant 16 : index
    %c0_14 = arith.constant 0 : index
    %15 = vector.load %arg50[%c16, %c0_14] : memref<160x128xf32, #tpu.memory_space<vmem>>, vector<4x128xf32>
    tpu.vector_store %arg50[%c16, %c0_14], %14 {strides = array<i32>} : memref<160x128xf32, #tpu.memory_space<vmem>>, vector<4x128xf32>,
    %c0_15 = arith.constant 0 : index
    %c0_16 = arith.constant 0 : index
    %16 = vector.load %arg4[%c0_15, %c0_16] : memref<4x20xf32, #tpu.memory_space<vmem>>, vector<4x20xf32>
    %c0_17 = arith.constant 0 : index
    %c0_18 = arith.constant 0 : index
    %17 = vector.load %arg50[%c0_17, %c0_18] : memref<160x128xf32, #tpu.memory_space<vmem>>, vector<20x128xf32>
    %cst = arith.constant dense<0.000000e+00> : vector<4x128xf32>
    %18 = tpu.matmul %16, %17, %cst {dimension_numbers = #tpu.dot_dimension_numbers<[1], [0], [0], [1], [0, 0, 1, 1], [], []>} : vector<4x20xf32>, vector<20x128xf32>, vector<4x128xf32> -> vector<4x128xf32>
    %c0_19 = arith.constant 0 : index
    %c0_20 = arith.constant 0 : index
    %19 = vector.load %arg5[%c0_19, %c0_20] : memref<4x1xf32, #tpu.memory_space<vmem>>, vector<4x1xf32>
    %20 = vector.broadcast %19 : vector<4x1xf32> to vector<4x128xf32>
    %21 = arith.addf %18, %20 : vector<4x128xf32>
    %c11_i32 = arith.constant 11 : i32
    %22 = vector.broadcast %c11_i32 : i32 to vector<1x128xi32>
    %23 = arith.cmpi sge, %5, %22 : vector<1x128xi32>
    %c26_i32 = arith.constant 26 : i32
    %24 = vector.broadcast %c26_i32 : i32 to vector<1x128xi32>
    %25 = arith.cmpi slt, %5, %24 : vector<1x128xi32>
    %26 = arith.andi %23, %25 : vector<1x128xi1>
    %c0_21 = arith.constant 0 : index
    %c0_22 = arith.constant 0 : index
    %27 = vector.load %arg2[%c0_21, %c0_22] : memref<4x133xf32, #tpu.memory_space<vmem>>, vector<4x128xf32>
    %c0_23 = arith.constant 0 : index
    %c0_24 = arith.constant 0 : index
    %28 = vector.load %arg50[%c0_23, %c0_24] : memref<160x128xf32, #tpu.memory_space<vmem>>, vector<4x128xf32>
    tpu.vector_store %arg50[%c0_23, %c0_24], %27 {strides = array<i32>} : memref<160x128xf32, #tpu.memory_space<vmem>>, vector<4x128xf32>,
    %c0_25 = arith.constant 0 : index
    %c0_26 = arith.constant 0 : index
    %29 = vector.load %arg3[%c0_25, %c0_26] : memref<4x133xf32, #tpu.memory_space<vmem>>, vector<4x128xf32>
    %c4_27 = arith.constant 4 : index
    %c0_28 = arith.constant 0 : index
    %30 = vector.load %arg50[%c4_27, %c0_28] : memref<160x128xf32, #tpu.memory_space<vmem>>, vector<4x128xf32>
    tpu.vector_store %arg50[%c4_27, %c0_28], %29 {strides = array<i32>} : memref<160x128xf32, #tpu.memory_space<vmem>>, vector<4x128xf32>,
    %c0_29 = arith.constant 0 : index
    %c1_30 = arith.constant 1 : index
    %31 = vector.load %arg0[%c0_29, %c1_30] : memref<4x133xf32, #tpu.memory_space<vmem>>, vector<4x128xf32>
    %c8_31 = arith.constant 8 : index
    %c0_32 = arith.constant 0 : index
    %32 = vector.load %arg50[%c8_31, %c0_32] : memref<160x128xf32, #tpu.memory_space<vmem>>, vector<4x128xf32>
    tpu.vector_store %arg50[%c8_31, %c0_32], %31 {strides = array<i32>} : memref<160x128xf32, #tpu.memory_space<vmem>>, vector<4x128xf32>,
    %c0_33 = arith.constant 0 : index
    %c1_34 = arith.constant 1 : index
    %33 = vector.load %arg1[%c0_33, %c1_34] : memref<4x133xf32, #tpu.memory_space<vmem>>, vector<4x128xf32>
    %c12_35 = arith.constant 12 : index
    %c0_36 = arith.constant 0 : index
    %34 = vector.load %arg50[%c12_35, %c0_36] : memref<160x128xf32, #tpu.memory_space<vmem>>, vector<4x128xf32>
    tpu.vector_store %arg50[%c12_35, %c0_36], %33 {strides = array<i32>} : memref<160x128xf32, #tpu.memory_space<vmem>>, vector<4x128xf32>,
    %c0_37 = arith.constant 0 : index
    %c1_38 = arith.constant 1 : index
    %35 = vector.load %arg2[%c0_37, %c1_38] : memref<4x133xf32, #tpu.memory_space<vmem>>, vector<4x128xf32>
    %c16_39 = arith.constant 16 : index
    %c0_40 = arith.constant 0 : index
    %36 = vector.load %arg50[%c16_39, %c0_40] : memref<160x128xf32, #tpu.memory_space<vmem>>, vector<4x128xf32>
    tpu.vector_store %arg50[%c16_39, %c0_40], %35 {strides = array<i32>} : memref<160x128xf32, #tpu.memory_space<vmem>>, vector<4x128xf32>,
    %c0_41 = arith.constant 0 : index
    %c0_42 = arith.constant 0 : index
    %37 = vector.load %arg4[%c0_41, %c0_42] : memref<4x20xf32, #tpu.memory_space<vmem>>, vector<4x20xf32>
    %c0_43 = arith.constant 0 : index
    %c0_44 = arith.constant 0 : index
    %38 = vector.load %arg50[%c0_43, %c0_44] : memref<160x128xf32, #tpu.memory_space<vmem>>, vector<20x128xf32>
    %cst_45 = arith.constant dense<0.000000e+00> : vector<4x128xf32>
    %39 = tpu.matmul %37, %38, %cst_45 {dimension_numbers = #tpu.dot_dimension_numbers<[1], [0], [0], [1], [0, 0, 1, 1], [], []>} : vector<4x20xf32>, vector<20x128xf32>, vector<4x128xf32> -> vector<4x128xf32>
    %c0_46 = arith.constant 0 : index
    %c0_47 = arith.constant 0 : index
    %40 = vector.load %arg5[%c0_46, %c0_47] : memref<4x1xf32, #tpu.memory_space<vmem>>, vector<4x1xf32>
    %41 = vector.broadcast %40 : vector<4x1xf32> to vector<4x128xf32>
    %42 = arith.addf %39, %41 : vector<4x128xf32>
    %c11_i32_48 = arith.constant 11 : i32
    %43 = vector.broadcast %c11_i32_48 : i32 to vector<1x128xi32>
    %44 = arith.cmpi sge, %5, %43 : vector<1x128xi32>
    %c26_i32_49 = arith.constant 26 : i32
    %45 = vector.broadcast %c26_i32_49 : i32 to vector<1x128xi32>
    %46 = arith.cmpi slt, %5, %45 : vector<1x128xi32>
    %47 = arith.andi %44, %46 : vector<1x128xi1>
    %cst_50 = arith.constant 0.707106769 : f32
    %48 = vector.broadcast %cst_50 : f32 to vector<4x128xf32>
    %49 = arith.mulf %21, %48 : vector<4x128xf32>
    %50 = math.absf %49 : vector<4x128xf32>
    %cst_51 = arith.constant 0.327591091 : f32
    %51 = vector.broadcast %cst_51 : f32 to vector<4x128xf32>
    %52 = arith.mulf %51, %50 : vector<4x128xf32>
    %cst_52 = arith.constant 1.000000e+00 : f32
    %53 = vector.broadcast %cst_52 : f32 to vector<4x128xf32>
    %54 = arith.addf %53, %52 : vector<4x128xf32>
    %55 = tpu.reciprocal %54 {approx = true} : vector<4x128xf32> -> vector<4x128xf32>
    %56 = arith.mulf %54, %55 : vector<4x128xf32>
    %cst_53 = arith.constant 2.000000e+00 : f32
    %57 = vector.broadcast %cst_53 : f32 to vector<4x128xf32>
    %58 = arith.subf %57, %56 : vector<4x128xf32>
    %59 = arith.mulf %55, %58 : vector<4x128xf32>
    %cst_54 = arith.constant 1.06140542 : f32
    %60 = vector.broadcast %cst_54 : f32 to vector<4x128xf32>
    %61 = arith.mulf %59, %60 : vector<4x128xf32>
    %cst_55 = arith.constant -1.45315206 : f32
    %62 = vector.broadcast %cst_55 : f32 to vector<4x128xf32>
    %63 = arith.addf %62, %61 : vector<4x128xf32>
    %64 = arith.mulf %59, %63 : vector<4x128xf32>
    %cst_56 = arith.constant 1.42141378 : f32
    %65 = vector.broadcast %cst_56 : f32 to vector<4x128xf32>
    %66 = arith.addf %65, %64 : vector<4x128xf32>
    %67 = arith.mulf %59, %66 : vector<4x128xf32>
    %cst_57 = arith.constant -0.284496725 : f32
    %68 = vector.broadcast %cst_57 : f32 to vector<4x128xf32>
    %69 = arith.addf %68, %67 : vector<4x128xf32>
    %70 = arith.mulf %59, %69 : vector<4x128xf32>
    %cst_58 = arith.constant 0.254829586 : f32
    %71 = vector.broadcast %cst_58 : f32 to vector<4x128xf32>
    %72 = arith.addf %71, %70 : vector<4x128xf32>
    %73 = arith.mulf %59, %72 : vector<4x128xf32>
    %cst_59 = arith.constant 0.000000e+00 : f32
    %74 = vector.broadcast %cst_59 : f32 to vector<4x128xf32>
    %75 = arith.subf %74, %50 : vector<4x128xf32>
    %76 = arith.mulf %75, %50 : vector<4x128xf32>
    %77 = math.exp %76 : vector<4x128xf32>
    %78 = arith.mulf %73, %77 : vector<4x128xf32>
    %cst_60 = arith.constant 1.000000e+00 : f32
    %79 = vector.broadcast %cst_60 : f32 to vector<4x128xf32>
    %80 = arith.subf %79, %78 : vector<4x128xf32>
    %cst_61 = arith.constant 0.000000e+00 : f32
    %81 = vector.broadcast %cst_61 : f32 to vector<4x128xf32>
    %82 = arith.cmpf olt, %49, %81 : vector<4x128xf32>
    %cst_62 = arith.constant 0.000000e+00 : f32
    %83 = vector.broadcast %cst_62 : f32 to vector<4x128xf32>
    %84 = arith.subf %83, %80 : vector<4x128xf32>
    %85 = arith.select %82, %84, %80 : vector<4x128xi1>, vector<4x128xf32>
    %cst_63 = arith.constant 5.000000e-01 : f32
    %86 = vector.broadcast %cst_63 : f32 to vector<4x128xf32>
    %87 = arith.mulf %86, %21 : vector<4x128xf32>
    %cst_64 = arith.constant 1.000000e+00 : f32
    %88 = vector.broadcast %cst_64 : f32 to vector<4x128xf32>
    %89 = arith.addf %88, %85 : vector<4x128xf32>
    %90 = arith.mulf %87, %89 : vector<4x128xf32>
    %cst_65 = arith.constant 0.707106769 : f32
    %91 = vector.broadcast %cst_65 : f32 to vector<4x128xf32>
    %92 = arith.mulf %42, %91 : vector<4x128xf32>
    %93 = math.absf %92 : vector<4x128xf32>
    %cst_66 = arith.constant 0.327591091 : f32
    %94 = vector.broadcast %cst_66 : f32 to vector<4x128xf32>
    %95 = arith.mulf %94, %93 : vector<4x128xf32>
    %cst_67 = arith.constant 1.000000e+00 : f32
    %96 = vector.broadcast %cst_67 : f32 to vector<4x128xf32>
    %97 = arith.addf %96, %95 : vector<4x128xf32>
    %98 = tpu.reciprocal %97 {approx = true} : vector<4x128xf32> -> vector<4x128xf32>
    %99 = arith.mulf %97, %98 : vector<4x128xf32>
    %cst_68 = arith.constant 2.000000e+00 : f32
    %100 = vector.broadcast %cst_68 : f32 to vector<4x128xf32>
    %101 = arith.subf %100, %99 : vector<4x128xf32>
    %102 = arith.mulf %98, %101 : vector<4x128xf32>
    %cst_69 = arith.constant 1.06140542 : f32
    %103 = vector.broadcast %cst_69 : f32 to vector<4x128xf32>
    %104 = arith.mulf %102, %103 : vector<4x128xf32>
    %cst_70 = arith.constant -1.45315206 : f32
    %105 = vector.broadcast %cst_70 : f32 to vector<4x128xf32>
    %106 = arith.addf %105, %104 : vector<4x128xf32>
    %107 = arith.mulf %102, %106 : vector<4x128xf32>
    %cst_71 = arith.constant 1.42141378 : f32
    %108 = vector.broadcast %cst_71 : f32 to vector<4x128xf32>
    %109 = arith.addf %108, %107 : vector<4x128xf32>
    %110 = arith.mulf %102, %109 : vector<4x128xf32>
    %cst_72 = arith.constant -0.284496725 : f32
    %111 = vector.broadcast %cst_72 : f32 to vector<4x128xf32>
    %112 = arith.addf %111, %110 : vector<4x128xf32>
    %113 = arith.mulf %102, %112 : vector<4x128xf32>
    %cst_73 = arith.constant 0.254829586 : f32
    %114 = vector.broadcast %cst_73 : f32 to vector<4x128xf32>
    %115 = arith.addf %114, %113 : vector<4x128xf32>
    %116 = arith.mulf %102, %115 : vector<4x128xf32>
    %cst_74 = arith.constant 0.000000e+00 : f32
    %117 = vector.broadcast %cst_74 : f32 to vector<4x128xf32>
    %118 = arith.subf %117, %93 : vector<4x128xf32>
    %119 = arith.mulf %118, %93 : vector<4x128xf32>
    %120 = math.exp %119 : vector<4x128xf32>
    %121 = arith.mulf %116, %120 : vector<4x128xf32>
    %cst_75 = arith.constant 1.000000e+00 : f32
    %122 = vector.broadcast %cst_75 : f32 to vector<4x128xf32>
    %123 = arith.subf %122, %121 : vector<4x128xf32>
    %cst_76 = arith.constant 0.000000e+00 : f32
    %124 = vector.broadcast %cst_76 : f32 to vector<4x128xf32>
    %125 = arith.cmpf olt, %92, %124 : vector<4x128xf32>
    %cst_77 = arith.constant 0.000000e+00 : f32
    %126 = vector.broadcast %cst_77 : f32 to vector<4x128xf32>
    %127 = arith.subf %126, %123 : vector<4x128xf32>
    %128 = arith.select %125, %127, %123 : vector<4x128xi1>, vector<4x128xf32>
    %cst_78 = arith.constant 5.000000e-01 : f32
    %129 = vector.broadcast %cst_78 : f32 to vector<4x128xf32>
    %130 = arith.mulf %129, %42 : vector<4x128xf32>
    %cst_79 = arith.constant 1.000000e+00 : f32
    %131 = vector.broadcast %cst_79 : f32 to vector<4x128xf32>
    %132 = arith.addf %131, %128 : vector<4x128xf32>
    %133 = arith.mulf %130, %132 : vector<4x128xf32>
    %cst_80 = arith.constant 0.000000e+00 : f32
    %134 = vector.shape_cast %26 : vector<1x128xi1> to vector<1x128xi1>
    %135 = vector.broadcast %134 : vector<1x128xi1> to vector<4x128xi1>
    %136 = vector.broadcast %cst_80 : f32 to vector<4x128xf32>
    %137 = arith.select %135, %90, %136 : vector<4x128xi1>, vector<4x128xf32>
    %cst_81 = arith.constant dense<0.000000e+00> : vector<4xf32>
    %138 = vector.multi_reduction <add>, %137, %cst_81 [1] : vector<4x128xf32> to vector<4xf32>
    %139 = vector.shape_cast %138 : vector<4xf32> to vector<4x1xf32>
    %140 = arith.mulf %137, %137 : vector<4x128xf32>
    %cst_82 = arith.constant dense<0.000000e+00> : vector<4xf32>
    %141 = vector.multi_reduction <add>, %140, %cst_82 [1] : vector<4x128xf32> to vector<4xf32>
    %142 = vector.shape_cast %141 : vector<4xf32> to vector<4x1xf32>
    %cst_83 = arith.constant 0.000000e+00 : f32
    %143 = vector.shape_cast %47 : vector<1x128xi1> to vector<1x128xi1>
    %144 = vector.broadcast %143 : vector<1x128xi1> to vector<4x128xi1>
    %145 = vector.broadcast %cst_83 : f32 to vector<4x128xf32>
    %146 = arith.select %144, %133, %145 : vector<4x128xi1>, vector<4x128xf32>
    %cst_84 = arith.constant dense<0.000000e+00> : vector<4xf32>
    %147 = vector.multi_reduction <add>, %146, %cst_84 [1] : vector<4x128xf32> to vector<4xf32>
    %148 = vector.shape_cast %147 : vector<4xf32> to vector<4x1xf32>
    %149 = arith.mulf %146, %146 : vector<4x128xf32>
    %cst_85 = arith.constant dense<0.000000e+00> : vector<4xf32>
    %150 = vector.multi_reduction <add>, %149, %cst_85 [1] : vector<4x128xf32> to vector<4xf32>
    %151 = vector.shape_cast %150 : vector<4xf32> to vector<4x1xf32>
    %152 = arith.addf %139, %148 : vector<4x1xf32>
    %153 = arith.addf %142, %151 : vector<4x1xf32>
    %cst_86 = arith.constant 0.0166666675 : f32
    %154 = vector.broadcast %cst_86 : f32 to vector<4x1xf32>
    %155 = arith.mulf %152, %154 : vector<4x1xf32>
    %cst_87 = arith.constant 0.0166666675 : f32
    %156 = vector.broadcast %cst_87 : f32 to vector<4x1xf32>
    %157 = arith.mulf %153, %156 : vector<4x1xf32>
    %158 = arith.mulf %155, %155 : vector<4x1xf32>
    %159 = arith.subf %157, %158 : vector<4x1xf32>
    %cst_88 = arith.constant 0.000000e+00 : f32
    %160 = vector.broadcast %cst_88 : f32 to vector<4x1xf32>
    %161 = arith.maximumf %159, %160 : vector<4x1xf32>
    %cst_89 = arith.constant 9.99999974E-6 : f32
    %162 = vector.broadcast %cst_89 : f32 to vector<4x1xf32>
    %163 = arith.addf %161, %162 : vector<4x1xf32>
    %164 = math.rsqrt %163 : vector<4x1xf32>
    %c0_90 = arith.constant 0 : index
    %c0_91 = arith.constant 0 : index
    %165 = vector.load %arg6[%c0_90, %c0_91] : memref<4x1xf32, #tpu.memory_space<vmem>>, vector<4x1xf32>
    %166 = arith.mulf %164, %165 : vector<4x1xf32>
    %c0_92 = arith.constant 0 : index
    %c0_93 = arith.constant 0 : index
    %167 = vector.load %arg7[%c0_92, %c0_93] : memref<4x1xf32, #tpu.memory_space<vmem>>, vector<4x1xf32>
    %168 = arith.mulf %155, %166 : vector<4x1xf32>
    %169 = arith.subf %167, %168 : vector<4x1xf32>
    %170 = vector.broadcast %166 : vector<4x1xf32> to vector<4x128xf32>
    %171 = arith.mulf %90, %170 : vector<4x128xf32>
    %172 = vector.broadcast %169 : vector<4x1xf32> to vector<4x128xf32>
    %173 = arith.addf %171, %172 : vector<4x128xf32>
    %cst_94 = arith.constant 0.000000e+00 : f32
    %174 = vector.shape_cast %26 : vector<1x128xi1> to vector<1x128xi1>
    %175 = vector.broadcast %174 : vector<1x128xi1> to vector<4x128xi1>
    %176 = vector.broadcast %cst_94 : f32 to vector<4x128xf32>
    %177 = arith.select %175, %173, %176 : vector<4x128xi1>, vector<4x128xf32>
    %c0_95 = arith.constant 0 : index
    %c0_96 = arith.constant 0 : index
    %178 = vector.load %arg41[%c0_95, %c0_96] : memref<4x133xf32, #tpu.memory_space<vmem>>, vector<4x128xf32>
    tpu.vector_store %arg41[%c0_95, %c0_96], %177 {strides = array<i32>} : memref<4x133xf32, #tpu.memory_space<vmem>>, vector<4x128xf32>,
    %179 = vector.broadcast %166 : vector<4x1xf32> to vector<4x128xf32>
    %180 = arith.mulf %133, %179 : vector<4x128xf32>
    %181 = vector.broadcast %169 : vector<4x1xf32> to vector<4x128xf32>
    %182 = arith.addf %180, %181 : vector<4x128xf32>
    %cst_97 = arith.constant 0.000000e+00 : f32
    %183 = vector.shape_cast %47 : vector<1x128xi1> to vector<1x128xi1>
    %184 = vector.broadcast %183 : vector<1x128xi1> to vector<4x128xi1>
    %185 = vector.broadcast %cst_97 : f32 to vector<4x128xf32>
    %186 = arith.select %184, %182, %185 : vector<4x128xi1>, vector<4x128xf32>
    %c0_98 = arith.constant 0 : index
    %c0_99 = arith.constant 0 : index
    %187 = vector.load %arg42[%c0_98, %c0_99] : memref<4x133xf32, #tpu.memory_space<vmem>>, vector<4x128xf32>
    tpu.vector_store %arg42[%c0_98, %c0_99], %186 {strides = array<i32>} : memref<4x133xf32, #tpu.memory_space<vmem>>, vector<4x128xf32>,
    %c0_100 = arith.constant 0 : index
    %c0_101 = arith.constant 0 : index
    %188 = vector.load %arg41[%c0_100, %c0_101] : memref<4x133xf32, #tpu.memory_space<vmem>>, vector<4x128xf32>
    %c0_102 = arith.constant 0 : index
    %c0_103 = arith.constant 0 : index
    %189 = vector.load %arg50[%c0_102, %c0_103] : memref<160x128xf32, #tpu.memory_space<vmem>>, vector<4x128xf32>
    tpu.vector_store %arg50[%c0_102, %c0_103], %188 {strides = array<i32>} : memref<160x128xf32, #tpu.memory_space<vmem>>, vector<4x128xf32>,
    %c0_104 = arith.constant 0 : index
    %c0_105 = arith.constant 0 : index
    %190 = vector.load %arg42[%c0_104, %c0_105] : memref<4x133xf32, #tpu.memory_space<vmem>>, vector<4x128xf32>
    %c4_106 = arith.constant 4 : index
    %c0_107 = arith.constant 0 : index
    %191 = vector.load %arg50[%c4_106, %c0_107] : memref<160x128xf32, #tpu.memory_space<vmem>>, vector<4x128xf32>
    tpu.vector_store %arg50[%c4_106, %c0_107], %190 {strides = array<i32>} : memref<160x128xf32, #tpu.memory_space<vmem>>, vector<4x128xf32>,
    %c0_108 = arith.constant 0 : index
    %c1_109 = arith.constant 1 : index
    %192 = vector.load %arg41[%c0_108, %c1_109] : memref<4x133xf32, #tpu.memory_space<vmem>>, vector<4x128xf32>
    %c8_110 = arith.constant 8 : index
    %c0_111 = arith.constant 0 : index
    %193 = vector.load %arg50[%c8_110, %c0_111] : memref<160x128xf32, #tpu.memory_space<vmem>>, vector<4x128xf32>
    tpu.vector_store %arg50[%c8_110, %c0_111], %192 {strides = array<i32>} : memref<160x128xf32, #tpu.memory_space<vmem>>, vector<4x128xf32>,
    %c0_112 = arith.constant 0 : index
    %c1_113 = arith.constant 1 : index
    %194 = vector.load %arg42[%c0_112, %c1_113] : memref<4x133xf32, #tpu.memory_space<vmem>>, vector<4x128xf32>
    %c12_114 = arith.constant 12 : index
    %c0_115 = arith.constant 0 : index
    %195 = vector.load %arg50[%c12_114, %c0_115] : memref<160x128xf32, #tpu.memory_space<vmem>>, vector<4x128xf32>
    tpu.vector_store %arg50[%c12_114, %c0_115], %194 {strides = array<i32>} : memref<160x128xf32, #tpu.memory_space<vmem>>, vector<4x128xf32>,
    %c0_116 = arith.constant 0 : index
    %c2 = arith.constant 2 : index
    %196 = vector.load %arg41[%c0_116, %c2] : memref<4x133xf32, #tpu.memory_space<vmem>>, vector<4x128xf32>
    %c16_117 = arith.constant 16 : index
    %c0_118 = arith.constant 0 : index
    %197 = vector.load %arg50[%c16_117, %c0_118] : memref<160x128xf32, #tpu.memory_space<vmem>>, vector<4x128xf32>
    tpu.vector_store %arg50[%c16_117, %c0_118], %196 {strides = array<i32>} : memref<160x128xf32, #tpu.memory_space<vmem>>, vector<4x128xf32>,
    %c0_119 = arith.constant 0 : index
    %c0_120 = arith.constant 0 : index
    %198 = vector.load %arg8[%c0_119, %c0_120] : memref<8x20xf32, #tpu.memory_space<vmem>>, vector<8x20xf32>
    %c0_121 = arith.constant 0 : index
    %c0_122 = arith.constant 0 : index
    %199 = vector.load %arg50[%c0_121, %c0_122] : memref<160x128xf32, #tpu.memory_space<vmem>>, vector<20x128xf32>
    %cst_123 = arith.constant dense<0.000000e+00> : vector<8x128xf32>
    %200 = tpu.matmul %198, %199, %cst_123 {dimension_numbers = #tpu.dot_dimension_numbers<[1], [0], [0], [1], [0, 0, 1, 1], [], []>} : vector<8x20xf32>, vector<20x128xf32>, vector<8x128xf32> -> vector<8x128xf32>
    %c0_124 = arith.constant 0 : index
    %c0_125 = arith.constant 0 : index
    %201 = vector.load %arg9[%c0_124, %c0_125] : memref<8x1xf32, #tpu.memory_space<vmem>>, vector<8x1xf32>
    %202 = vector.broadcast %201 : vector<8x1xf32> to vector<8x128xf32>
    %203 = arith.addf %200, %202 : vector<8x128xf32>
    %c11_i32_126 = arith.constant 11 : i32
    %204 = vector.broadcast %c11_i32_126 : i32 to vector<1x128xi32>
    %205 = arith.cmpi sge, %5, %204 : vector<1x128xi32>
    %c24_i32 = arith.constant 24 : i32
    %206 = vector.broadcast %c24_i32 : i32 to vector<1x128xi32>
    %207 = arith.cmpi slt, %5, %206 : vector<1x128xi32>
    %208 = arith.andi %205, %207 : vector<1x128xi1>
    %cst_127 = arith.constant 0.707106769 : f32
    %209 = vector.broadcast %cst_127 : f32 to vector<8x128xf32>
    %210 = arith.mulf %203, %209 : vector<8x128xf32>
    %211 = math.absf %210 : vector<8x128xf32>
    %cst_128 = arith.constant 0.327591091 : f32
    %212 = vector.broadcast %cst_128 : f32 to vector<8x128xf32>
    %213 = arith.mulf %212, %211 : vector<8x128xf32>
    %cst_129 = arith.constant 1.000000e+00 : f32
    %214 = vector.broadcast %cst_129 : f32 to vector<8x128xf32>
    %215 = arith.addf %214, %213 : vector<8x128xf32>
    %216 = tpu.reciprocal %215 {approx = true} : vector<8x128xf32> -> vector<8x128xf32>
    %217 = arith.mulf %215, %216 : vector<8x128xf32>
    %cst_130 = arith.constant 2.000000e+00 : f32
    %218 = vector.broadcast %cst_130 : f32 to vector<8x128xf32>
    %219 = arith.subf %218, %217 : vector<8x128xf32>
    %220 = arith.mulf %216, %219 : vector<8x128xf32>
    %cst_131 = arith.constant 1.06140542 : f32
    %221 = vector.broadcast %cst_131 : f32 to vector<8x128xf32>
    %222 = arith.mulf %220, %221 : vector<8x128xf32>
    %cst_132 = arith.constant -1.45315206 : f32
    %223 = vector.broadcast %cst_132 : f32 to vector<8x128xf32>
    %224 = arith.addf %223, %222 : vector<8x128xf32>
    %225 = arith.mulf %220, %224 : vector<8x128xf32>
    %cst_133 = arith.constant 1.42141378 : f32
    %226 = vector.broadcast %cst_133 : f32 to vector<8x128xf32>
    %227 = arith.addf %226, %225 : vector<8x128xf32>
    %228 = arith.mulf %220, %227 : vector<8x128xf32>
    %cst_134 = arith.constant -0.284496725 : f32
    %229 = vector.broadcast %cst_134 : f32 to vector<8x128xf32>
    %230 = arith.addf %229, %228 : vector<8x128xf32>
    %231 = arith.mulf %220, %230 : vector<8x128xf32>
    %cst_135 = arith.constant 0.254829586 : f32
    %232 = vector.broadcast %cst_135 : f32 to vector<8x128xf32>
    %233 = arith.addf %232, %231 : vector<8x128xf32>
    %234 = arith.mulf %220, %233 : vector<8x128xf32>
    %cst_136 = arith.constant 0.000000e+00 : f32
    %235 = vector.broadcast %cst_136 : f32 to vector<8x128xf32>
    %236 = arith.subf %235, %211 : vector<8x128xf32>
    %237 = arith.mulf %236, %211 : vector<8x128xf32>
    %238 = math.exp %237 : vector<8x128xf32>
    %239 = arith.mulf %234, %238 : vector<8x128xf32>
    %cst_137 = arith.constant 1.000000e+00 : f32
    %240 = vector.broadcast %cst_137 : f32 to vector<8x128xf32>
    %241 = arith.subf %240, %239 : vector<8x128xf32>
    %cst_138 = arith.constant 0.000000e+00 : f32
    %242 = vector.broadcast %cst_138 : f32 to vector<8x128xf32>
    %243 = arith.cmpf olt, %210, %242 : vector<8x128xf32>
    %cst_139 = arith.constant 0.000000e+00 : f32
    %244 = vector.broadcast %cst_139 : f32 to vector<8x128xf32>
    %245 = arith.subf %244, %241 : vector<8x128xf32>
    %246 = arith.select %243, %245, %241 : vector<8x128xi1>, vector<8x128xf32>
    %cst_140 = arith.constant 5.000000e-01 : f32
    %247 = vector.broadcast %cst_140 : f32 to vector<8x128xf32>
    %248 = arith.mulf %247, %203 : vector<8x128xf32>
    %cst_141 = arith.constant 1.000000e+00 : f32
    %249 = vector.broadcast %cst_141 : f32 to vector<8x128xf32>
    %250 = arith.addf %249, %246 : vector<8x128xf32>
    %251 = arith.mulf %248, %250 : vector<8x128xf32>
    %cst_142 = arith.constant 0.000000e+00 : f32
    %252 = vector.shape_cast %208 : vector<1x128xi1> to vector<1x128xi1>
    %253 = vector.broadcast %252 : vector<1x128xi1> to vector<8x128xi1>
    %254 = vector.broadcast %cst_142 : f32 to vector<8x128xf32>
    %255 = arith.select %253, %251, %254 : vector<8x128xi1>, vector<8x128xf32>
    %cst_143 = arith.constant dense<0.000000e+00> : vector<8xf32>
    %256 = vector.multi_reduction <add>, %255, %cst_143 [1] : vector<8x128xf32> to vector<8xf32>
    %257 = vector.shape_cast %256 : vector<8xf32> to vector<8x1xf32>
    %258 = arith.mulf %255, %255 : vector<8x128xf32>
    %cst_144 = arith.constant dense<0.000000e+00> : vector<8xf32>
    %259 = vector.multi_reduction <add>, %258, %cst_144 [1] : vector<8x128xf32> to vector<8xf32>
    %260 = vector.shape_cast %259 : vector<8xf32> to vector<8x1xf32>
    %cst_145 = arith.constant 0.0384615399 : f32
    %261 = vector.broadcast %cst_145 : f32 to vector<8x1xf32>
    %262 = arith.mulf %257, %261 : vector<8x1xf32>
    %cst_146 = arith.constant 0.0384615399 : f32
    %263 = vector.broadcast %cst_146 : f32 to vector<8x1xf32>
    %264 = arith.mulf %260, %263 : vector<8x1xf32>
    %265 = arith.mulf %262, %262 : vector<8x1xf32>
    %266 = arith.subf %264, %265 : vector<8x1xf32>
    %cst_147 = arith.constant 0.000000e+00 : f32
    %267 = vector.broadcast %cst_147 : f32 to vector<8x1xf32>
    %268 = arith.maximumf %266, %267 : vector<8x1xf32>
    %cst_148 = arith.constant 9.99999974E-6 : f32
    %269 = vector.broadcast %cst_148 : f32 to vector<8x1xf32>
    %270 = arith.addf %268, %269 : vector<8x1xf32>
    %271 = math.rsqrt %270 : vector<8x1xf32>
    %c0_149 = arith.constant 0 : index
    %c0_150 = arith.constant 0 : index
    %272 = vector.load %arg10[%c0_149, %c0_150] : memref<8x1xf32, #tpu.memory_space<vmem>>, vector<8x1xf32>
    %273 = arith.mulf %271, %272 : vector<8x1xf32>
    %c0_151 = arith.constant 0 : index
    %c0_152 = arith.constant 0 : index
    %274 = vector.load %arg11[%c0_151, %c0_152] : memref<8x1xf32, #tpu.memory_space<vmem>>, vector<8x1xf32>
    %275 = arith.mulf %262, %273 : vector<8x1xf32>
    %276 = arith.subf %274, %275 : vector<8x1xf32>
    %277 = vector.broadcast %273 : vector<8x1xf32> to vector<8x128xf32>
    %278 = arith.mulf %251, %277 : vector<8x128xf32>
    %279 = vector.broadcast %276 : vector<8x1xf32> to vector<8x128xf32>
    %280 = arith.addf %278, %279 : vector<8x128xf32>
    %cst_153 = arith.constant 0.000000e+00 : f32
    %281 = vector.shape_cast %208 : vector<1x128xi1> to vector<1x128xi1>
    %282 = vector.broadcast %281 : vector<1x128xi1> to vector<8x128xi1>
    %283 = vector.broadcast %cst_153 : f32 to vector<8x128xf32>
    %284 = arith.select %282, %280, %283 : vector<8x128xi1>, vector<8x128xf32>
    %c0_154 = arith.constant 0 : index
    %c0_155 = arith.constant 0 : index
    %285 = vector.load %arg43[%c0_154, %c0_155] : memref<8x133xf32, #tpu.memory_space<vmem>>, vector<8x128xf32>
    tpu.vector_store %arg43[%c0_154, %c0_155], %284 {strides = array<i32>} : memref<8x133xf32, #tpu.memory_space<vmem>>, vector<8x128xf32>,
    %c0_156 = arith.constant 0 : index
    %c0_157 = arith.constant 0 : index
    %286 = vector.load %arg43[%c0_156, %c0_157] : memref<8x133xf32, #tpu.memory_space<vmem>>, vector<8x128xf32>
    %c0_158 = arith.constant 0 : index
    %c0_159 = arith.constant 0 : index
    %287 = vector.load %arg50[%c0_158, %c0_159] : memref<160x128xf32, #tpu.memory_space<vmem>>, vector<8x128xf32>
    tpu.vector_store %arg50[%c0_158, %c0_159], %286 {strides = array<i32>} : memref<160x128xf32, #tpu.memory_space<vmem>>, vector<8x128xf32>,
    %c0_160 = arith.constant 0 : index
    %c1_161 = arith.constant 1 : index
    %288 = vector.load %arg43[%c0_160, %c1_161] : memref<8x133xf32, #tpu.memory_space<vmem>>, vector<8x128xf32>
    %c8_162 = arith.constant 8 : index
    %c0_163 = arith.constant 0 : index
    %289 = vector.load %arg50[%c8_162, %c0_163] : memref<160x128xf32, #tpu.memory_space<vmem>>, vector<8x128xf32>
    tpu.vector_store %arg50[%c8_162, %c0_163], %288 {strides = array<i32>} : memref<160x128xf32, #tpu.memory_space<vmem>>, vector<8x128xf32>,
    %c0_164 = arith.constant 0 : index
    %c2_165 = arith.constant 2 : index
    %290 = vector.load %arg43[%c0_164, %c2_165] : memref<8x133xf32, #tpu.memory_space<vmem>>, vector<8x128xf32>
    %c16_166 = arith.constant 16 : index
    %c0_167 = arith.constant 0 : index
    %291 = vector.load %arg50[%c16_166, %c0_167] : memref<160x128xf32, #tpu.memory_space<vmem>>, vector<8x128xf32>
    tpu.vector_store %arg50[%c16_166, %c0_167], %290 {strides = array<i32>} : memref<160x128xf32, #tpu.memory_space<vmem>>, vector<8x128xf32>,
    %c0_168 = arith.constant 0 : index
    %c3 = arith.constant 3 : index
    %292 = vector.load %arg43[%c0_168, %c3] : memref<8x133xf32, #tpu.memory_space<vmem>>, vector<8x128xf32>
    %c24 = arith.constant 24 : index
    %c0_169 = arith.constant 0 : index
    %293 = vector.load %arg50[%c24, %c0_169] : memref<160x128xf32, #tpu.memory_space<vmem>>, vector<8x128xf32>
    tpu.vector_store %arg50[%c24, %c0_169], %292 {strides = array<i32>} : memref<160x128xf32, #tpu.memory_space<vmem>>, vector<8x128xf32>,
    %c0_170 = arith.constant 0 : index
    %c4_171 = arith.constant 4 : index
    %294 = vector.load %arg43[%c0_170, %c4_171] : memref<8x133xf32, #tpu.memory_space<vmem>>, vector<8x128xf32>
    %c32 = arith.constant 32 : index
    %c0_172 = arith.constant 0 : index
    %295 = vector.load %arg50[%c32, %c0_172] : memref<160x128xf32, #tpu.memory_space<vmem>>, vector<8x128xf32>
    tpu.vector_store %arg50[%c32, %c0_172], %294 {strides = array<i32>} : memref<160x128xf32, #tpu.memory_space<vmem>>, vector<8x128xf32>,
    %c0_173 = arith.constant 0 : index
    %c0_174 = arith.constant 0 : index
    %296 = vector.load %arg12[%c0_173, %c0_174] : memref<16x40xf32, #tpu.memory_space<vmem>>, vector<16x40xf32>
    %c0_175 = arith.constant 0 : index
    %c0_176 = arith.constant 0 : index
    %297 = vector.load %arg50[%c0_175, %c0_176] : memref<160x128xf32, #tpu.memory_space<vmem>>, vector<40x128xf32>
    %cst_177 = arith.constant dense<0.000000e+00> : vector<16x128xf32>
    %298 = tpu.matmul %296, %297, %cst_177 {dimension_numbers = #tpu.dot_dimension_numbers<[1], [0], [0], [1], [0, 0, 1, 1], [], []>} : vector<16x40xf32>, vector<40x128xf32>, vector<16x128xf32> -> vector<16x128xf32>
    %c0_178 = arith.constant 0 : index
    %c0_179 = arith.constant 0 : index
    %299 = vector.load %arg13[%c0_178, %c0_179] : memref<16x1xf32, #tpu.memory_space<vmem>>, vector<16x1xf32>
    %300 = vector.broadcast %299 : vector<16x1xf32> to vector<16x128xf32>
    %301 = arith.addf %298, %300 : vector<16x128xf32>
    %c11_i32_180 = arith.constant 11 : i32
    %302 = vector.broadcast %c11_i32_180 : i32 to vector<1x128xi32>
    %303 = arith.cmpi sge, %5, %302 : vector<1x128xi32>
    %c20_i32 = arith.constant 20 : i32
    %304 = vector.broadcast %c20_i32 : i32 to vector<1x128xi32>
    %305 = arith.cmpi slt, %5, %304 : vector<1x128xi32>
    %306 = arith.andi %303, %305 : vector<1x128xi1>
    %cst_181 = arith.constant 0.707106769 : f32
    %307 = vector.broadcast %cst_181 : f32 to vector<16x128xf32>
    %308 = arith.mulf %301, %307 : vector<16x128xf32>
    %309 = math.absf %308 : vector<16x128xf32>
    %cst_182 = arith.constant 0.327591091 : f32
    %310 = vector.broadcast %cst_182 : f32 to vector<16x128xf32>
    %311 = arith.mulf %310, %309 : vector<16x128xf32>
    %cst_183 = arith.constant 1.000000e+00 : f32
    %312 = vector.broadcast %cst_183 : f32 to vector<16x128xf32>
    %313 = arith.addf %312, %311 : vector<16x128xf32>
    %314 = tpu.reciprocal %313 {approx = true} : vector<16x128xf32> -> vector<16x128xf32>
    %315 = arith.mulf %313, %314 : vector<16x128xf32>
    %cst_184 = arith.constant 2.000000e+00 : f32
    %316 = vector.broadcast %cst_184 : f32 to vector<16x128xf32>
    %317 = arith.subf %316, %315 : vector<16x128xf32>
    %318 = arith.mulf %314, %317 : vector<16x128xf32>
    %cst_185 = arith.constant 1.06140542 : f32
    %319 = vector.broadcast %cst_185 : f32 to vector<16x128xf32>
    %320 = arith.mulf %318, %319 : vector<16x128xf32>
    %cst_186 = arith.constant -1.45315206 : f32
    %321 = vector.broadcast %cst_186 : f32 to vector<16x128xf32>
    %322 = arith.addf %321, %320 : vector<16x128xf32>
    %323 = arith.mulf %318, %322 : vector<16x128xf32>
    %cst_187 = arith.constant 1.42141378 : f32
    %324 = vector.broadcast %cst_187 : f32 to vector<16x128xf32>
    %325 = arith.addf %324, %323 : vector<16x128xf32>
    %326 = arith.mulf %318, %325 : vector<16x128xf32>
    %cst_188 = arith.constant -0.284496725 : f32
    %327 = vector.broadcast %cst_188 : f32 to vector<16x128xf32>
    %328 = arith.addf %327, %326 : vector<16x128xf32>
    %329 = arith.mulf %318, %328 : vector<16x128xf32>
    %cst_189 = arith.constant 0.254829586 : f32
    %330 = vector.broadcast %cst_189 : f32 to vector<16x128xf32>
    %331 = arith.addf %330, %329 : vector<16x128xf32>
    %332 = arith.mulf %318, %331 : vector<16x128xf32>
    %cst_190 = arith.constant 0.000000e+00 : f32
    %333 = vector.broadcast %cst_190 : f32 to vector<16x128xf32>
    %334 = arith.subf %333, %309 : vector<16x128xf32>
    %335 = arith.mulf %334, %309 : vector<16x128xf32>
    %336 = math.exp %335 : vector<16x128xf32>
    %337 = arith.mulf %332, %336 : vector<16x128xf32>
    %cst_191 = arith.constant 1.000000e+00 : f32
    %338 = vector.broadcast %cst_191 : f32 to vector<16x128xf32>
    %339 = arith.subf %338, %337 : vector<16x128xf32>
    %cst_192 = arith.constant 0.000000e+00 : f32
    %340 = vector.broadcast %cst_192 : f32 to vector<16x128xf32>
    %341 = arith.cmpf olt, %308, %340 : vector<16x128xf32>
    %cst_193 = arith.constant 0.000000e+00 : f32
    %342 = vector.broadcast %cst_193 : f32 to vector<16x128xf32>
    %343 = arith.subf %342, %339 : vector<16x128xf32>
    %344 = arith.select %341, %343, %339 : vector<16x128xi1>, vector<16x128xf32>
    %cst_194 = arith.constant 5.000000e-01 : f32
    %345 = vector.broadcast %cst_194 : f32 to vector<16x128xf32>
    %346 = arith.mulf %345, %301 : vector<16x128xf32>
    %cst_195 = arith.constant 1.000000e+00 : f32
    %347 = vector.broadcast %cst_195 : f32 to vector<16x128xf32>
    %348 = arith.addf %347, %344 : vector<16x128xf32>
    %349 = arith.mulf %346, %348 : vector<16x128xf32>
    %cst_196 = arith.constant 0.000000e+00 : f32
    %350 = vector.shape_cast %306 : vector<1x128xi1> to vector<1x128xi1>
    %351 = vector.broadcast %350 : vector<1x128xi1> to vector<16x128xi1>
    %352 = vector.broadcast %cst_196 : f32 to vector<16x128xf32>
    %353 = arith.select %351, %349, %352 : vector<16x128xi1>, vector<16x128xf32>
    %cst_197 = arith.constant dense<0.000000e+00> : vector<16xf32>
    %354 = vector.multi_reduction <add>, %353, %cst_197 [1] : vector<16x128xf32> to vector<16xf32>
    %355 = vector.shape_cast %354 : vector<16xf32> to vector<16x1xf32>
    %356 = arith.mulf %353, %353 : vector<16x128xf32>
    %cst_198 = arith.constant dense<0.000000e+00> : vector<16xf32>
    %357 = vector.multi_reduction <add>, %356, %cst_198 [1] : vector<16x128xf32> to vector<16xf32>
    %358 = vector.shape_cast %357 : vector<16xf32> to vector<16x1xf32>
    %cst_199 = arith.constant 0.055555556 : f32
    %359 = vector.broadcast %cst_199 : f32 to vector<16x1xf32>
    %360 = arith.mulf %355, %359 : vector<16x1xf32>
    %cst_200 = arith.constant 0.055555556 : f32
    %361 = vector.broadcast %cst_200 : f32 to vector<16x1xf32>
    %362 = arith.mulf %358, %361 : vector<16x1xf32>
    %363 = arith.mulf %360, %360 : vector<16x1xf32>
    %364 = arith.subf %362, %363 : vector<16x1xf32>
    %cst_201 = arith.constant 0.000000e+00 : f32
    %365 = vector.broadcast %cst_201 : f32 to vector<16x1xf32>
    %366 = arith.maximumf %364, %365 : vector<16x1xf32>
    %cst_202 = arith.constant 9.99999974E-6 : f32
    %367 = vector.broadcast %cst_202 : f32 to vector<16x1xf32>
    %368 = arith.addf %366, %367 : vector<16x1xf32>
    %369 = math.rsqrt %368 : vector<16x1xf32>
    %c0_203 = arith.constant 0 : index
    %c0_204 = arith.constant 0 : index
    %370 = vector.load %arg14[%c0_203, %c0_204] : memref<16x1xf32, #tpu.memory_space<vmem>>, vector<16x1xf32>
    %371 = arith.mulf %369, %370 : vector<16x1xf32>
    %c0_205 = arith.constant 0 : index
    %c0_206 = arith.constant 0 : index
    %372 = vector.load %arg15[%c0_205, %c0_206] : memref<16x1xf32, #tpu.memory_space<vmem>>, vector<16x1xf32>
    %373 = arith.mulf %360, %371 : vector<16x1xf32>
    %374 = arith.subf %372, %373 : vector<16x1xf32>
    %375 = vector.broadcast %371 : vector<16x1xf32> to vector<16x128xf32>
    %376 = arith.mulf %349, %375 : vector<16x128xf32>
    %377 = vector.broadcast %374 : vector<16x1xf32> to vector<16x128xf32>
    %378 = arith.addf %376, %377 : vector<16x128xf32>
    %cst_207 = arith.constant 0.000000e+00 : f32
    %379 = vector.shape_cast %306 : vector<1x128xi1> to vector<1x128xi1>
    %380 = vector.broadcast %379 : vector<1x128xi1> to vector<16x128xi1>
    %381 = vector.broadcast %cst_207 : f32 to vector<16x128xf32>
    %382 = arith.select %380, %378, %381 : vector<16x128xi1>, vector<16x128xf32>
    %c0_208 = arith.constant 0 : index
    %c0_209 = arith.constant 0 : index
    %383 = vector.load %arg44[%c0_208, %c0_209] : memref<16x133xf32, #tpu.memory_space<vmem>>, vector<16x128xf32>
    tpu.vector_store %arg44[%c0_208, %c0_209], %382 {strides = array<i32>} : memref<16x133xf32, #tpu.memory_space<vmem>>, vector<16x128xf32>,
    %c0_210 = arith.constant 0 : index
    %c0_211 = arith.constant 0 : index
    %384 = vector.load %arg44[%c0_210, %c0_211] : memref<16x133xf32, #tpu.memory_space<vmem>>, vector<16x128xf32>
    %c0_212 = arith.constant 0 : index
    %c0_213 = arith.constant 0 : index
    %385 = vector.load %arg50[%c0_212, %c0_213] : memref<160x128xf32, #tpu.memory_space<vmem>>, vector<16x128xf32>
    tpu.vector_store %arg50[%c0_212, %c0_213], %384 {strides = array<i32>} : memref<160x128xf32, #tpu.memory_space<vmem>>, vector<16x128xf32>,
    %c0_214 = arith.constant 0 : index
    %c1_215 = arith.constant 1 : index
    %386 = vector.load %arg44[%c0_214, %c1_215] : memref<16x133xf32, #tpu.memory_space<vmem>>, vector<16x128xf32>
    %c16_216 = arith.constant 16 : index
    %c0_217 = arith.constant 0 : index
    %387 = vector.load %arg50[%c16_216, %c0_217] : memref<160x128xf32, #tpu.memory_space<vmem>>, vector<16x128xf32>
    tpu.vector_store %arg50[%c16_216, %c0_217], %386 {strides = array<i32>} : memref<160x128xf32, #tpu.memory_space<vmem>>, vector<16x128xf32>,
    %c0_218 = arith.constant 0 : index
    %c2_219 = arith.constant 2 : index
    %388 = vector.load %arg44[%c0_218, %c2_219] : memref<16x133xf32, #tpu.memory_space<vmem>>, vector<16x128xf32>
    %c32_220 = arith.constant 32 : index
    %c0_221 = arith.constant 0 : index
    %389 = vector.load %arg50[%c32_220, %c0_221] : memref<160x128xf32, #tpu.memory_space<vmem>>, vector<16x128xf32>
    tpu.vector_store %arg50[%c32_220, %c0_221], %388 {strides = array<i32>} : memref<160x128xf32, #tpu.memory_space<vmem>>, vector<16x128xf32>,
    %c0_222 = arith.constant 0 : index
    %c3_223 = arith.constant 3 : index
    %390 = vector.load %arg44[%c0_222, %c3_223] : memref<16x133xf32, #tpu.memory_space<vmem>>, vector<16x128xf32>
    %c48 = arith.constant 48 : index
    %c0_224 = arith.constant 0 : index
    %391 = vector.load %arg50[%c48, %c0_224] : memref<160x128xf32, #tpu.memory_space<vmem>>, vector<16x128xf32>
    tpu.vector_store %arg50[%c48, %c0_224], %390 {strides = array<i32>} : memref<160x128xf32, #tpu.memory_space<vmem>>, vector<16x128xf32>,
    %c0_225 = arith.constant 0 : index
    %c4_226 = arith.constant 4 : index
    %392 = vector.load %arg44[%c0_225, %c4_226] : memref<16x133xf32, #tpu.memory_space<vmem>>, vector<16x128xf32>
    %c64 = arith.constant 64 : index
    %c0_227 = arith.constant 0 : index
    %393 = vector.load %arg50[%c64, %c0_227] : memref<160x128xf32, #tpu.memory_space<vmem>>, vector<16x128xf32>
    tpu.vector_store %arg50[%c64, %c0_227], %392 {strides = array<i32>} : memref<160x128xf32, #tpu.memory_space<vmem>>, vector<16x128xf32>,
    %c0_228 = arith.constant 0 : index
    %c0_229 = arith.constant 0 : index
    %394 = vector.load %arg16[%c0_228, %c0_229] : memref<32x80xf32, #tpu.memory_space<vmem>>, vector<32x80xf32>
    %c0_230 = arith.constant 0 : index
    %c0_231 = arith.constant 0 : index
    %395 = vector.load %arg50[%c0_230, %c0_231] : memref<160x128xf32, #tpu.memory_space<vmem>>, vector<80x128xf32>
    %cst_232 = arith.constant dense<0.000000e+00> : vector<32x128xf32>
    %396 = tpu.matmul %394, %395, %cst_232 {dimension_numbers = #tpu.dot_dimension_numbers<[1], [0], [0], [1], [0, 0, 1, 1], [], []>} : vector<32x80xf32>, vector<80x128xf32>, vector<32x128xf32> -> vector<32x128xf32>
    %c0_233 = arith.constant 0 : index
    %c0_234 = arith.constant 0 : index
    %397 = vector.load %arg17[%c0_233, %c0_234] : memref<32x1xf32, #tpu.memory_space<vmem>>, vector<32x1xf32>
    %398 = vector.broadcast %397 : vector<32x1xf32> to vector<32x128xf32>
    %399 = arith.addf %396, %398 : vector<32x128xf32>
    %c11_i32_235 = arith.constant 11 : i32
    %400 = vector.broadcast %c11_i32_235 : i32 to vector<1x128xi32>
    %401 = arith.cmpi sge, %5, %400 : vector<1x128xi32>
    %c16_i32 = arith.constant 16 : i32
    %402 = vector.broadcast %c16_i32 : i32 to vector<1x128xi32>
    %403 = arith.cmpi slt, %5, %402 : vector<1x128xi32>
    %404 = arith.andi %401, %403 : vector<1x128xi1>
    %cst_236 = arith.constant 0.707106769 : f32
    %405 = vector.broadcast %cst_236 : f32 to vector<32x128xf32>
    %406 = arith.mulf %399, %405 : vector<32x128xf32>
    %407 = math.absf %406 : vector<32x128xf32>
    %cst_237 = arith.constant 0.327591091 : f32
    %408 = vector.broadcast %cst_237 : f32 to vector<32x128xf32>
    %409 = arith.mulf %408, %407 : vector<32x128xf32>
    %cst_238 = arith.constant 1.000000e+00 : f32
    %410 = vector.broadcast %cst_238 : f32 to vector<32x128xf32>
    %411 = arith.addf %410, %409 : vector<32x128xf32>
    %412 = tpu.reciprocal %411 {approx = true} : vector<32x128xf32> -> vector<32x128xf32>
    %413 = arith.mulf %411, %412 : vector<32x128xf32>
    %cst_239 = arith.constant 2.000000e+00 : f32
    %414 = vector.broadcast %cst_239 : f32 to vector<32x128xf32>
    %415 = arith.subf %414, %413 : vector<32x128xf32>
    %416 = arith.mulf %412, %415 : vector<32x128xf32>
    %cst_240 = arith.constant 1.06140542 : f32
    %417 = vector.broadcast %cst_240 : f32 to vector<32x128xf32>
    %418 = arith.mulf %416, %417 : vector<32x128xf32>
    %cst_241 = arith.constant -1.45315206 : f32
    %419 = vector.broadcast %cst_241 : f32 to vector<32x128xf32>
    %420 = arith.addf %419, %418 : vector<32x128xf32>
    %421 = arith.mulf %416, %420 : vector<32x128xf32>
    %cst_242 = arith.constant 1.42141378 : f32
    %422 = vector.broadcast %cst_242 : f32 to vector<32x128xf32>
    %423 = arith.addf %422, %421 : vector<32x128xf32>
    %424 = arith.mulf %416, %423 : vector<32x128xf32>
    %cst_243 = arith.constant -0.284496725 : f32
    %425 = vector.broadcast %cst_243 : f32 to vector<32x128xf32>
    %426 = arith.addf %425, %424 : vector<32x128xf32>
    %427 = arith.mulf %416, %426 : vector<32x128xf32>
    %cst_244 = arith.constant 0.254829586 : f32
    %428 = vector.broadcast %cst_244 : f32 to vector<32x128xf32>
    %429 = arith.addf %428, %427 : vector<32x128xf32>
    %430 = arith.mulf %416, %429 : vector<32x128xf32>
    %cst_245 = arith.constant 0.000000e+00 : f32
    %431 = vector.broadcast %cst_245 : f32 to vector<32x128xf32>
    %432 = arith.subf %431, %407 : vector<32x128xf32>
    %433 = arith.mulf %432, %407 : vector<32x128xf32>
    %434 = math.exp %433 : vector<32x128xf32>
    %435 = arith.mulf %430, %434 : vector<32x128xf32>
    %cst_246 = arith.constant 1.000000e+00 : f32
    %436 = vector.broadcast %cst_246 : f32 to vector<32x128xf32>
    %437 = arith.subf %436, %435 : vector<32x128xf32>
    %cst_247 = arith.constant 0.000000e+00 : f32
    %438 = vector.broadcast %cst_247 : f32 to vector<32x128xf32>
    %439 = arith.cmpf olt, %406, %438 : vector<32x128xf32>
    %cst_248 = arith.constant 0.000000e+00 : f32
    %440 = vector.broadcast %cst_248 : f32 to vector<32x128xf32>
    %441 = arith.subf %440, %437 : vector<32x128xf32>
    %442 = arith.select %439, %441, %437 : vector<32x128xi1>, vector<32x128xf32>
    %cst_249 = arith.constant 5.000000e-01 : f32
    %443 = vector.broadcast %cst_249 : f32 to vector<32x128xf32>
    %444 = arith.mulf %443, %399 : vector<32x128xf32>
    %cst_250 = arith.constant 1.000000e+00 : f32
    %445 = vector.broadcast %cst_250 : f32 to vector<32x128xf32>
    %446 = arith.addf %445, %442 : vector<32x128xf32>
    %447 = arith.mulf %444, %446 : vector<32x128xf32>
    %cst_251 = arith.constant 0.000000e+00 : f32
    %448 = vector.shape_cast %404 : vector<1x128xi1> to vector<1x128xi1>
    %449 = vector.broadcast %448 : vector<1x128xi1> to vector<32x128xi1>
    %450 = vector.broadcast %cst_251 : f32 to vector<32x128xf32>
    %451 = arith.select %449, %447, %450 : vector<32x128xi1>, vector<32x128xf32>
    %cst_252 = arith.constant dense<0.000000e+00> : vector<32xf32>
    %452 = vector.multi_reduction <add>, %451, %cst_252 [1] : vector<32x128xf32> to vector<32xf32>
    %453 = vector.shape_cast %452 : vector<32xf32> to vector<32x1xf32>
    %454 = arith.mulf %451, %451 : vector<32x128xf32>
    %cst_253 = arith.constant dense<0.000000e+00> : vector<32xf32>
    %455 = vector.multi_reduction <add>, %454, %cst_253 [1] : vector<32x128xf32> to vector<32xf32>
    %456 = vector.shape_cast %455 : vector<32xf32> to vector<32x1xf32>
    %cst_254 = arith.constant 1.000000e-01 : f32
    %457 = vector.broadcast %cst_254 : f32 to vector<32x1xf32>
    %458 = arith.mulf %453, %457 : vector<32x1xf32>
    %cst_255 = arith.constant 1.000000e-01 : f32
    %459 = vector.broadcast %cst_255 : f32 to vector<32x1xf32>
    %460 = arith.mulf %456, %459 : vector<32x1xf32>
    %461 = arith.mulf %458, %458 : vector<32x1xf32>
    %462 = arith.subf %460, %461 : vector<32x1xf32>
    %cst_256 = arith.constant 0.000000e+00 : f32
    %463 = vector.broadcast %cst_256 : f32 to vector<32x1xf32>
    %464 = arith.maximumf %462, %463 : vector<32x1xf32>
    %cst_257 = arith.constant 9.99999974E-6 : f32
    %465 = vector.broadcast %cst_257 : f32 to vector<32x1xf32>
    %466 = arith.addf %464, %465 : vector<32x1xf32>
    %467 = math.rsqrt %466 : vector<32x1xf32>
    %c0_258 = arith.constant 0 : index
    %c0_259 = arith.constant 0 : index
    %468 = vector.load %arg18[%c0_258, %c0_259] : memref<32x1xf32, #tpu.memory_space<vmem>>, vector<32x1xf32>
    %469 = arith.mulf %467, %468 : vector<32x1xf32>
    %c0_260 = arith.constant 0 : index
    %c0_261 = arith.constant 0 : index
    %470 = vector.load %arg19[%c0_260, %c0_261] : memref<32x1xf32, #tpu.memory_space<vmem>>, vector<32x1xf32>
    %471 = arith.mulf %458, %469 : vector<32x1xf32>
    %472 = arith.subf %470, %471 : vector<32x1xf32>
    %473 = vector.broadcast %469 : vector<32x1xf32> to vector<32x128xf32>
    %474 = arith.mulf %447, %473 : vector<32x128xf32>
    %475 = vector.broadcast %472 : vector<32x1xf32> to vector<32x128xf32>
    %476 = arith.addf %474, %475 : vector<32x128xf32>
    %cst_262 = arith.constant 0.000000e+00 : f32
    %477 = vector.shape_cast %404 : vector<1x128xi1> to vector<1x128xi1>
    %478 = vector.broadcast %477 : vector<1x128xi1> to vector<32x128xi1>
    %479 = vector.broadcast %cst_262 : f32 to vector<32x128xf32>
    %480 = arith.select %478, %476, %479 : vector<32x128xi1>, vector<32x128xf32>
    %c0_263 = arith.constant 0 : index
    %c0_264 = arith.constant 0 : index
    %481 = vector.load %arg45[%c0_263, %c0_264] : memref<32x133xf32, #tpu.memory_space<vmem>>, vector<32x128xf32>
    tpu.vector_store %arg45[%c0_263, %c0_264], %480 {strides = array<i32>} : memref<32x133xf32, #tpu.memory_space<vmem>>, vector<32x128xf32>,
    %c0_265 = arith.constant 0 : index
    %c0_266 = arith.constant 0 : index
    %482 = vector.load %arg36[%c0_265, %c0_266] : memref<32x128xf32, #tpu.memory_space<vmem>>, vector<32x128xf32>
    tpu.vector_store %arg36[%c0_265, %c0_266], %480 {strides = array<i32>} : memref<32x128xf32, #tpu.memory_space<vmem>>, vector<32x128xf32>,
    %c0_267 = arith.constant 0 : index
    %c0_268 = arith.constant 0 : index
    %483 = vector.load %arg45[%c0_267, %c0_268] : memref<32x133xf32, #tpu.memory_space<vmem>>, vector<32x128xf32>
    %c0_269 = arith.constant 0 : index
    %c0_270 = arith.constant 0 : index
    %484 = vector.load %arg50[%c0_269, %c0_270] : memref<160x128xf32, #tpu.memory_space<vmem>>, vector<32x128xf32>
    tpu.vector_store %arg50[%c0_269, %c0_270], %483 {strides = array<i32>} : memref<160x128xf32, #tpu.memory_space<vmem>>, vector<32x128xf32>,
    %c0_271 = arith.constant 0 : index
    %c1_272 = arith.constant 1 : index
    %485 = vector.load %arg45[%c0_271, %c1_272] : memref<32x133xf32, #tpu.memory_space<vmem>>, vector<32x128xf32>
    %c32_273 = arith.constant 32 : index
    %c0_274 = arith.constant 0 : index
    %486 = vector.load %arg50[%c32_273, %c0_274] : memref<160x128xf32, #tpu.memory_space<vmem>>, vector<32x128xf32>
    tpu.vector_store %arg50[%c32_273, %c0_274], %485 {strides = array<i32>} : memref<160x128xf32, #tpu.memory_space<vmem>>, vector<32x128xf32>,
    %c0_275 = arith.constant 0 : index
    %c2_276 = arith.constant 2 : index
    %487 = vector.load %arg45[%c0_275, %c2_276] : memref<32x133xf32, #tpu.memory_space<vmem>>, vector<32x128xf32>
    %c64_277 = arith.constant 64 : index
    %c0_278 = arith.constant 0 : index
    %488 = vector.load %arg50[%c64_277, %c0_278] : memref<160x128xf32, #tpu.memory_space<vmem>>, vector<32x128xf32>
    tpu.vector_store %arg50[%c64_277, %c0_278], %487 {strides = array<i32>} : memref<160x128xf32, #tpu.memory_space<vmem>>, vector<32x128xf32>,
    %c0_279 = arith.constant 0 : index
    %c3_280 = arith.constant 3 : index
    %489 = vector.load %arg45[%c0_279, %c3_280] : memref<32x133xf32, #tpu.memory_space<vmem>>, vector<32x128xf32>
    %c96 = arith.constant 96 : index
    %c0_281 = arith.constant 0 : index
    %490 = vector.load %arg50[%c96, %c0_281] : memref<160x128xf32, #tpu.memory_space<vmem>>, vector<32x128xf32>
    tpu.vector_store %arg50[%c96, %c0_281], %489 {strides = array<i32>} : memref<160x128xf32, #tpu.memory_space<vmem>>, vector<32x128xf32>,
    %c0_282 = arith.constant 0 : index
    %c4_283 = arith.constant 4 : index
    %491 = vector.load %arg45[%c0_282, %c4_283] : memref<32x133xf32, #tpu.memory_space<vmem>>, vector<32x128xf32>
    %c128 = arith.constant 128 : index
    %c0_284 = arith.constant 0 : index
    %492 = vector.load %arg50[%c128, %c0_284] : memref<160x128xf32, #tpu.memory_space<vmem>>, vector<32x128xf32>
    tpu.vector_store %arg50[%c128, %c0_284], %491 {strides = array<i32>} : memref<160x128xf32, #tpu.memory_space<vmem>>, vector<32x128xf32>,
    %c0_285 = arith.constant 0 : index
    %c0_286 = arith.constant 0 : index
    %493 = vector.load %arg20[%c0_285, %c0_286] : memref<16x160xf32, #tpu.memory_space<vmem>>, vector<16x160xf32>
    %c0_287 = arith.constant 0 : index
    %c0_288 = arith.constant 0 : index
    %494 = vector.load %arg50[%c0_287, %c0_288] : memref<160x128xf32, #tpu.memory_space<vmem>>, vector<160x128xf32>
    %cst_289 = arith.constant dense<0.000000e+00> : vector<16x128xf32>
    %495 = tpu.matmul %493, %494, %cst_289 {dimension_numbers = #tpu.dot_dimension_numbers<[1], [0], [0], [1], [0, 0, 1, 1], [], []>} : vector<16x160xf32>, vector<160x128xf32>, vector<16x128xf32> -> vector<16x128xf32>
    %c0_290 = arith.constant 0 : index
    %c0_291 = arith.constant 0 : index
    %496 = vector.load %arg21[%c0_290, %c0_291] : memref<16x1xf32, #tpu.memory_space<vmem>>, vector<16x1xf32>
    %497 = vector.broadcast %496 : vector<16x1xf32> to vector<16x128xf32>
    %498 = arith.addf %495, %497 : vector<16x128xf32>
    %c7_i32 = arith.constant 7 : i32
    %499 = vector.broadcast %c7_i32 : i32 to vector<1x128xi32>
    %500 = arith.cmpi sge, %5, %499 : vector<1x128xi32>
    %c16_i32_292 = arith.constant 16 : i32
    %501 = vector.broadcast %c16_i32_292 : i32 to vector<1x128xi32>
    %502 = arith.cmpi slt, %5, %501 : vector<1x128xi32>
    %503 = arith.andi %500, %502 : vector<1x128xi1>
    %cst_293 = arith.constant 0.707106769 : f32
    %504 = vector.broadcast %cst_293 : f32 to vector<16x128xf32>
    %505 = arith.mulf %498, %504 : vector<16x128xf32>
    %506 = math.absf %505 : vector<16x128xf32>
    %cst_294 = arith.constant 0.327591091 : f32
    %507 = vector.broadcast %cst_294 : f32 to vector<16x128xf32>
    %508 = arith.mulf %507, %506 : vector<16x128xf32>
    %cst_295 = arith.constant 1.000000e+00 : f32
    %509 = vector.broadcast %cst_295 : f32 to vector<16x128xf32>
    %510 = arith.addf %509, %508 : vector<16x128xf32>
    %511 = tpu.reciprocal %510 {approx = true} : vector<16x128xf32> -> vector<16x128xf32>
    %512 = arith.mulf %510, %511 : vector<16x128xf32>
    %cst_296 = arith.constant 2.000000e+00 : f32
    %513 = vector.broadcast %cst_296 : f32 to vector<16x128xf32>
    %514 = arith.subf %513, %512 : vector<16x128xf32>
    %515 = arith.mulf %511, %514 : vector<16x128xf32>
    %cst_297 = arith.constant 1.06140542 : f32
    %516 = vector.broadcast %cst_297 : f32 to vector<16x128xf32>
    %517 = arith.mulf %515, %516 : vector<16x128xf32>
    %cst_298 = arith.constant -1.45315206 : f32
    %518 = vector.broadcast %cst_298 : f32 to vector<16x128xf32>
    %519 = arith.addf %518, %517 : vector<16x128xf32>
    %520 = arith.mulf %515, %519 : vector<16x128xf32>
    %cst_299 = arith.constant 1.42141378 : f32
    %521 = vector.broadcast %cst_299 : f32 to vector<16x128xf32>
    %522 = arith.addf %521, %520 : vector<16x128xf32>
    %523 = arith.mulf %515, %522 : vector<16x128xf32>
    %cst_300 = arith.constant -0.284496725 : f32
    %524 = vector.broadcast %cst_300 : f32 to vector<16x128xf32>
    %525 = arith.addf %524, %523 : vector<16x128xf32>
    %526 = arith.mulf %515, %525 : vector<16x128xf32>
    %cst_301 = arith.constant 0.254829586 : f32
    %527 = vector.broadcast %cst_301 : f32 to vector<16x128xf32>
    %528 = arith.addf %527, %526 : vector<16x128xf32>
    %529 = arith.mulf %515, %528 : vector<16x128xf32>
    %cst_302 = arith.constant 0.000000e+00 : f32
    %530 = vector.broadcast %cst_302 : f32 to vector<16x128xf32>
    %531 = arith.subf %530, %506 : vector<16x128xf32>
    %532 = arith.mulf %531, %506 : vector<16x128xf32>
    %533 = math.exp %532 : vector<16x128xf32>
    %534 = arith.mulf %529, %533 : vector<16x128xf32>
    %cst_303 = arith.constant 1.000000e+00 : f32
    %535 = vector.broadcast %cst_303 : f32 to vector<16x128xf32>
    %536 = arith.subf %535, %534 : vector<16x128xf32>
    %cst_304 = arith.constant 0.000000e+00 : f32
    %537 = vector.broadcast %cst_304 : f32 to vector<16x128xf32>
    %538 = arith.cmpf olt, %505, %537 : vector<16x128xf32>
    %cst_305 = arith.constant 0.000000e+00 : f32
    %539 = vector.broadcast %cst_305 : f32 to vector<16x128xf32>
    %540 = arith.subf %539, %536 : vector<16x128xf32>
    %541 = arith.select %538, %540, %536 : vector<16x128xi1>, vector<16x128xf32>
    %cst_306 = arith.constant 5.000000e-01 : f32
    %542 = vector.broadcast %cst_306 : f32 to vector<16x128xf32>
    %543 = arith.mulf %542, %498 : vector<16x128xf32>
    %cst_307 = arith.constant 1.000000e+00 : f32
    %544 = vector.broadcast %cst_307 : f32 to vector<16x128xf32>
    %545 = arith.addf %544, %541 : vector<16x128xf32>
    %546 = arith.mulf %543, %545 : vector<16x128xf32>
    %cst_308 = arith.constant 0.000000e+00 : f32
    %547 = vector.shape_cast %503 : vector<1x128xi1> to vector<1x128xi1>
    %548 = vector.broadcast %547 : vector<1x128xi1> to vector<16x128xi1>
    %549 = vector.broadcast %cst_308 : f32 to vector<16x128xf32>
    %550 = arith.select %548, %546, %549 : vector<16x128xi1>, vector<16x128xf32>
    %cst_309 = arith.constant dense<0.000000e+00> : vector<16xf32>
    %551 = vector.multi_reduction <add>, %550, %cst_309 [1] : vector<16x128xf32> to vector<16xf32>
    %552 = vector.shape_cast %551 : vector<16xf32> to vector<16x1xf32>
    %553 = arith.mulf %550, %550 : vector<16x128xf32>
    %cst_310 = arith.constant dense<0.000000e+00> : vector<16xf32>
    %554 = vector.multi_reduction <add>, %553, %cst_310 [1] : vector<16x128xf32> to vector<16xf32>
    %555 = vector.shape_cast %554 : vector<16xf32> to vector<16x1xf32>
    %cst_311 = arith.constant 0.055555556 : f32
    %556 = vector.broadcast %cst_311 : f32 to vector<16x1xf32>
    %557 = arith.mulf %552, %556 : vector<16x1xf32>
    %cst_312 = arith.constant 0.055555556 : f32
    %558 = vector.broadcast %cst_312 : f32 to vector<16x1xf32>
    %559 = arith.mulf %555, %558 : vector<16x1xf32>
    %560 = arith.mulf %557, %557 : vector<16x1xf32>
    %561 = arith.subf %559, %560 : vector<16x1xf32>
    %cst_313 = arith.constant 0.000000e+00 : f32
    %562 = vector.broadcast %cst_313 : f32 to vector<16x1xf32>
    %563 = arith.maximumf %561, %562 : vector<16x1xf32>
    %cst_314 = arith.constant 9.99999974E-6 : f32
    %564 = vector.broadcast %cst_314 : f32 to vector<16x1xf32>
    %565 = arith.addf %563, %564 : vector<16x1xf32>
    %566 = math.rsqrt %565 : vector<16x1xf32>
    %c0_315 = arith.constant 0 : index
    %c0_316 = arith.constant 0 : index
    %567 = vector.load %arg22[%c0_315, %c0_316] : memref<16x1xf32, #tpu.memory_space<vmem>>, vector<16x1xf32>
    %568 = arith.mulf %566, %567 : vector<16x1xf32>
    %c0_317 = arith.constant 0 : index
    %c0_318 = arith.constant 0 : index
    %569 = vector.load %arg23[%c0_317, %c0_318] : memref<16x1xf32, #tpu.memory_space<vmem>>, vector<16x1xf32>
    %570 = arith.mulf %557, %568 : vector<16x1xf32>
    %571 = arith.subf %569, %570 : vector<16x1xf32>
    %572 = vector.broadcast %568 : vector<16x1xf32> to vector<16x128xf32>
    %573 = arith.mulf %546, %572 : vector<16x128xf32>
    %574 = vector.broadcast %571 : vector<16x1xf32> to vector<16x128xf32>
    %575 = arith.addf %573, %574 : vector<16x128xf32>
    %cst_319 = arith.constant 0.000000e+00 : f32
    %576 = vector.shape_cast %503 : vector<1x128xi1> to vector<1x128xi1>
    %577 = vector.broadcast %576 : vector<1x128xi1> to vector<16x128xi1>
    %578 = vector.broadcast %cst_319 : f32 to vector<16x128xf32>
    %579 = arith.select %577, %575, %578 : vector<16x128xi1>, vector<16x128xf32>
    %c0_320 = arith.constant 0 : index
    %c0_321 = arith.constant 0 : index
    %580 = vector.load %arg46[%c0_320, %c0_321] : memref<16x133xf32, #tpu.memory_space<vmem>>, vector<16x128xf32>
    tpu.vector_store %arg46[%c0_320, %c0_321], %579 {strides = array<i32>} : memref<16x133xf32, #tpu.memory_space<vmem>>, vector<16x128xf32>,
    %c0_322 = arith.constant 0 : index
    %c0_323 = arith.constant 0 : index
    %581 = vector.load %arg46[%c0_322, %c0_323] : memref<16x133xf32, #tpu.memory_space<vmem>>, vector<16x128xf32>
    %c0_324 = arith.constant 0 : index
    %c0_325 = arith.constant 0 : index
    %582 = vector.load %arg50[%c0_324, %c0_325] : memref<160x128xf32, #tpu.memory_space<vmem>>, vector<16x128xf32>
    tpu.vector_store %arg50[%c0_324, %c0_325], %581 {strides = array<i32>} : memref<160x128xf32, #tpu.memory_space<vmem>>, vector<16x128xf32>,
    %c0_326 = arith.constant 0 : index
    %c1_327 = arith.constant 1 : index
    %583 = vector.load %arg46[%c0_326, %c1_327] : memref<16x133xf32, #tpu.memory_space<vmem>>, vector<16x128xf32>
    %c16_328 = arith.constant 16 : index
    %c0_329 = arith.constant 0 : index
    %584 = vector.load %arg50[%c16_328, %c0_329] : memref<160x128xf32, #tpu.memory_space<vmem>>, vector<16x128xf32>
    tpu.vector_store %arg50[%c16_328, %c0_329], %583 {strides = array<i32>} : memref<160x128xf32, #tpu.memory_space<vmem>>, vector<16x128xf32>,
    %c0_330 = arith.constant 0 : index
    %c2_331 = arith.constant 2 : index
    %585 = vector.load %arg46[%c0_330, %c2_331] : memref<16x133xf32, #tpu.memory_space<vmem>>, vector<16x128xf32>
    %c32_332 = arith.constant 32 : index
    %c0_333 = arith.constant 0 : index
    %586 = vector.load %arg50[%c32_332, %c0_333] : memref<160x128xf32, #tpu.memory_space<vmem>>, vector<16x128xf32>
    tpu.vector_store %arg50[%c32_332, %c0_333], %585 {strides = array<i32>} : memref<160x128xf32, #tpu.memory_space<vmem>>, vector<16x128xf32>,
    %c0_334 = arith.constant 0 : index
    %c3_335 = arith.constant 3 : index
    %587 = vector.load %arg46[%c0_334, %c3_335] : memref<16x133xf32, #tpu.memory_space<vmem>>, vector<16x128xf32>
    %c48_336 = arith.constant 48 : index
    %c0_337 = arith.constant 0 : index
    %588 = vector.load %arg50[%c48_336, %c0_337] : memref<160x128xf32, #tpu.memory_space<vmem>>, vector<16x128xf32>
    tpu.vector_store %arg50[%c48_336, %c0_337], %587 {strides = array<i32>} : memref<160x128xf32, #tpu.memory_space<vmem>>, vector<16x128xf32>,
    %c0_338 = arith.constant 0 : index
    %c4_339 = arith.constant 4 : index
    %589 = vector.load %arg46[%c0_338, %c4_339] : memref<16x133xf32, #tpu.memory_space<vmem>>, vector<16x128xf32>
    %c64_340 = arith.constant 64 : index
    %c0_341 = arith.constant 0 : index
    %590 = vector.load %arg50[%c64_340, %c0_341] : memref<160x128xf32, #tpu.memory_space<vmem>>, vector<16x128xf32>
    tpu.vector_store %arg50[%c64_340, %c0_341], %589 {strides = array<i32>} : memref<160x128xf32, #tpu.memory_space<vmem>>, vector<16x128xf32>,
    %c0_342 = arith.constant 0 : index
    %c0_343 = arith.constant 0 : index
    %591 = vector.load %arg24[%c0_342, %c0_343] : memref<8x80xf32, #tpu.memory_space<vmem>>, vector<8x80xf32>
    %c0_344 = arith.constant 0 : index
    %c0_345 = arith.constant 0 : index
    %592 = vector.load %arg50[%c0_344, %c0_345] : memref<160x128xf32, #tpu.memory_space<vmem>>, vector<80x128xf32>
    %cst_346 = arith.constant dense<0.000000e+00> : vector<8x128xf32>
    %593 = tpu.matmul %591, %592, %cst_346 {dimension_numbers = #tpu.dot_dimension_numbers<[1], [0], [0], [1], [0, 0, 1, 1], [], []>} : vector<8x80xf32>, vector<80x128xf32>, vector<8x128xf32> -> vector<8x128xf32>
    %c0_347 = arith.constant 0 : index
    %c0_348 = arith.constant 0 : index
    %594 = vector.load %arg25[%c0_347, %c0_348] : memref<8x1xf32, #tpu.memory_space<vmem>>, vector<8x1xf32>
    %595 = vector.broadcast %594 : vector<8x1xf32> to vector<8x128xf32>
    %596 = arith.addf %593, %595 : vector<8x128xf32>
    %c3_i32 = arith.constant 3 : i32
    %597 = vector.broadcast %c3_i32 : i32 to vector<1x128xi32>
    %598 = arith.cmpi sge, %5, %597 : vector<1x128xi32>
    %c16_i32_349 = arith.constant 16 : i32
    %599 = vector.broadcast %c16_i32_349 : i32 to vector<1x128xi32>
    %600 = arith.cmpi slt, %5, %599 : vector<1x128xi32>
    %601 = arith.andi %598, %600 : vector<1x128xi1>
    %cst_350 = arith.constant 0.707106769 : f32
    %602 = vector.broadcast %cst_350 : f32 to vector<8x128xf32>
    %603 = arith.mulf %596, %602 : vector<8x128xf32>
    %604 = math.absf %603 : vector<8x128xf32>
    %cst_351 = arith.constant 0.327591091 : f32
    %605 = vector.broadcast %cst_351 : f32 to vector<8x128xf32>
    %606 = arith.mulf %605, %604 : vector<8x128xf32>
    %cst_352 = arith.constant 1.000000e+00 : f32
    %607 = vector.broadcast %cst_352 : f32 to vector<8x128xf32>
    %608 = arith.addf %607, %606 : vector<8x128xf32>
    %609 = tpu.reciprocal %608 {approx = true} : vector<8x128xf32> -> vector<8x128xf32>
    %610 = arith.mulf %608, %609 : vector<8x128xf32>
    %cst_353 = arith.constant 2.000000e+00 : f32
    %611 = vector.broadcast %cst_353 : f32 to vector<8x128xf32>
    %612 = arith.subf %611, %610 : vector<8x128xf32>
    %613 = arith.mulf %609, %612 : vector<8x128xf32>
    %cst_354 = arith.constant 1.06140542 : f32
    %614 = vector.broadcast %cst_354 : f32 to vector<8x128xf32>
    %615 = arith.mulf %613, %614 : vector<8x128xf32>
    %cst_355 = arith.constant -1.45315206 : f32
    %616 = vector.broadcast %cst_355 : f32 to vector<8x128xf32>
    %617 = arith.addf %616, %615 : vector<8x128xf32>
    %618 = arith.mulf %613, %617 : vector<8x128xf32>
    %cst_356 = arith.constant 1.42141378 : f32
    %619 = vector.broadcast %cst_356 : f32 to vector<8x128xf32>
    %620 = arith.addf %619, %618 : vector<8x128xf32>
    %621 = arith.mulf %613, %620 : vector<8x128xf32>
    %cst_357 = arith.constant -0.284496725 : f32
    %622 = vector.broadcast %cst_357 : f32 to vector<8x128xf32>
    %623 = arith.addf %622, %621 : vector<8x128xf32>
    %624 = arith.mulf %613, %623 : vector<8x128xf32>
    %cst_358 = arith.constant 0.254829586 : f32
    %625 = vector.broadcast %cst_358 : f32 to vector<8x128xf32>
    %626 = arith.addf %625, %624 : vector<8x128xf32>
    %627 = arith.mulf %613, %626 : vector<8x128xf32>
    %cst_359 = arith.constant 0.000000e+00 : f32
    %628 = vector.broadcast %cst_359 : f32 to vector<8x128xf32>
    %629 = arith.subf %628, %604 : vector<8x128xf32>
    %630 = arith.mulf %629, %604 : vector<8x128xf32>
    %631 = math.exp %630 : vector<8x128xf32>
    %632 = arith.mulf %627, %631 : vector<8x128xf32>
    %cst_360 = arith.constant 1.000000e+00 : f32
    %633 = vector.broadcast %cst_360 : f32 to vector<8x128xf32>
    %634 = arith.subf %633, %632 : vector<8x128xf32>
    %cst_361 = arith.constant 0.000000e+00 : f32
    %635 = vector.broadcast %cst_361 : f32 to vector<8x128xf32>
    %636 = arith.cmpf olt, %603, %635 : vector<8x128xf32>
    %cst_362 = arith.constant 0.000000e+00 : f32
    %637 = vector.broadcast %cst_362 : f32 to vector<8x128xf32>
    %638 = arith.subf %637, %634 : vector<8x128xf32>
    %639 = arith.select %636, %638, %634 : vector<8x128xi1>, vector<8x128xf32>
    %cst_363 = arith.constant 5.000000e-01 : f32
    %640 = vector.broadcast %cst_363 : f32 to vector<8x128xf32>
    %641 = arith.mulf %640, %596 : vector<8x128xf32>
    %cst_364 = arith.constant 1.000000e+00 : f32
    %642 = vector.broadcast %cst_364 : f32 to vector<8x128xf32>
    %643 = arith.addf %642, %639 : vector<8x128xf32>
    %644 = arith.mulf %641, %643 : vector<8x128xf32>
    %cst_365 = arith.constant 0.000000e+00 : f32
    %645 = vector.shape_cast %601 : vector<1x128xi1> to vector<1x128xi1>
    %646 = vector.broadcast %645 : vector<1x128xi1> to vector<8x128xi1>
    %647 = vector.broadcast %cst_365 : f32 to vector<8x128xf32>
    %648 = arith.select %646, %644, %647 : vector<8x128xi1>, vector<8x128xf32>
    %cst_366 = arith.constant dense<0.000000e+00> : vector<8xf32>
    %649 = vector.multi_reduction <add>, %648, %cst_366 [1] : vector<8x128xf32> to vector<8xf32>
    %650 = vector.shape_cast %649 : vector<8xf32> to vector<8x1xf32>
    %651 = arith.mulf %648, %648 : vector<8x128xf32>
    %cst_367 = arith.constant dense<0.000000e+00> : vector<8xf32>
    %652 = vector.multi_reduction <add>, %651, %cst_367 [1] : vector<8x128xf32> to vector<8xf32>
    %653 = vector.shape_cast %652 : vector<8xf32> to vector<8x1xf32>
    %cst_368 = arith.constant 0.0384615399 : f32
    %654 = vector.broadcast %cst_368 : f32 to vector<8x1xf32>
    %655 = arith.mulf %650, %654 : vector<8x1xf32>
    %cst_369 = arith.constant 0.0384615399 : f32
    %656 = vector.broadcast %cst_369 : f32 to vector<8x1xf32>
    %657 = arith.mulf %653, %656 : vector<8x1xf32>
    %658 = arith.mulf %655, %655 : vector<8x1xf32>
    %659 = arith.subf %657, %658 : vector<8x1xf32>
    %cst_370 = arith.constant 0.000000e+00 : f32
    %660 = vector.broadcast %cst_370 : f32 to vector<8x1xf32>
    %661 = arith.maximumf %659, %660 : vector<8x1xf32>
    %cst_371 = arith.constant 9.99999974E-6 : f32
    %662 = vector.broadcast %cst_371 : f32 to vector<8x1xf32>
    %663 = arith.addf %661, %662 : vector<8x1xf32>
    %664 = math.rsqrt %663 : vector<8x1xf32>
    %c0_372 = arith.constant 0 : index
    %c0_373 = arith.constant 0 : index
    %665 = vector.load %arg26[%c0_372, %c0_373] : memref<8x1xf32, #tpu.memory_space<vmem>>, vector<8x1xf32>
    %666 = arith.mulf %664, %665 : vector<8x1xf32>
    %c0_374 = arith.constant 0 : index
    %c0_375 = arith.constant 0 : index
    %667 = vector.load %arg27[%c0_374, %c0_375] : memref<8x1xf32, #tpu.memory_space<vmem>>, vector<8x1xf32>
    %668 = arith.mulf %655, %666 : vector<8x1xf32>
    %669 = arith.subf %667, %668 : vector<8x1xf32>
    %670 = vector.broadcast %666 : vector<8x1xf32> to vector<8x128xf32>
    %671 = arith.mulf %644, %670 : vector<8x128xf32>
    %672 = vector.broadcast %669 : vector<8x1xf32> to vector<8x128xf32>
    %673 = arith.addf %671, %672 : vector<8x128xf32>
    %cst_376 = arith.constant 0.000000e+00 : f32
    %674 = vector.shape_cast %601 : vector<1x128xi1> to vector<1x128xi1>
    %675 = vector.broadcast %674 : vector<1x128xi1> to vector<8x128xi1>
    %676 = vector.broadcast %cst_376 : f32 to vector<8x128xf32>
    %677 = arith.select %675, %673, %676 : vector<8x128xi1>, vector<8x128xf32>
    %c0_377 = arith.constant 0 : index
    %c0_378 = arith.constant 0 : index
    %678 = vector.load %arg47[%c0_377, %c0_378] : memref<8x133xf32, #tpu.memory_space<vmem>>, vector<8x128xf32>
    tpu.vector_store %arg47[%c0_377, %c0_378], %677 {strides = array<i32>} : memref<8x133xf32, #tpu.memory_space<vmem>>, vector<8x128xf32>,
    %c0_379 = arith.constant 0 : index
    %c2_380 = arith.constant 2 : index
    %679 = vector.load %arg47[%c0_379, %c2_380] : memref<8x133xf32, #tpu.memory_space<vmem>>, vector<8x128xf32>
    %c0_381 = arith.constant 0 : index
    %c0_382 = arith.constant 0 : index
    %680 = vector.load %arg50[%c0_381, %c0_382] : memref<160x128xf32, #tpu.memory_space<vmem>>, vector<8x128xf32>
    tpu.vector_store %arg50[%c0_381, %c0_382], %679 {strides = array<i32>} : memref<160x128xf32, #tpu.memory_space<vmem>>, vector<8x128xf32>,
    %c0_383 = arith.constant 0 : index
    %c1_384 = arith.constant 1 : index
    %681 = vector.load %arg47[%c0_383, %c1_384] : memref<8x133xf32, #tpu.memory_space<vmem>>, vector<8x128xf32>
    %c8_385 = arith.constant 8 : index
    %c0_386 = arith.constant 0 : index
    %682 = vector.load %arg50[%c8_385, %c0_386] : memref<160x128xf32, #tpu.memory_space<vmem>>, vector<8x128xf32>
    tpu.vector_store %arg50[%c8_385, %c0_386], %681 {strides = array<i32>} : memref<160x128xf32, #tpu.memory_space<vmem>>, vector<8x128xf32>,
    %c0_387 = arith.constant 0 : index
    %c0_388 = arith.constant 0 : index
    %683 = vector.load %arg47[%c0_387, %c0_388] : memref<8x133xf32, #tpu.memory_space<vmem>>, vector<8x128xf32>
    %c16_389 = arith.constant 16 : index
    %c0_390 = arith.constant 0 : index
    %684 = vector.load %arg50[%c16_389, %c0_390] : memref<160x128xf32, #tpu.memory_space<vmem>>, vector<8x128xf32>
    tpu.vector_store %arg50[%c16_389, %c0_390], %683 {strides = array<i32>} : memref<160x128xf32, #tpu.memory_space<vmem>>, vector<8x128xf32>,
    %c0_391 = arith.constant 0 : index
    %c0_392 = arith.constant 0 : index
    %685 = vector.load %arg28[%c0_391, %c0_392] : memref<4x24xf32, #tpu.memory_space<vmem>>, vector<4x24xf32>
    %c0_393 = arith.constant 0 : index
    %c0_394 = arith.constant 0 : index
    %686 = vector.load %arg50[%c0_393, %c0_394] : memref<160x128xf32, #tpu.memory_space<vmem>>, vector<24x128xf32>
    %cst_395 = arith.constant dense<0.000000e+00> : vector<4x128xf32>
    %687 = tpu.matmul %685, %686, %cst_395 {dimension_numbers = #tpu.dot_dimension_numbers<[1], [0], [0], [1], [0, 0, 1, 1], [], []>} : vector<4x24xf32>, vector<24x128xf32>, vector<4x128xf32> -> vector<4x128xf32>
    %c0_396 = arith.constant 0 : index
    %c0_397 = arith.constant 0 : index
    %688 = vector.load %arg30[%c0_396, %c0_397] : memref<4x1xf32, #tpu.memory_space<vmem>>, vector<4x1xf32>
    %689 = vector.broadcast %688 : vector<4x1xf32> to vector<4x128xf32>
    %690 = arith.addf %687, %689 : vector<4x128xf32>
    %c1_i32 = arith.constant 1 : i32
    %691 = vector.broadcast %c1_i32 : i32 to vector<1x128xi32>
    %692 = arith.cmpi sge, %5, %691 : vector<1x128xi32>
    %c16_i32_398 = arith.constant 16 : i32
    %693 = vector.broadcast %c16_i32_398 : i32 to vector<1x128xi32>
    %694 = arith.cmpi slt, %5, %693 : vector<1x128xi32>
    %695 = arith.andi %692, %694 : vector<1x128xi1>
    %c0_399 = arith.constant 0 : index
    %c2_400 = arith.constant 2 : index
    %696 = vector.load %arg47[%c0_399, %c2_400] : memref<8x133xf32, #tpu.memory_space<vmem>>, vector<8x128xf32>
    %c0_401 = arith.constant 0 : index
    %c0_402 = arith.constant 0 : index
    %697 = vector.load %arg50[%c0_401, %c0_402] : memref<160x128xf32, #tpu.memory_space<vmem>>, vector<8x128xf32>
    tpu.vector_store %arg50[%c0_401, %c0_402], %696 {strides = array<i32>} : memref<160x128xf32, #tpu.memory_space<vmem>>, vector<8x128xf32>,
    %c0_403 = arith.constant 0 : index
    %c1_404 = arith.constant 1 : index
    %698 = vector.load %arg47[%c0_403, %c1_404] : memref<8x133xf32, #tpu.memory_space<vmem>>, vector<8x128xf32>
    %c8_405 = arith.constant 8 : index
    %c0_406 = arith.constant 0 : index
    %699 = vector.load %arg50[%c8_405, %c0_406] : memref<160x128xf32, #tpu.memory_space<vmem>>, vector<8x128xf32>
    tpu.vector_store %arg50[%c8_405, %c0_406], %698 {strides = array<i32>} : memref<160x128xf32, #tpu.memory_space<vmem>>, vector<8x128xf32>,
    %c0_407 = arith.constant 0 : index
    %c0_408 = arith.constant 0 : index
    %700 = vector.load %arg29[%c0_407, %c0_408] : memref<4x16xf32, #tpu.memory_space<vmem>>, vector<4x16xf32>
    %c0_409 = arith.constant 0 : index
    %c0_410 = arith.constant 0 : index
    %701 = vector.load %arg50[%c0_409, %c0_410] : memref<160x128xf32, #tpu.memory_space<vmem>>, vector<16x128xf32>
    %cst_411 = arith.constant dense<0.000000e+00> : vector<4x128xf32>
    %702 = tpu.matmul %700, %701, %cst_411 {dimension_numbers = #tpu.dot_dimension_numbers<[1], [0], [0], [1], [0, 0, 1, 1], [], []>} : vector<4x16xf32>, vector<16x128xf32>, vector<4x128xf32> -> vector<4x128xf32>
    %c0_412 = arith.constant 0 : index
    %c0_413 = arith.constant 0 : index
    %703 = vector.load %arg30[%c0_412, %c0_413] : memref<4x1xf32, #tpu.memory_space<vmem>>, vector<4x1xf32>
    %704 = vector.broadcast %703 : vector<4x1xf32> to vector<4x128xf32>
    %705 = arith.addf %702, %704 : vector<4x128xf32>
    %c1_i32_414 = arith.constant 1 : i32
    %706 = vector.broadcast %c1_i32_414 : i32 to vector<1x128xi32>
    %707 = arith.cmpi sge, %5, %706 : vector<1x128xi32>
    %c15_i32 = arith.constant 15 : i32
    %708 = vector.broadcast %c15_i32 : i32 to vector<1x128xi32>
    %709 = arith.cmpi slt, %5, %708 : vector<1x128xi32>
    %710 = arith.andi %707, %709 : vector<1x128xi1>
    %cst_415 = arith.constant 0.707106769 : f32
    %711 = vector.broadcast %cst_415 : f32 to vector<4x128xf32>
    %712 = arith.mulf %690, %711 : vector<4x128xf32>
    %713 = math.absf %712 : vector<4x128xf32>
    %cst_416 = arith.constant 0.327591091 : f32
    %714 = vector.broadcast %cst_416 : f32 to vector<4x128xf32>
    %715 = arith.mulf %714, %713 : vector<4x128xf32>
    %cst_417 = arith.constant 1.000000e+00 : f32
    %716 = vector.broadcast %cst_417 : f32 to vector<4x128xf32>
    %717 = arith.addf %716, %715 : vector<4x128xf32>
    %718 = tpu.reciprocal %717 {approx = true} : vector<4x128xf32> -> vector<4x128xf32>
    %719 = arith.mulf %717, %718 : vector<4x128xf32>
    %cst_418 = arith.constant 2.000000e+00 : f32
    %720 = vector.broadcast %cst_418 : f32 to vector<4x128xf32>
    %721 = arith.subf %720, %719 : vector<4x128xf32>
    %722 = arith.mulf %718, %721 : vector<4x128xf32>
    %cst_419 = arith.constant 1.06140542 : f32
    %723 = vector.broadcast %cst_419 : f32 to vector<4x128xf32>
    %724 = arith.mulf %722, %723 : vector<4x128xf32>
    %cst_420 = arith.constant -1.45315206 : f32
    %725 = vector.broadcast %cst_420 : f32 to vector<4x128xf32>
    %726 = arith.addf %725, %724 : vector<4x128xf32>
    %727 = arith.mulf %722, %726 : vector<4x128xf32>
    %cst_421 = arith.constant 1.42141378 : f32
    %728 = vector.broadcast %cst_421 : f32 to vector<4x128xf32>
    %729 = arith.addf %728, %727 : vector<4x128xf32>
    %730 = arith.mulf %722, %729 : vector<4x128xf32>
    %cst_422 = arith.constant -0.284496725 : f32
    %731 = vector.broadcast %cst_422 : f32 to vector<4x128xf32>
    %732 = arith.addf %731, %730 : vector<4x128xf32>
    %733 = arith.mulf %722, %732 : vector<4x128xf32>
    %cst_423 = arith.constant 0.254829586 : f32
    %734 = vector.broadcast %cst_423 : f32 to vector<4x128xf32>
    %735 = arith.addf %734, %733 : vector<4x128xf32>
    %736 = arith.mulf %722, %735 : vector<4x128xf32>
    %cst_424 = arith.constant 0.000000e+00 : f32
    %737 = vector.broadcast %cst_424 : f32 to vector<4x128xf32>
    %738 = arith.subf %737, %713 : vector<4x128xf32>
    %739 = arith.mulf %738, %713 : vector<4x128xf32>
    %740 = math.exp %739 : vector<4x128xf32>
    %741 = arith.mulf %736, %740 : vector<4x128xf32>
    %cst_425 = arith.constant 1.000000e+00 : f32
    %742 = vector.broadcast %cst_425 : f32 to vector<4x128xf32>
    %743 = arith.subf %742, %741 : vector<4x128xf32>
    %cst_426 = arith.constant 0.000000e+00 : f32
    %744 = vector.broadcast %cst_426 : f32 to vector<4x128xf32>
    %745 = arith.cmpf olt, %712, %744 : vector<4x128xf32>
    %cst_427 = arith.constant 0.000000e+00 : f32
    %746 = vector.broadcast %cst_427 : f32 to vector<4x128xf32>
    %747 = arith.subf %746, %743 : vector<4x128xf32>
    %748 = arith.select %745, %747, %743 : vector<4x128xi1>, vector<4x128xf32>
    %cst_428 = arith.constant 5.000000e-01 : f32
    %749 = vector.broadcast %cst_428 : f32 to vector<4x128xf32>
    %750 = arith.mulf %749, %690 : vector<4x128xf32>
    %cst_429 = arith.constant 1.000000e+00 : f32
    %751 = vector.broadcast %cst_429 : f32 to vector<4x128xf32>
    %752 = arith.addf %751, %748 : vector<4x128xf32>
    %753 = arith.mulf %750, %752 : vector<4x128xf32>
    %cst_430 = arith.constant 0.707106769 : f32
    %754 = vector.broadcast %cst_430 : f32 to vector<4x128xf32>
    %755 = arith.mulf %705, %754 : vector<4x128xf32>
    %756 = math.absf %755 : vector<4x128xf32>
    %cst_431 = arith.constant 0.327591091 : f32
    %757 = vector.broadcast %cst_431 : f32 to vector<4x128xf32>
    %758 = arith.mulf %757, %756 : vector<4x128xf32>
    %cst_432 = arith.constant 1.000000e+00 : f32
    %759 = vector.broadcast %cst_432 : f32 to vector<4x128xf32>
    %760 = arith.addf %759, %758 : vector<4x128xf32>
    %761 = tpu.reciprocal %760 {approx = true} : vector<4x128xf32> -> vector<4x128xf32>
    %762 = arith.mulf %760, %761 : vector<4x128xf32>
    %cst_433 = arith.constant 2.000000e+00 : f32
    %763 = vector.broadcast %cst_433 : f32 to vector<4x128xf32>
    %764 = arith.subf %763, %762 : vector<4x128xf32>
    %765 = arith.mulf %761, %764 : vector<4x128xf32>
    %cst_434 = arith.constant 1.06140542 : f32
    %766 = vector.broadcast %cst_434 : f32 to vector<4x128xf32>
    %767 = arith.mulf %765, %766 : vector<4x128xf32>
    %cst_435 = arith.constant -1.45315206 : f32
    %768 = vector.broadcast %cst_435 : f32 to vector<4x128xf32>
    %769 = arith.addf %768, %767 : vector<4x128xf32>
    %770 = arith.mulf %765, %769 : vector<4x128xf32>
    %cst_436 = arith.constant 1.42141378 : f32
    %771 = vector.broadcast %cst_436 : f32 to vector<4x128xf32>
    %772 = arith.addf %771, %770 : vector<4x128xf32>
    %773 = arith.mulf %765, %772 : vector<4x128xf32>
    %cst_437 = arith.constant -0.284496725 : f32
    %774 = vector.broadcast %cst_437 : f32 to vector<4x128xf32>
    %775 = arith.addf %774, %773 : vector<4x128xf32>
    %776 = arith.mulf %765, %775 : vector<4x128xf32>
    %cst_438 = arith.constant 0.254829586 : f32
    %777 = vector.broadcast %cst_438 : f32 to vector<4x128xf32>
    %778 = arith.addf %777, %776 : vector<4x128xf32>
    %779 = arith.mulf %765, %778 : vector<4x128xf32>
    %cst_439 = arith.constant 0.000000e+00 : f32
    %780 = vector.broadcast %cst_439 : f32 to vector<4x128xf32>
    %781 = arith.subf %780, %756 : vector<4x128xf32>
    %782 = arith.mulf %781, %756 : vector<4x128xf32>
    %783 = math.exp %782 : vector<4x128xf32>
    %784 = arith.mulf %779, %783 : vector<4x128xf32>
    %cst_440 = arith.constant 1.000000e+00 : f32
    %785 = vector.broadcast %cst_440 : f32 to vector<4x128xf32>
    %786 = arith.subf %785, %784 : vector<4x128xf32>
    %cst_441 = arith.constant 0.000000e+00 : f32
    %787 = vector.broadcast %cst_441 : f32 to vector<4x128xf32>
    %788 = arith.cmpf olt, %755, %787 : vector<4x128xf32>
    %cst_442 = arith.constant 0.000000e+00 : f32
    %789 = vector.broadcast %cst_442 : f32 to vector<4x128xf32>
    %790 = arith.subf %789, %786 : vector<4x128xf32>
    %791 = arith.select %788, %790, %786 : vector<4x128xi1>, vector<4x128xf32>
    %cst_443 = arith.constant 5.000000e-01 : f32
    %792 = vector.broadcast %cst_443 : f32 to vector<4x128xf32>
    %793 = arith.mulf %792, %705 : vector<4x128xf32>
    %cst_444 = arith.constant 1.000000e+00 : f32
    %794 = vector.broadcast %cst_444 : f32 to vector<4x128xf32>
    %795 = arith.addf %794, %791 : vector<4x128xf32>
    %796 = arith.mulf %793, %795 : vector<4x128xf32>
    %cst_445 = arith.constant 0.000000e+00 : f32
    %797 = vector.shape_cast %695 : vector<1x128xi1> to vector<1x128xi1>
    %798 = vector.broadcast %797 : vector<1x128xi1> to vector<4x128xi1>
    %799 = vector.broadcast %cst_445 : f32 to vector<4x128xf32>
    %800 = arith.select %798, %753, %799 : vector<4x128xi1>, vector<4x128xf32>
    %cst_446 = arith.constant dense<0.000000e+00> : vector<4xf32>
    %801 = vector.multi_reduction <add>, %800, %cst_446 [1] : vector<4x128xf32> to vector<4xf32>
    %802 = vector.shape_cast %801 : vector<4xf32> to vector<4x1xf32>
    %803 = arith.mulf %800, %800 : vector<4x128xf32>
    %cst_447 = arith.constant dense<0.000000e+00> : vector<4xf32>
    %804 = vector.multi_reduction <add>, %803, %cst_447 [1] : vector<4x128xf32> to vector<4xf32>
    %805 = vector.shape_cast %804 : vector<4xf32> to vector<4x1xf32>
    %cst_448 = arith.constant 0.000000e+00 : f32
    %806 = vector.shape_cast %710 : vector<1x128xi1> to vector<1x128xi1>
    %807 = vector.broadcast %806 : vector<1x128xi1> to vector<4x128xi1>
    %808 = vector.broadcast %cst_448 : f32 to vector<4x128xf32>
    %809 = arith.select %807, %796, %808 : vector<4x128xi1>, vector<4x128xf32>
    %cst_449 = arith.constant dense<0.000000e+00> : vector<4xf32>
    %810 = vector.multi_reduction <add>, %809, %cst_449 [1] : vector<4x128xf32> to vector<4xf32>
    %811 = vector.shape_cast %810 : vector<4xf32> to vector<4x1xf32>
    %812 = arith.mulf %809, %809 : vector<4x128xf32>
    %cst_450 = arith.constant dense<0.000000e+00> : vector<4xf32>
    %813 = vector.multi_reduction <add>, %812, %cst_450 [1] : vector<4x128xf32> to vector<4xf32>
    %814 = vector.shape_cast %813 : vector<4xf32> to vector<4x1xf32>
    %815 = arith.addf %802, %811 : vector<4x1xf32>
    %816 = arith.addf %805, %814 : vector<4x1xf32>
    %cst_451 = arith.constant 0.0172413792 : f32
    %817 = vector.broadcast %cst_451 : f32 to vector<4x1xf32>
    %818 = arith.mulf %815, %817 : vector<4x1xf32>
    %cst_452 = arith.constant 0.0172413792 : f32
    %819 = vector.broadcast %cst_452 : f32 to vector<4x1xf32>
    %820 = arith.mulf %816, %819 : vector<4x1xf32>
    %821 = arith.mulf %818, %818 : vector<4x1xf32>
    %822 = arith.subf %820, %821 : vector<4x1xf32>
    %cst_453 = arith.constant 0.000000e+00 : f32
    %823 = vector.broadcast %cst_453 : f32 to vector<4x1xf32>
    %824 = arith.maximumf %822, %823 : vector<4x1xf32>
    %cst_454 = arith.constant 9.99999974E-6 : f32
    %825 = vector.broadcast %cst_454 : f32 to vector<4x1xf32>
    %826 = arith.addf %824, %825 : vector<4x1xf32>
    %827 = math.rsqrt %826 : vector<4x1xf32>
    %c0_455 = arith.constant 0 : index
    %c0_456 = arith.constant 0 : index
    %828 = vector.load %arg31[%c0_455, %c0_456] : memref<4x1xf32, #tpu.memory_space<vmem>>, vector<4x1xf32>
    %829 = arith.mulf %827, %828 : vector<4x1xf32>
    %c0_457 = arith.constant 0 : index
    %c0_458 = arith.constant 0 : index
    %830 = vector.load %arg32[%c0_457, %c0_458] : memref<4x1xf32, #tpu.memory_space<vmem>>, vector<4x1xf32>
    %831 = arith.mulf %818, %829 : vector<4x1xf32>
    %832 = arith.subf %830, %831 : vector<4x1xf32>
    %833 = vector.broadcast %829 : vector<4x1xf32> to vector<4x128xf32>
    %834 = arith.mulf %753, %833 : vector<4x128xf32>
    %835 = vector.broadcast %832 : vector<4x1xf32> to vector<4x128xf32>
    %836 = arith.addf %834, %835 : vector<4x128xf32>
    %cst_459 = arith.constant 0.000000e+00 : f32
    %837 = vector.shape_cast %695 : vector<1x128xi1> to vector<1x128xi1>
    %838 = vector.broadcast %837 : vector<1x128xi1> to vector<4x128xi1>
    %839 = vector.broadcast %cst_459 : f32 to vector<4x128xf32>
    %840 = arith.select %838, %836, %839 : vector<4x128xi1>, vector<4x128xf32>
    %c0_460 = arith.constant 0 : index
    %c0_461 = arith.constant 0 : index
    %841 = vector.load %arg48[%c0_460, %c0_461] : memref<4x133xf32, #tpu.memory_space<vmem>>, vector<4x128xf32>
    tpu.vector_store %arg48[%c0_460, %c0_461], %840 {strides = array<i32>} : memref<4x133xf32, #tpu.memory_space<vmem>>, vector<4x128xf32>,
    %842 = vector.broadcast %829 : vector<4x1xf32> to vector<4x128xf32>
    %843 = arith.mulf %796, %842 : vector<4x128xf32>
    %844 = vector.broadcast %832 : vector<4x1xf32> to vector<4x128xf32>
    %845 = arith.addf %843, %844 : vector<4x128xf32>
    %cst_462 = arith.constant 0.000000e+00 : f32
    %846 = vector.shape_cast %710 : vector<1x128xi1> to vector<1x128xi1>
    %847 = vector.broadcast %846 : vector<1x128xi1> to vector<4x128xi1>
    %848 = vector.broadcast %cst_462 : f32 to vector<4x128xf32>
    %849 = arith.select %847, %845, %848 : vector<4x128xi1>, vector<4x128xf32>
    %c0_463 = arith.constant 0 : index
    %c0_464 = arith.constant 0 : index
    %850 = vector.load %arg49[%c0_463, %c0_464] : memref<4x133xf32, #tpu.memory_space<vmem>>, vector<4x128xf32>
    tpu.vector_store %arg49[%c0_463, %c0_464], %849 {strides = array<i32>} : memref<4x133xf32, #tpu.memory_space<vmem>>, vector<4x128xf32>,
    %c0_465 = arith.constant 0 : index
    %c1_466 = arith.constant 1 : index
    %851 = vector.load %arg48[%c0_465, %c1_466] : memref<4x133xf32, #tpu.memory_space<vmem>>, vector<4x128xf32>
    %c0_467 = arith.constant 0 : index
    %c0_468 = arith.constant 0 : index
    %852 = vector.load %arg50[%c0_467, %c0_468] : memref<160x128xf32, #tpu.memory_space<vmem>>, vector<4x128xf32>
    tpu.vector_store %arg50[%c0_467, %c0_468], %851 {strides = array<i32>} : memref<160x128xf32, #tpu.memory_space<vmem>>, vector<4x128xf32>,
    %c0_469 = arith.constant 0 : index
    %c0_470 = arith.constant 0 : index
    %853 = vector.load %arg49[%c0_469, %c0_470] : memref<4x133xf32, #tpu.memory_space<vmem>>, vector<4x128xf32>
    %c4_471 = arith.constant 4 : index
    %c0_472 = arith.constant 0 : index
    %854 = vector.load %arg50[%c4_471, %c0_472] : memref<160x128xf32, #tpu.memory_space<vmem>>, vector<4x128xf32>
    tpu.vector_store %arg50[%c4_471, %c0_472], %853 {strides = array<i32>} : memref<160x128xf32, #tpu.memory_space<vmem>>, vector<4x128xf32>,
    %c0_473 = arith.constant 0 : index
    %c0_474 = arith.constant 0 : index
    %855 = vector.load %arg48[%c0_473, %c0_474] : memref<4x133xf32, #tpu.memory_space<vmem>>, vector<4x128xf32>
    %c8_475 = arith.constant 8 : index
    %c0_476 = arith.constant 0 : index
    %856 = vector.load %arg50[%c8_475, %c0_476] : memref<160x128xf32, #tpu.memory_space<vmem>>, vector<4x128xf32>
    tpu.vector_store %arg50[%c8_475, %c0_476], %855 {strides = array<i32>} : memref<160x128xf32, #tpu.memory_space<vmem>>, vector<4x128xf32>,
    %c0_477 = arith.constant 0 : index
    %c0_478 = arith.constant 0 : index
    %857 = vector.load %arg33[%c0_477, %c0_478] : memref<4x12xf32, #tpu.memory_space<vmem>>, vector<4x12xf32>
    %c0_479 = arith.constant 0 : index
    %c0_480 = arith.constant 0 : index
    %858 = vector.load %arg50[%c0_479, %c0_480] : memref<160x128xf32, #tpu.memory_space<vmem>>, vector<12x128xf32>
    %cst_481 = arith.constant dense<0.000000e+00> : vector<4x128xf32>
    %859 = tpu.matmul %857, %858, %cst_481 {dimension_numbers = #tpu.dot_dimension_numbers<[1], [0], [0], [1], [0, 0, 1, 1], [], []>} : vector<4x12xf32>, vector<12x128xf32>, vector<4x128xf32> -> vector<4x128xf32>
    %c0_482 = arith.constant 0 : index
    %c0_483 = arith.constant 0 : index
    %860 = vector.load %arg35[%c0_482, %c0_483] : memref<4x1xf32, #tpu.memory_space<vmem>>, vector<4x1xf32>
    %861 = vector.broadcast %860 : vector<4x1xf32> to vector<4x128xf32>
    %862 = arith.addf %859, %861 : vector<4x128xf32>
    %863 = arith.negf %862 : vector<4x128xf32>
    %864 = math.exp %863 : vector<4x128xf32>
    %cst_484 = arith.constant 1.000000e+00 : f32
    %865 = vector.broadcast %cst_484 : f32 to vector<4x128xf32>
    %866 = arith.addf %865, %864 : vector<4x128xf32>
    %867 = arith.divf %865, %866 : vector<4x128xf32>
    %c0_485 = arith.constant 0 : index
    %c0_486 = arith.constant 0 : index
    %868 = vector.load %arg37[%c0_485, %c0_486] : memref<4x128xf32, #tpu.memory_space<vmem>>, vector<4x128xf32>
    tpu.vector_store %arg37[%c0_485, %c0_486], %867 {strides = array<i32>} : memref<4x128xf32, #tpu.memory_space<vmem>>, vector<4x128xf32>,
    %c0_487 = arith.constant 0 : index
    %c1_488 = arith.constant 1 : index
    %869 = vector.load %arg48[%c0_487, %c1_488] : memref<4x133xf32, #tpu.memory_space<vmem>>, vector<4x128xf32>
    %c0_489 = arith.constant 0 : index
    %c0_490 = arith.constant 0 : index
    %870 = vector.load %arg50[%c0_489, %c0_490] : memref<160x128xf32, #tpu.memory_space<vmem>>, vector<4x128xf32>
    tpu.vector_store %arg50[%c0_489, %c0_490], %869 {strides = array<i32>} : memref<160x128xf32, #tpu.memory_space<vmem>>, vector<4x128xf32>,
    %c0_491 = arith.constant 0 : index
    %c0_492 = arith.constant 0 : index
    %871 = vector.load %arg49[%c0_491, %c0_492] : memref<4x133xf32, #tpu.memory_space<vmem>>, vector<4x128xf32>
    %c4_493 = arith.constant 4 : index
    %c0_494 = arith.constant 0 : index
    %872 = vector.load %arg50[%c4_493, %c0_494] : memref<160x128xf32, #tpu.memory_space<vmem>>, vector<4x128xf32>
    tpu.vector_store %arg50[%c4_493, %c0_494], %871 {strides = array<i32>} : memref<160x128xf32, #tpu.memory_space<vmem>>, vector<4x128xf32>,
    %c0_495 = arith.constant 0 : index
    %c0_496 = arith.constant 0 : index
    %873 = vector.load %arg34[%c0_495, %c0_496] : memref<4x8xf32, #tpu.memory_space<vmem>>, vector<4x8xf32>
    %c0_497 = arith.constant 0 : index
    %c0_498 = arith.constant 0 : index
    %874 = vector.load %arg50[%c0_497, %c0_498] : memref<160x128xf32, #tpu.memory_space<vmem>>, vector<8x128xf32>
    %cst_499 = arith.constant dense<0.000000e+00> : vector<4x128xf32>
    %875 = tpu.matmul %873, %874, %cst_499 {dimension_numbers = #tpu.dot_dimension_numbers<[1], [0], [0], [1], [0, 0, 1, 1], [], []>} : vector<4x8xf32>, vector<8x128xf32>, vector<4x128xf32> -> vector<4x128xf32>
    %c0_500 = arith.constant 0 : index
    %c0_501 = arith.constant 0 : index
    %876 = vector.load %arg35[%c0_500, %c0_501] : memref<4x1xf32, #tpu.memory_space<vmem>>, vector<4x1xf32>
    %877 = vector.broadcast %876 : vector<4x1xf32> to vector<4x128xf32>
    %878 = arith.addf %875, %877 : vector<4x128xf32>
    %879 = arith.negf %878 : vector<4x128xf32>
    %880 = math.exp %879 : vector<4x128xf32>
    %cst_502 = arith.constant 1.000000e+00 : f32
    %881 = vector.broadcast %cst_502 : f32 to vector<4x128xf32>
    %882 = arith.addf %881, %880 : vector<4x128xf32>
    %883 = arith.divf %881, %882 : vector<4x128xf32>
    %c0_503 = arith.constant 0 : index
    %c0_504 = arith.constant 0 : index
    %884 = vector.load %arg38[%c0_503, %c0_504] : memref<4x128xf32, #tpu.memory_space<vmem>>, vector<4x128xf32>
    tpu.vector_store %arg38[%c0_503, %c0_504], %883 {strides = array<i32>} : memref<4x128xf32, #tpu.memory_space<vmem>>, vector<4x128xf32>,
    %c0_505 = arith.constant 0 : index
    %c1_506 = arith.constant 1 : index
    %885 = vector.load %arg49[%c0_505, %c1_506] : memref<4x133xf32, #tpu.memory_space<vmem>>, vector<4x128xf32>
    %c0_507 = arith.constant 0 : index
    %c0_508 = arith.constant 0 : index
    %886 = vector.load %arg50[%c0_507, %c0_508] : memref<160x128xf32, #tpu.memory_space<vmem>>, vector<4x128xf32>
    tpu.vector_store %arg50[%c0_507, %c0_508], %885 {strides = array<i32>} : memref<160x128xf32, #tpu.memory_space<vmem>>, vector<4x128xf32>,
    %c0_509 = arith.constant 0 : index
    %c1_510 = arith.constant 1 : index
    %887 = vector.load %arg48[%c0_509, %c1_510] : memref<4x133xf32, #tpu.memory_space<vmem>>, vector<4x128xf32>
    %c4_511 = arith.constant 4 : index
    %c0_512 = arith.constant 0 : index
    %888 = vector.load %arg50[%c4_511, %c0_512] : memref<160x128xf32, #tpu.memory_space<vmem>>, vector<4x128xf32>
    tpu.vector_store %arg50[%c4_511, %c0_512], %887 {strides = array<i32>} : memref<160x128xf32, #tpu.memory_space<vmem>>, vector<4x128xf32>,
    %c0_513 = arith.constant 0 : index
    %c0_514 = arith.constant 0 : index
    %889 = vector.load %arg49[%c0_513, %c0_514] : memref<4x133xf32, #tpu.memory_space<vmem>>, vector<4x128xf32>
    %c8_515 = arith.constant 8 : index
    %c0_516 = arith.constant 0 : index
    %890 = vector.load %arg50[%c8_515, %c0_516] : memref<160x128xf32, #tpu.memory_space<vmem>>, vector<4x128xf32>
    tpu.vector_store %arg50[%c8_515, %c0_516], %889 {strides = array<i32>} : memref<160x128xf32, #tpu.memory_space<vmem>>, vector<4x128xf32>,
    %c0_517 = arith.constant 0 : index
    %c0_518 = arith.constant 0 : index
    %891 = vector.load %arg33[%c0_517, %c0_518] : memref<4x12xf32, #tpu.memory_space<vmem>>, vector<4x12xf32>
    %c0_519 = arith.constant 0 : index
    %c0_520 = arith.constant 0 : index
    %892 = vector.load %arg50[%c0_519, %c0_520] : memref<160x128xf32, #tpu.memory_space<vmem>>, vector<12x128xf32>
    %cst_521 = arith.constant dense<0.000000e+00> : vector<4x128xf32>
    %893 = tpu.matmul %891, %892, %cst_521 {dimension_numbers = #tpu.dot_dimension_numbers<[1], [0], [0], [1], [0, 0, 1, 1], [], []>} : vector<4x12xf32>, vector<12x128xf32>, vector<4x128xf32> -> vector<4x128xf32>
    %c0_522 = arith.constant 0 : index
    %c0_523 = arith.constant 0 : index
    %894 = vector.load %arg35[%c0_522, %c0_523] : memref<4x1xf32, #tpu.memory_space<vmem>>, vector<4x1xf32>
    %895 = vector.broadcast %894 : vector<4x1xf32> to vector<4x128xf32>
    %896 = arith.addf %893, %895 : vector<4x128xf32>
    %897 = arith.negf %896 : vector<4x128xf32>
    %898 = math.exp %897 : vector<4x128xf32>
    %cst_524 = arith.constant 1.000000e+00 : f32
    %899 = vector.broadcast %cst_524 : f32 to vector<4x128xf32>
    %900 = arith.addf %899, %898 : vector<4x128xf32>
    %901 = arith.divf %899, %900 : vector<4x128xf32>
    %c0_525 = arith.constant 0 : index
    %c0_526 = arith.constant 0 : index
    %902 = vector.load %arg39[%c0_525, %c0_526] : memref<4x128xf32, #tpu.memory_space<vmem>>, vector<4x128xf32>
    tpu.vector_store %arg39[%c0_525, %c0_526], %901 {strides = array<i32>} : memref<4x128xf32, #tpu.memory_space<vmem>>, vector<4x128xf32>,
    %c0_527 = arith.constant 0 : index
    %c1_528 = arith.constant 1 : index
    %903 = vector.load %arg49[%c0_527, %c1_528] : memref<4x133xf32, #tpu.memory_space<vmem>>, vector<4x128xf32>
    %c0_529 = arith.constant 0 : index
    %c0_530 = arith.constant 0 : index
    %904 = vector.load %arg50[%c0_529, %c0_530] : memref<160x128xf32, #tpu.memory_space<vmem>>, vector<4x128xf32>
    tpu.vector_store %arg50[%c0_529, %c0_530], %903 {strides = array<i32>} : memref<160x128xf32, #tpu.memory_space<vmem>>, vector<4x128xf32>,
    %c0_531 = arith.constant 0 : index
    %c1_532 = arith.constant 1 : index
    %905 = vector.load %arg48[%c0_531, %c1_532] : memref<4x133xf32, #tpu.memory_space<vmem>>, vector<4x128xf32>
    %c4_533 = arith.constant 4 : index
    %c0_534 = arith.constant 0 : index
    %906 = vector.load %arg50[%c4_533, %c0_534] : memref<160x128xf32, #tpu.memory_space<vmem>>, vector<4x128xf32>
    tpu.vector_store %arg50[%c4_533, %c0_534], %905 {strides = array<i32>} : memref<160x128xf32, #tpu.memory_space<vmem>>, vector<4x128xf32>,
    %c0_535 = arith.constant 0 : index
    %c0_536 = arith.constant 0 : index
    %907 = vector.load %arg34[%c0_535, %c0_536] : memref<4x8xf32, #tpu.memory_space<vmem>>, vector<4x8xf32>
    %c0_537 = arith.constant 0 : index
    %c0_538 = arith.constant 0 : index
    %908 = vector.load %arg50[%c0_537, %c0_538] : memref<160x128xf32, #tpu.memory_space<vmem>>, vector<8x128xf32>
    %cst_539 = arith.constant dense<0.000000e+00> : vector<4x128xf32>
    %909 = tpu.matmul %907, %908, %cst_539 {dimension_numbers = #tpu.dot_dimension_numbers<[1], [0], [0], [1], [0, 0, 1, 1], [], []>} : vector<4x8xf32>, vector<8x128xf32>, vector<4x128xf32> -> vector<4x128xf32>
    %c0_540 = arith.constant 0 : index
    %c0_541 = arith.constant 0 : index
    %910 = vector.load %arg35[%c0_540, %c0_541] : memref<4x1xf32, #tpu.memory_space<vmem>>, vector<4x1xf32>
    %911 = vector.broadcast %910 : vector<4x1xf32> to vector<4x128xf32>
    %912 = arith.addf %909, %911 : vector<4x128xf32>
    %913 = arith.negf %912 : vector<4x128xf32>
    %914 = math.exp %913 : vector<4x128xf32>
    %cst_542 = arith.constant 1.000000e+00 : f32
    %915 = vector.broadcast %cst_542 : f32 to vector<4x128xf32>
    %916 = arith.addf %915, %914 : vector<4x128xf32>
    %917 = arith.divf %915, %916 : vector<4x128xf32>
    %c0_543 = arith.constant 0 : index
    %c0_544 = arith.constant 0 : index
    %918 = vector.load %arg40[%c0_543, %c0_544] : memref<4x128xf32, #tpu.memory_space<vmem>>, vector<4x128xf32>
    tpu.vector_store %arg40[%c0_543, %c0_544], %917 {strides = array<i32>} : memref<4x128xf32, #tpu.memory_space<vmem>>, vector<4x128xf32>,
    return
  }
}

</mosaic_0001>

<llo_original>
// kernel: cae4_bn_forward.1
$region0: #{cae4_bn_forward.1}
  #allocation0 [shape = 'u32[]', space=smem, size = 0x4, offset = 0x4, fixed_abs, tag = 'smem constant byte address 0x4 - core index']
  #allocation1 [shape = 'u32[72,128]{1,0:T(1,128)}', space=vmem, size = 0x9000, scoped, tag = 'internal scratch']
  #allocation2 [shape = 'f32[4,133]{1,0:T(4,128)}', space=vmem, size = 0x1000, scoped, tag = 'scratch operand']
  #allocation3 [shape = 'f32[4,133]{1,0:T(4,128)}', space=vmem, size = 0x1000, scoped, tag = 'scratch operand']
  #allocation4 [shape = 'f32[8,133]{1,0:T(8,128)}', space=vmem, size = 0x2000, scoped, tag = 'scratch operand']
  #allocation5 [shape = 'f32[16,133]{1,0:T(8,128)}', space=vmem, size = 0x4000, scoped, tag = 'scratch operand']
  #allocation6 [shape = 'f32[32,133]{1,0:T(8,128)}', space=vmem, size = 0x8000, scoped, tag = 'scratch operand']
  #allocation7 [shape = 'f32[16,133]{1,0:T(8,128)}', space=vmem, size = 0x4000, scoped, tag = 'scratch operand']
  #allocation8 [shape = 'f32[8,133]{1,0:T(8,128)}', space=vmem, size = 0x2000, scoped, tag = 'scratch operand']
  #allocation9 [shape = 'f32[4,133]{1,0:T(4,128)}', space=vmem, size = 0x1000, scoped, tag = 'scratch operand']
  #allocation10 [shape = 'f32[4,133]{1,0:T(4,128)}', space=vmem, size = 0x1000, scoped, tag = 'scratch operand']
  #allocation11 [shape = 'f32[160,128]{1,0:T(8,128)}', space=vmem, size = 0x14000, scoped, tag = 'scratch operand']
  %s0 = inlined_call_operand.smem [shape: u32[41], index: -1, kind: input, shape index: {}]
  %s1 = sld [smem:[%s0]]
  %s2 = scalar_lea.smem %s0, 1
  %s3 = sld [smem:[%s2]]
  %s4 = scalar_lea.smem %s0, 2
  %s5 = sld [smem:[%s4]]
  %s6 = scalar_lea.smem %s0, 3
  %s7 = sld [smem:[%s6]]
  %s8 = scalar_lea.smem %s0, 4
  %s9 = sld [smem:[%s8]]
  %s10 = scalar_lea.smem %s0, 5
  %s11 = sld [smem:[%s10]]
  %s12 = scalar_lea.smem %s0, 6
  %s13 = sld [smem:[%s12]]
  %s14 = scalar_lea.smem %s0, 7
  %s15 = sld [smem:[%s14]]
  %s16 = scalar_lea.smem %s0, 8
  %s17 = sld [smem:[%s16]]
  %s18 = scalar_lea.smem %s0, 9
  %s19 = sld [smem:[%s18]]
  %s20 = scalar_lea.smem %s0, 10
  %s21 = sld [smem:[%s20]]
  %s22 = scalar_lea.smem %s0, 11
  %s23 = sld [smem:[%s22]]
  %s24 = scalar_lea.smem %s0, 12
  %s25 = sld [smem:[%s24]]
  %s26 = scalar_lea.smem %s0, 13
  %s27 = sld [smem:[%s26]]
  %s28 = scalar_lea.smem %s0, 14
  %s29 = sld [smem:[%s28]]
  %s30 = scalar_lea.smem %s0, 15
  %s31 = sld [smem:[%s30]]
  %s32 = scalar_lea.smem %s0, 16
  %s33 = sld [smem:[%s32]]
  %s34 = scalar_lea.smem %s0, 17
  %s35 = sld [smem:[%s34]]
  %s36 = scalar_lea.smem %s0, 18
  %s37 = sld [smem:[%s36]]
  %s38 = scalar_lea.smem %s0, 19
  %s39 = sld [smem:[%s38]]
  %s40 = scalar_lea.smem %s0, 20
  %s41 = sld [smem:[%s40]]
  %s42 = scalar_lea.smem %s0, 21
  %s43 = sld [smem:[%s42]]
  %s44 = scalar_lea.smem %s0, 22
  %s45 = sld [smem:[%s44]]
  %s46 = scalar_lea.smem %s0, 23
  %s47 = sld [smem:[%s46]]
  %s48 = scalar_lea.smem %s0, 24
  %s49 = sld [smem:[%s48]]
  %s50 = scalar_lea.smem %s0, 25
  %s51 = sld [smem:[%s50]]
  %s52 = scalar_lea.smem %s0, 26
  %s53 = sld [smem:[%s52]]
  %s54 = scalar_lea.smem %s0, 27
  %s55 = sld [smem:[%s54]]
  %s56 = scalar_lea.smem %s0, 28
  %s57 = sld [smem:[%s56]]
  %s58 = scalar_lea.smem %s0, 29
  %s59 = sld [smem:[%s58]]
  %s60 = scalar_lea.smem %s0, 30
  %s61 = sld [smem:[%s60]]
  %s62 = scalar_lea.smem %s0, 31
  %s63 = sld [smem:[%s62]]
  %s64 = scalar_lea.smem %s0, 32
  %s65 = sld [smem:[%s64]]
  %s66 = scalar_lea.smem %s0, 33
  %s67 = sld [smem:[%s66]]
  %s68 = scalar_lea.smem %s0, 34
  %s69 = sld [smem:[%s68]]
  %s70 = scalar_lea.smem %s0, 35
  %s71 = sld [smem:[%s70]]
  %s72 = scalar_lea.smem %s0, 36
  %s73 = sld [smem:[%s72]]
  %s74 = scalar_lea.smem %s0, 37
  %s75 = sld [smem:[%s74]]
  %s76 = scalar_lea.smem %s0, 38
  %s77 = sld [smem:[%s76]]
  %s78 = scalar_lea.smem %s0, 39
  %s79 = sld [smem:[%s78]]
  %s80 = scalar_lea.smem %s0, 40
  %s81 = sld [smem:[%s80]]
  %82 = xla_tuple %s73, %s75, %s77, %s79, %s81
  %s83 = sld [smem:[#allocation0]]
  $region186: #{cae4_bn_forward.1} parent=0
    _
  %s85 = ssub.s32 1, %s83
  %s86 = scalar_select 0, %s85, %s83
  // Predicated region
  $region2: #{cae4_bn_forward.1} parent=0 // pred_check
    _
  $region3: #{cae4_bn_forward.1} parent=0 // pred_check_branch
    %88 = sbr.rel (0) target = $region5
  $region4: #{cae4_bn_forward.1} parent=0 // pred_region
    _
  $region5: #{cae4_bn_forward.1} parent=0 // pred_fallthru
    _
  // Predicated region
  $region6: #{cae4_bn_forward.1} parent=0 // pred_check
    _
  $region7: #{cae4_bn_forward.1} parent=0 // pred_check_branch
    %90 = sbr.rel (0) target = $region9
  $region8: #{cae4_bn_forward.1} parent=0 // pred_region
    _
  $region9: #{cae4_bn_forward.1} parent=0 // pred_fallthru
    _
  // Predicated region
  $region10: #{cae4_bn_forward.1} parent=0 // pred_check
    _
  $region11: #{cae4_bn_forward.1} parent=0 // pred_check_branch
    %92 = sbr.rel (0) target = $region13
  $region12: #{cae4_bn_forward.1} parent=0 // pred_region
    _
  $region13: #{cae4_bn_forward.1} parent=0 // pred_fallthru
    _
  // Predicated region
  $region14: #{cae4_bn_forward.1} parent=0 // pred_check
    _
  $region15: #{cae4_bn_forward.1} parent=0 // pred_check_branch
    %94 = sbr.rel (0) target = $region17
  $region16: #{cae4_bn_forward.1} parent=0 // pred_region
    _
  $region17: #{cae4_bn_forward.1} parent=0 // pred_fallthru
    _
  // Predicated region
  $region18: #{cae4_bn_forward.1} parent=0 // pred_check
    _
  $region19: #{cae4_bn_forward.1} parent=0 // pred_check_branch
    %96 = sbr.rel (0) target = $region21
  $region20: #{cae4_bn_forward.1} parent=0 // pred_region
    _
  $region21: #{cae4_bn_forward.1} parent=0 // pred_fallthru
    _
  // Predicated region
  $region22: #{cae4_bn_forward.1} parent=0 // pred_check
    _
  $region23: #{cae4_bn_forward.1} parent=0 // pred_check_branch
    %98 = sbr.rel (0) target = $region25
  $region24: #{cae4_bn_forward.1} parent=0 // pred_region
    _
  $region25: #{cae4_bn_forward.1} parent=0 // pred_fallthru
    _
  // Predicated region
  $region26: #{cae4_bn_forward.1} parent=0 // pred_check
    _
  $region27: #{cae4_bn_forward.1} parent=0 // pred_check_branch
    %100 = sbr.rel (0) target = $region29
  $region28: #{cae4_bn_forward.1} parent=0 // pred_region
    _
  $region29: #{cae4_bn_forward.1} parent=0 // pred_fallthru
    _
  // Predicated region
  $region30: #{cae4_bn_forward.1} parent=0 // pred_check
    _
  $region31: #{cae4_bn_forward.1} parent=0 // pred_check_branch
    %102 = sbr.rel (0) target = $region33
  $region32: #{cae4_bn_forward.1} parent=0 // pred_region
    _
  $region33: #{cae4_bn_forward.1} parent=0 // pred_fallthru
    _
  // Predicated region
  $region34: #{cae4_bn_forward.1} parent=0 // pred_check
    _
  $region35: #{cae4_bn_forward.1} parent=0 // pred_check_branch
    %104 = sbr.rel (0) target = $region37
  $region36: #{cae4_bn_forward.1} parent=0 // pred_region
    _
  $region37: #{cae4_bn_forward.1} parent=0 // pred_fallthru
    _
  // Predicated region
  $region38: #{cae4_bn_forward.1} parent=0 // pred_check
    _
  $region39: #{cae4_bn_forward.1} parent=0 // pred_check_branch
    %106 = sbr.rel (0) target = $region41
  $region40: #{cae4_bn_forward.1} parent=0 // pred_region
    _
  $region41: #{cae4_bn_forward.1} parent=0 // pred_fallthru
    _
  // Predicated region
  $region42: #{cae4_bn_forward.1} parent=0 // pred_check
    _
  $region43: #{cae4_bn_forward.1} parent=0 // pred_check_branch
    %108 = sbr.rel (0) target = $region45
  $region44: #{cae4_bn_forward.1} parent=0 // pred_region
    _
  $region45: #{cae4_bn_forward.1} parent=0 // pred_fallthru
    _
  // Predicated region
  $region46: #{cae4_bn_forward.1} parent=0 // pred_check
    _
  $region47: #{cae4_bn_forward.1} parent=0 // pred_check_branch
    %110 = sbr.rel (0) target = $region49
  $region48: #{cae4_bn_forward.1} parent=0 // pred_region
    _
  $region49: #{cae4_bn_forward.1} parent=0 // pred_fallthru
    _
  // Predicated region
  $region50: #{cae4_bn_forward.1} parent=0 // pred_check
    _
  $region51: #{cae4_bn_forward.1} parent=0 // pred_check_branch
    %112 = sbr.rel (0) target = $region53
  $region52: #{cae4_bn_forward.1} parent=0 // pred_region
    _
  $region53: #{cae4_bn_forward.1} parent=0 // pred_fallthru
    _
  // Predicated region
  $region54: #{cae4_bn_forward.1} parent=0 // pred_check
    _
  $region55: #{cae4_bn_forward.1} parent=0 // pred_check_branch
    %114 = sbr.rel (0) target = $region57
  $region56: #{cae4_bn_forward.1} parent=0 // pred_region
    _
  $region57: #{cae4_bn_forward.1} parent=0 // pred_fallthru
    _
  // Predicated region
  $region58: #{cae4_bn_forward.1} parent=0 // pred_check
    _
  $region59: #{cae4_bn_forward.1} parent=0 // pred_check_branch
    %116 = sbr.rel (0) target = $region61
  $region60: #{cae4_bn_forward.1} parent=0 // pred_region
    _
  $region61: #{cae4_bn_forward.1} parent=0 // pred_fallthru
    _
  // Predicated region
  $region62: #{cae4_bn_forward.1} parent=0 // pred_check
    _
  $region63: #{cae4_bn_forward.1} parent=0 // pred_check_branch
    %118 = sbr.rel (0) target = $region65
  $region64: #{cae4_bn_forward.1} parent=0 // pred_region
    _
  $region65: #{cae4_bn_forward.1} parent=0 // pred_fallthru
    _
  // Predicated region
  $region66: #{cae4_bn_forward.1} parent=0 // pred_check
    _
  $region67: #{cae4_bn_forward.1} parent=0 // pred_check_branch
    %120 = sbr.rel (0) target = $region69
  $region68: #{cae4_bn_forward.1} parent=0 // pred_region
    _
  $region69: #{cae4_bn_forward.1} parent=0 // pred_fallthru
    _
  // Predicated region
  $region70: #{cae4_bn_forward.1} parent=0 // pred_check
    _
  $region71: #{cae4_bn_forward.1} parent=0 // pred_check_branch
    %122 = sbr.rel (0) target = $region73
  $region72: #{cae4_bn_forward.1} parent=0 // pred_region
    _
  $region73: #{cae4_bn_forward.1} parent=0 // pred_fallthru
    _
  // Predicated region
  $region74: #{cae4_bn_forward.1} parent=0 // pred_check
    _
  $region75: #{cae4_bn_forward.1} parent=0 // pred_check_branch
    %124 = sbr.rel (0) target = $region77
  $region76: #{cae4_bn_forward.1} parent=0 // pred_region
    _
  $region77: #{cae4_bn_forward.1} parent=0 // pred_fallthru
    _
  // Predicated region
  $region78: #{cae4_bn_forward.1} parent=0 // pred_check
    _
  $region79: #{cae4_bn_forward.1} parent=0 // pred_check_branch
    %126 = sbr.rel (0) target = $region81
  $region80: #{cae4_bn_forward.1} parent=0 // pred_region
    _
  $region81: #{cae4_bn_forward.1} parent=0 // pred_fallthru
    _
  // Predicated region
  $region82: #{cae4_bn_forward.1} parent=0 // pred_check
    _
  $region83: #{cae4_bn_forward.1} parent=0 // pred_check_branch
    %128 = sbr.rel (0) target = $region85
  $region84: #{cae4_bn_forward.1} parent=0 // pred_region
    _
  $region85: #{cae4_bn_forward.1} parent=0 // pred_fallthru
    _
  // Predicated region
  $region86: #{cae4_bn_forward.1} parent=0 // pred_check
    _
  $region87: #{cae4_bn_forward.1} parent=0 // pred_check_branch
    %130 = sbr.rel (0) target = $region89
  $region88: #{cae4_bn_forward.1} parent=0 // pred_region
    _
  $region89: #{cae4_bn_forward.1} parent=0 // pred_fallthru
    _
  // Predicated region
  $region90: #{cae4_bn_forward.1} parent=0 // pred_check
    _
  $region91: #{cae4_bn_forward.1} parent=0 // pred_check_branch
    %132 = sbr.rel (0) target = $region93
  $region92: #{cae4_bn_forward.1} parent=0 // pred_region
    _
  $region93: #{cae4_bn_forward.1} parent=0 // pred_fallthru
    _
  // Predicated region
  $region94: #{cae4_bn_forward.1} parent=0 // pred_check
    _
  $region95: #{cae4_bn_forward.1} parent=0 // pred_check_branch
    %134 = sbr.rel (0) target = $region97
  $region96: #{cae4_bn_forward.1} parent=0 // pred_region
    _
  $region97: #{cae4_bn_forward.1} parent=0 // pred_fallthru
    _
  // Predicated region
  $region98: #{cae4_bn_forward.1} parent=0 // pred_check
    _
  $region99: #{cae4_bn_forward.1} parent=0 // pred_check_branch
    %136 = sbr.rel (0) target = $region101
  $region100: #{cae4_bn_forward.1} parent=0 // pred_region
    _
  $region101: #{cae4_bn_forward.1} parent=0 // pred_fallthru
    _
  // Predicated region
  $region102: #{cae4_bn_forward.1} parent=0 // pred_check
    _
  $region103: #{cae4_bn_forward.1} parent=0 // pred_check_branch
    %138 = sbr.rel (0) target = $region105
  $region104: #{cae4_bn_forward.1} parent=0 // pred_region
    _
  $region105: #{cae4_bn_forward.1} parent=0 // pred_fallthru
    _
  // Predicated region
  $region106: #{cae4_bn_forward.1} parent=0 // pred_check
    _
  $region107: #{cae4_bn_forward.1} parent=0 // pred_check_branch
    %140 = sbr.rel (0) target = $region109
  $region108: #{cae4_bn_forward.1} parent=0 // pred_region
    _
  $region109: #{cae4_bn_forward.1} parent=0 // pred_fallthru
    _
  // Predicated region
  $region110: #{cae4_bn_forward.1} parent=0 // pred_check
    _
  $region111: #{cae4_bn_forward.1} parent=0 // pred_check_branch
    %142 = sbr.rel (0) target = $region113
  $region112: #{cae4_bn_forward.1} parent=0 // pred_region
    _
  $region113: #{cae4_bn_forward.1} parent=0 // pred_fallthru
    _
  // Predicated region
  $region114: #{cae4_bn_forward.1} parent=0 // pred_check
    _
  $region115: #{cae4_bn_forward.1} parent=0 // pred_check_branch
    %144 = sbr.rel (0) target = $region117
  $region116: #{cae4_bn_forward.1} parent=0 // pred_region
    _
  $region117: #{cae4_bn_forward.1} parent=0 // pred_fallthru
    _
  // Predicated region
  $region118: #{cae4_bn_forward.1} parent=0 // pred_check
    _
  $region119: #{cae4_bn_forward.1} parent=0 // pred_check_branch
    %146 = sbr.rel (0) target = $region121
  $region120: #{cae4_bn_forward.1} parent=0 // pred_region
    _
  $region121: #{cae4_bn_forward.1} parent=0 // pred_fallthru
    _
  // Predicated region
  $region122: #{cae4_bn_forward.1} parent=0 // pred_check
    _
  $region123: #{cae4_bn_forward.1} parent=0 // pred_check_branch
    %148 = sbr.rel (0) target = $region125
  $region124: #{cae4_bn_forward.1} parent=0 // pred_region
    _
  $region125: #{cae4_bn_forward.1} parent=0 // pred_fallthru
    _
  // Predicated region
  $region126: #{cae4_bn_forward.1} parent=0 // pred_check
    _
  $region127: #{cae4_bn_forward.1} parent=0 // pred_check_branch
    %150 = sbr.rel (0) target = $region129
  $region128: #{cae4_bn_forward.1} parent=0 // pred_region
    _
  $region129: #{cae4_bn_forward.1} parent=0 // pred_fallthru
    _
  // Predicated region
  $region130: #{cae4_bn_forward.1} parent=0 // pred_check
    _
  $region131: #{cae4_bn_forward.1} parent=0 // pred_check_branch
    %152 = sbr.rel (0) target = $region133
  $region132: #{cae4_bn_forward.1} parent=0 // pred_region
    _
  $region133: #{cae4_bn_forward.1} parent=0 // pred_fallthru
    _
  // Predicated region
  $region134: #{cae4_bn_forward.1} parent=0 // pred_check
    _
  $region135: #{cae4_bn_forward.1} parent=0 // pred_check_branch
    %154 = sbr.rel (0) target = $region137
  $region136: #{cae4_bn_forward.1} parent=0 // pred_region
    _
  $region137: #{cae4_bn_forward.1} parent=0 // pred_fallthru
    _
  // Predicated region
  $region138: #{cae4_bn_forward.1} parent=0 // pred_check
    _
  $region139: #{cae4_bn_forward.1} parent=0 // pred_check_branch
    %156 = sbr.rel (0) target = $region141
  $region140: #{cae4_bn_forward.1} parent=0 // pred_region
    _
  $region141: #{cae4_bn_forward.1} parent=0 // pred_fallthru
    _
  // Predicated region
  $region142: #{cae4_bn_forward.1} parent=0 // pred_check
    _
  $region143: #{cae4_bn_forward.1} parent=0 // pred_check_branch
    %158 = sbr.rel (0) target = $region145
  $region144: #{cae4_bn_forward.1} parent=0 // pred_region
    _
  $region145: #{cae4_bn_forward.1} parent=0 // pred_fallthru
    _
  %v159 = vlaneseq
  %v160 = vand.u32 %v159, 127
  %vm161 = vcmp.ge.s32.totalorder %v160, 64
  %v162 = vsub.s32 %v160, 64
  %v163 = vsel %vm161, %v162, %v160
  %v164 = vld [vmem:[%s1] sm:$0xf]
  %165 = vst [vmem:[#allocation11] sm:$0xf] %v164
  %v166 = vld [vmem:[%s3] sm:$0xf]
  %167 = vst [vmem:[#allocation11 + $0x4] sm:$0xf] %v166
  %v168 = vld [vmem:[%s5] sm:$0xf]
  %169 = vst [vmem:[#allocation11 + $0x8] sm:$0xf] %v168
  %v170 = vld [vmem:[%s7] sm:$0xf]
  %171 = vst [vmem:[#allocation11 + $0xc] sm:$0xf] %v170
  %v172 = vld [vmem:[%s1] sm:$0xff]
  %174 = vst [vmem:[#allocation1] ss:$2 sm:$0xff] %v172
  %v175 = vld.sshfl [vmem:[#allocation1] sm:$0xff pattern:$0x75316420]
  %v176 = vld.sshfl [vmem:[#allocation1 + $0x8] sm:$0xff pattern:$0x75316420]
  %177 = vrot.lane.b32.xlu0 %v175, 127
  %v178 = vpop.permute.xlu0 %177
  %179 = vrot.lane.b32.xlu0 %v176, 127
  %v180 = vpop.permute.xlu0 %179
  %vm181 = vcmask 1039360
  %v182 = vsel %vm181, %v178, %v180
  %184 = vst [vmem:[#allocation11 + $0x10] sm:$0xf] %v182
  %v185 = vld [vmem:[%s9] sm:$0xf]
  %v186 = vld [vmem:[#allocation11] sm:$0xff]
  %v187 = vld [vmem:[#allocation11 + $0x8] sm:$0xff]
  %v188 = vld [vmem:[#allocation11 + $0x10] sm:$0xf]
  %v189 = vld [vmem:[%s11] sm:$0xf]
  %191 = vset.pattern.permute.xlu0 0
  %192 = vperm.xlu0 %191, %v189
  %v193 = vpop.permute.xlu0 %192
  %vm195 = vcmask 162816
  %v197 = vsel %vm195, %v185, 0
  %vm199 = vcmask 1043456
  %v201 = vsel %vm199, %v188, 0
  %203 = vmatpush.msra.mxu0 0.0
  %204 = vmatpush.msra.mxu0 0.0
  %205 = vmatpush.msra.mxu0 0.0
  %206 = vmatpush.msra.mxu0 0.0
  %207 = vmatpush.msra.mxu0 0.0
  %208 = vmatpush.msra.mxu0 0.0
  %209 = vmatpush.msra.mxu0 0.0
  %210 = vmatpush.msra.mxu0 0.0
  %211 = vmatpush.msra.mxu0 0.0
  %212 = vmatpush.msra.mxu0 0.0
  %213 = vmatpush.msra.mxu0 0.0
  %214 = vmatpush.msra.mxu0 0.0
  %215 = vmatpush.msra.mxu0 0.0
  %216 = vmatpush.msra.mxu0 %v201
  %217 = vmatpush.msra.mxu0 %v187
  %218 = vmatpush.msra.mxu0 %v186
  %219 = vmatmul.f32.gmra.mxu0 %v197
  %v220 = vpop.f32.mrf.mxu0
  %v221 = vadd.f32 %v193, %v220
  %222 = vdwg.mxu0
  %vm223 = vcmp.ge.s32.totalorder %v163, 11
  %vm224 = vcmp.lt.s32.totalorder %v163, 26
  %vm225 = vmand %vm223, %vm224
  %v226 = vld [vmem:[%s5] sm:$0xf]
  %227 = vst [vmem:[#allocation11] sm:$0xf] %v226
  %v228 = vld [vmem:[%s7] sm:$0xf]
  %229 = vst [vmem:[#allocation11 + $0x4] sm:$0xf] %v228
  %v230 = vld [vmem:[%s1] sm:$0xff]
  %232 = vst [vmem:[#allocation1] ss:$2 sm:$0xff] %v230
  %v233 = vld.sshfl [vmem:[#allocation1] sm:$0xff pattern:$0x75316420]
  %v234 = vld.sshfl [vmem:[#allocation1 + $0x8] sm:$0xff pattern:$0x75316420]
  %235 = vrot.lane.b32.xlu0 %v233, 127
  %v236 = vpop.permute.xlu0 %235
  %237 = vrot.lane.b32.xlu0 %v234, 127
  %v238 = vpop.permute.xlu0 %237
  %v239 = vsel %vm181, %v236, %v238
  %241 = vst [vmem:[#allocation11 + $0x8] sm:$0xf] %v239
  %v242 = vld [vmem:[%s3] sm:$0xff]
  %244 = vst [vmem:[#allocation1] ss:$2 sm:$0xff] %v242
  %v245 = vld.sshfl [vmem:[#allocation1] sm:$0xff pattern:$0x75316420]
  %v246 = vld.sshfl [vmem:[#allocation1 + $0x8] sm:$0xff pattern:$0x75316420]
  %247 = vrot.lane.b32.xlu0 %v245, 127
  %v248 = vpop.permute.xlu0 %247
  %249 = vrot.lane.b32.xlu0 %v246, 127
  %v250 = vpop.permute.xlu0 %249
  %v251 = vsel %vm181, %v248, %v250
  %253 = vst [vmem:[#allocation11 + $0xc] sm:$0xf] %v251
  %v254 = vld [vmem:[%s5] sm:$0xff]
  %256 = vst [vmem:[#allocation1] ss:$2 sm:$0xff] %v254
  %v257 = vld.sshfl [vmem:[#allocation1] sm:$0xff pattern:$0x75316420]
  %v258 = vld.sshfl [vmem:[#allocation1 + $0x8] sm:$0xff pattern:$0x75316420]
  %259 = vrot.lane.b32.xlu0 %v257, 127
  %v260 = vpop.permute.xlu0 %259
  %261 = vrot.lane.b32.xlu0 %v258, 127
  %v262 = vpop.permute.xlu0 %261
  %v263 = vsel %vm181, %v260, %v262
  %265 = vst [vmem:[#allocation11 + $0x10] sm:$0xf] %v263
  %v266 = vld [vmem:[%s9] sm:$0xf]
  %v267 = vld [vmem:[#allocation11] sm:$0xff]
  %v268 = vld [vmem:[#allocation11 + $0x8] sm:$0xff]
  %v269 = vld [vmem:[#allocation11 + $0x10] sm:$0xf]
  %v270 = vld [vmem:[%s11] sm:$0xf]
  %272 = vset.pattern.permute.xlu0 0
  %273 = vperm.xlu0 %272, %v270
  %v274 = vpop.permute.xlu0 %273
  %v277 = vsel %vm195, %v266, 0
  %v280 = vsel %vm199, %v269, 0
  %282 = vmatpush.msra.mxu0 0.0
  %283 = vmatpush.msra.mxu0 0.0
  %284 = vmatpush.msra.mxu0 0.0
  %285 = vmatpush.msra.mxu0 0.0
  %286 = vmatpush.msra.mxu0 0.0
  %287 = vmatpush.msra.mxu0 0.0
  %288 = vmatpush.msra.mxu0 0.0
  %289 = vmatpush.msra.mxu0 0.0
  %290 = vmatpush.msra.mxu0 0.0
  %291 = vmatpush.msra.mxu0 0.0
  %292 = vmatpush.msra.mxu0 0.0
  %293 = vmatpush.msra.mxu0 0.0
  %294 = vmatpush.msra.mxu0 0.0
  %295 = vmatpush.msra.mxu0 %v280
  %296 = vmatpush.msra.mxu0 %v268
  %297 = vmatpush.msra.mxu0 %v267
  %298 = vmatmul.f32.gmra.mxu0 %v277
  %v299 = vpop.f32.mrf.mxu0
  %v300 = vadd.f32 %v274, %v299
  %301 = vdwg.mxu0
  %v302 = vmul.f32 %v221, 0.70710677
  %v303 = vand.u32 2147483647, %v302
  %v304 = vmul.f32 %v303, 0.3275911
  %v305 = vadd.f32 %v304, 1.0
  %v306 = vrcp.pop %v305
  %v307 = vmul.f32 %v305, %v306
  %v308 = vsub.f32 2.0, %v307
  %v309 = vmul.f32 %v306, %v308
  %v310 = vmul.f32 %v309, 1.0614054
  %v311 = vadd.f32 %v310, -1.4531521
  %v312 = vmul.f32 %v309, %v311
  %v313 = vadd.f32 %v312, 1.4214138
  %v314 = vmul.f32 %v309, %v313
  %v315 = vadd.f32 %v314, -0.28449672
  %v316 = vmul.f32 %v309, %v315
  %v317 = vadd.f32 %v316, 0.2548296
  %v318 = vmul.f32 %v309, %v317
  %v319 = vsub.f32 0.0, %v303
  %v320 = vmul.f32 %v319, %v303
  %v321 = vmul.f32 %v320, 1.442695
  %v322 = vpow.pop %v321
  %v323 = vmul.f32 %v318, %v322
  %v324 = vsub.f32 1.0, %v323
  %vm325 = vcmp.lt.f32.partialorder %v302, 0.0
  %v326 = vsub.f32 0.0, %v324
  %v327 = vsel %vm325, %v326, %v324
  %v328 = vmul.f32 %v221, 0.5
  %v329 = vadd.f32 %v327, 1.0
  %v330 = vmul.f32 %v328, %v329
  %v331 = vmul.f32 %v300, 0.70710677
  %v332 = vand.u32 2147483647, %v331
  %v333 = vmul.f32 %v332, 0.3275911
  %v334 = vadd.f32 %v333, 1.0
  %v335 = vrcp.pop %v334
  %v336 = vmul.f32 %v334, %v335
  %v337 = vsub.f32 2.0, %v336
  %v338 = vmul.f32 %v335, %v337
  %v339 = vmul.f32 %v338, 1.0614054
  %v340 = vadd.f32 %v339, -1.4531521
  %v341 = vmul.f32 %v338, %v340
  %v342 = vadd.f32 %v341, 1.4214138
  %v343 = vmul.f32 %v338, %v342
  %v344 = vadd.f32 %v343, -0.28449672
  %v345 = vmul.f32 %v338, %v344
  %v346 = vadd.f32 %v345, 0.2548296
  %v347 = vmul.f32 %v338, %v346
  %v348 = vsub.f32 0.0, %v332
  %v349 = vmul.f32 %v348, %v332
  %v350 = vmul.f32 %v349, 1.442695
  %v351 = vpow.pop %v350
  %v352 = vmul.f32 %v347, %v351
  %v353 = vsub.f32 1.0, %v352
  %vm354 = vcmp.lt.f32.partialorder %v331, 0.0
  %v355 = vsub.f32 0.0, %v353
  %v356 = vsel %vm354, %v355, %v353
  %v357 = vmul.f32 %v300, 0.5
  %v358 = vadd.f32 %v356, 1.0
  %v359 = vmul.f32 %v357, %v358
  %v360 = vsel %vm225, 1, 0
  %vm361 = vcmp.eq.s32.totalorder %v360, 1
  %v362 = vsel %vm361, %v330, 0.0
  %v363 = vsel %vm199, %v362, 0.0
  %364 = vadd.xlane.f32.xlu0 %v363
  %v365 = vpop.xlane.xlu0 %364
  %v366 = vmul.f32 %v362, %v362
  %v367 = vsel %vm199, %v366, 0.0
  %368 = vadd.xlane.f32.xlu0 %v367
  %v369 = vpop.xlane.xlu0 %368
  %v370 = vsel %vm361, %v359, 0.0
  %v371 = vsel %vm199, %v370, 0.0
  %372 = vadd.xlane.f32.xlu0 %v371
  %v373 = vpop.xlane.xlu0 %372
  %v374 = vmul.f32 %v370, %v370
  %v375 = vsel %vm199, %v374, 0.0
  %376 = vadd.xlane.f32.xlu0 %v375
  %v377 = vpop.xlane.xlu0 %376
  %v378 = vadd.f32 %v365, %v373
  %v379 = vadd.f32 %v369, %v377
  %v380 = vmul.f32 %v378, 0.016666668
  %v381 = vmul.f32 %v379, 0.016666668
  %v382 = vmul.f32 %v380, %v380
  %v383 = vsub.f32 %v381, %v382
  %v384 = vmax.f32 %v383, 0.0
  %v385 = vadd.f32 %v384, 1e-05
  %v386 = vrsqrt.pop %v385
  %v387 = vmul.f32 %v386, %v385
  %v388 = vmul.f32 %v387, %v386
  %v389 = vmul.f32 0.5, %v388
  %v390 = vsub.f32 1.5, %v389
  %v391 = vmul.f32 %v386, %v390
  %vm392 = vweird.f32 %v385
  %vm393 = vweird.f32 %v386
  %vm394 = vmor %vm392, %vm393
  %v395 = vsel %vm394, %v386, %v391
  %v396 = vld [vmem:[%s13] sm:$0xf]
  %v397 = vmul.f32 %v395, %v396
  %v398 = vld [vmem:[%s15] sm:$0xf]
  %v399 = vmul.f32 %v380, %v397
  %v400 = vsub.f32 %v398, %v399
  %402 = vset.pattern.permute.xlu0 0
  %403 = vperm.xlu0 %402, %v397
  %v404 = vpop.permute.xlu0 %403
  %v406 = vmul.f32 %v330, %v404
  %408 = vset.pattern.permute.xlu0 0
  %409 = vperm.xlu0 %408, %v400
  %v410 = vpop.permute.xlu0 %409
  %v412 = vadd.f32 %v406, %v410
  %v413 = vsel %vm361, %v412, 0.0
  %414 = vst [vmem:[#allocation2] sm:$0xf] %v413
  %v415 = vmul.f32 %v359, %v404
  %v416 = vadd.f32 %v415, %v410
  %v417 = vsel %vm361, %v416, 0.0
  %418 = vst [vmem:[#allocation3] sm:$0xf] %v417
  %v419 = vld [vmem:[#allocation2] sm:$0xf]
  %420 = vst [vmem:[#allocation11] sm:$0xf] %v419
  %v421 = vld [vmem:[#allocation3] sm:$0xf]
  %422 = vst [vmem:[#allocation11 + $0x4] sm:$0xf] %v421
  %v423 = vld [vmem:[#allocation2] sm:$0xff]
  %425 = vst [vmem:[#allocation1] ss:$2 sm:$0xff] %v423
  %v426 = vld.sshfl [vmem:[#allocation1] sm:$0xff pattern:$0x75316420]
  %v427 = vld.sshfl [vmem:[#allocation1 + $0x8] sm:$0xff pattern:$0x75316420]
  %428 = vrot.lane.b32.xlu0 %v426, 127
  %v429 = vpop.permute.xlu0 %428
  %430 = vrot.lane.b32.xlu0 %v427, 127
  %v431 = vpop.permute.xlu0 %430
  %v432 = vsel %vm181, %v429, %v431
  %434 = vst [vmem:[#allocation11 + $0x8] sm:$0xf] %v432
  %v435 = vld [vmem:[#allocation3] sm:$0xff]
  %437 = vst [vmem:[#allocation1] ss:$2 sm:$0xff] %v435
  %v438 = vld.sshfl [vmem:[#allocation1] sm:$0xff pattern:$0x75316420]
  %v439 = vld.sshfl [vmem:[#allocation1 + $0x8] sm:$0xff pattern:$0x75316420]
  %440 = vrot.lane.b32.xlu0 %v438, 127
  %v441 = vpop.permute.xlu0 %440
  %442 = vrot.lane.b32.xlu0 %v439, 127
  %v443 = vpop.permute.xlu0 %442
  %v444 = vsel %vm181, %v441, %v443
  %446 = vst [vmem:[#allocation11 + $0xc] sm:$0xf] %v444
  %v447 = vld [vmem:[#allocation2] sm:$0xff]
  %449 = vst [vmem:[#allocation1] ss:$2 sm:$0xff] %v447
  %v450 = vld.sshfl [vmem:[#allocation1] sm:$0xff pattern:$0x75316420]
  %v451 = vld.sshfl [vmem:[#allocation1 + $0x8] sm:$0xff pattern:$0x75316420]
  %452 = vrot.lane.b32.xlu0 %v450, 126
  %v453 = vpop.permute.xlu0 %452
  %454 = vrot.lane.b32.xlu0 %v451, 126
  %v455 = vpop.permute.xlu0 %454
  %vm456 = vcmask 1031168
  %v457 = vsel %vm456, %v453, %v455
  %459 = vst [vmem:[#allocation11 + $0x10] sm:$0xf] %v457
  %v460 = vld [vmem:[%s17] sm:$0xff]
  %v461 = vld [vmem:[#allocation11] sm:$0xff]
  %v462 = vld [vmem:[#allocation11 + $0x8] sm:$0xff]
  %v463 = vld [vmem:[#allocation11 + $0x10] sm:$0xf]
  %v464 = vld [vmem:[%s19] sm:$0xff]
  %466 = vset.pattern.permute.xlu0 0
  %467 = vperm.xlu0 %466, %v464
  %v468 = vpop.permute.xlu0 %467
  %v471 = vsel %vm195, %v460, 0
  %v474 = vsel %vm199, %v463, 0
  %476 = vmatpush.msra.mxu0 0.0
  %477 = vmatpush.msra.mxu0 0.0
  %478 = vmatpush.msra.mxu0 0.0
  %479 = vmatpush.msra.mxu0 0.0
  %480 = vmatpush.msra.mxu0 0.0
  %481 = vmatpush.msra.mxu0 0.0
  %482 = vmatpush.msra.mxu0 0.0
  %483 = vmatpush.msra.mxu0 0.0
  %484 = vmatpush.msra.mxu0 0.0
  %485 = vmatpush.msra.mxu0 0.0
  %486 = vmatpush.msra.mxu0 0.0
  %487 = vmatpush.msra.mxu0 0.0
  %488 = vmatpush.msra.mxu0 0.0
  %489 = vmatpush.msra.mxu0 %v474
  %490 = vmatpush.msra.mxu0 %v462
  %491 = vmatpush.msra.mxu0 %v461
  %492 = vmatmul.f32.gmra.mxu0 %v471
  %v493 = vpop.f32.mrf.mxu0
  %v494 = vadd.f32 %v468, %v493
  %495 = vdwg.mxu0
  %vm496 = vcmp.lt.s32.totalorder %v163, 24
  %vm497 = vmand %vm223, %vm496
  %v498 = vmul.f32 %v494, 0.70710677
  %v499 = vand.u32 2147483647, %v498
  %v500 = vmul.f32 %v499, 0.3275911
  %v501 = vadd.f32 %v500, 1.0
  %v502 = vrcp.pop %v501
  %v503 = vmul.f32 %v501, %v502
  %v504 = vsub.f32 2.0, %v503
  %v505 = vmul.f32 %v502, %v504
  %v506 = vmul.f32 %v505, 1.0614054
  %v507 = vadd.f32 %v506, -1.4531521
  %v508 = vmul.f32 %v505, %v507
  %v509 = vadd.f32 %v508, 1.4214138
  %v510 = vmul.f32 %v505, %v509
  %v511 = vadd.f32 %v510, -0.28449672
  %v512 = vmul.f32 %v505, %v511
  %v513 = vadd.f32 %v512, 0.2548296
  %v514 = vmul.f32 %v505, %v513
  %v515 = vsub.f32 0.0, %v499
  %v516 = vmul.f32 %v515, %v499
  %v517 = vmul.f32 %v516, 1.442695
  %v518 = vpow.pop %v517
  %v519 = vmul.f32 %v514, %v518
  %v520 = vsub.f32 1.0, %v519
  %vm521 = vcmp.lt.f32.partialorder %v498, 0.0
  %v522 = vsub.f32 0.0, %v520
  %v523 = vsel %vm521, %v522, %v520
  %v524 = vmul.f32 %v494, 0.5
  %v525 = vadd.f32 %v523, 1.0
  %v526 = vmul.f32 %v524, %v525
  %v527 = vsel %vm497, 1, 0
  %vm528 = vcmp.eq.s32.totalorder %v527, 1
  %v529 = vsel %vm528, %v526, 0.0
  %530 = vadd.xlane.f32.xlu0 %v529
  %v531 = vpop.xlane.xlu0 %530
  %v532 = vmul.f32 %v529, %v529
  %533 = vadd.xlane.f32.xlu0 %v532
  %v534 = vpop.xlane.xlu0 %533
  %v535 = vmul.f32 %v531, 0.03846154
  %v536 = vmul.f32 %v534, 0.03846154
  %v537 = vmul.f32 %v535, %v535
  %v538 = vsub.f32 %v536, %v537
  %v539 = vmax.f32 %v538, 0.0
  %v540 = vadd.f32 %v539, 1e-05
  %v541 = vrsqrt.pop %v540
  %v542 = vmul.f32 %v541, %v540
  %v543 = vmul.f32 %v542, %v541
  %v544 = vmul.f32 0.5, %v543
  %v545 = vsub.f32 1.5, %v544
  %v546 = vmul.f32 %v541, %v545
  %vm547 = vweird.f32 %v540
  %vm548 = vweird.f32 %v541
  %vm549 = vmor %vm547, %vm548
  %v550 = vsel %vm549, %v541, %v546
  %v551 = vld [vmem:[%s21] sm:$0xff]
  %v552 = vmul.f32 %v550, %v551
  %v553 = vld [vmem:[%s23] sm:$0xff]
  %v554 = vmul.f32 %v535, %v552
  %v555 = vsub.f32 %v553, %v554
  %557 = vset.pattern.permute.xlu0 0
  %558 = vperm.xlu0 %557, %v552
  %v559 = vpop.permute.xlu0 %558
  %v561 = vmul.f32 %v526, %v559
  %563 = vset.pattern.permute.xlu0 0
  %564 = vperm.xlu0 %563, %v555
  %v565 = vpop.permute.xlu0 %564
  %v567 = vadd.f32 %v561, %v565
  %v568 = vsel %vm528, %v567, 0.0
  %569 = vst [vmem:[#allocation4] sm:$0xff] %v568
  %v570 = vld [vmem:[#allocation4] sm:$0xff]
  %571 = vst [vmem:[#allocation11] sm:$0xff] %v570
  %v572 = vld [vmem:[#allocation4] sm:$0xff]
  %v573 = vld [vmem:[#allocation4 + $0x8] sm:$0xff]
  %576 = vrot.lane.b32.xlu0 %v572, 127
  %v577 = vpop.permute.xlu0 %576
  %578 = vrot.lane.b32.xlu0 %v573, 127
  %v579 = vpop.permute.xlu0 %578
  %v580 = vsel %vm181, %v577, %v579
  %582 = vst [vmem:[#allocation11 + $0x8] sm:$0xff] %v580
  %v583 = vld [vmem:[#allocation4] sm:$0xff]
  %v584 = vld [vmem:[#allocation4 + $0x8] sm:$0xff]
  %587 = vrot.lane.b32.xlu0 %v583, 126
  %v588 = vpop.permute.xlu0 %587
  %589 = vrot.lane.b32.xlu0 %v584, 126
  %v590 = vpop.permute.xlu0 %589
  %v591 = vsel %vm456, %v588, %v590
  %593 = vst [vmem:[#allocation11 + $0x10] sm:$0xff] %v591
  %v594 = vld [vmem:[#allocation4] sm:$0xff]
  %v595 = vld [vmem:[#allocation4 + $0x8] sm:$0xff]
  %598 = vrot.lane.b32.xlu0 %v594, 125
  %v599 = vpop.permute.xlu0 %598
  %600 = vrot.lane.b32.xlu0 %v595, 125
  %v601 = vpop.permute.xlu0 %600
  %vm602 = vcmask 1022976
  %v603 = vsel %vm602, %v599, %v601
  %605 = vst [vmem:[#allocation11 + $0x18] sm:$0xff] %v603
  %v606 = vld [vmem:[#allocation4] sm:$0xff]
  %v607 = vld [vmem:[#allocation4 + $0x8] sm:$0xff]
  %610 = vrot.lane.b32.xlu0 %v606, 124
  %v611 = vpop.permute.xlu0 %610
  %612 = vrot.lane.b32.xlu0 %v607, 124
  %v613 = vpop.permute.xlu0 %612
  %vm614 = vcmask 1014784
  %v615 = vsel %vm614, %v611, %v613
  %617 = vst [vmem:[#allocation11 + $0x20] sm:$0xff] %v615
  %v618 = vld [vmem:[%s25] sm:$0xff]
  %v619 = vld [vmem:[%s25 + $0x8] sm:$0xff]
  %v620 = vld [vmem:[#allocation11] sm:$0xff]
  %v621 = vld [vmem:[#allocation11 + $0x8] sm:$0xff]
  %v622 = vld [vmem:[#allocation11 + $0x10] sm:$0xff]
  %v623 = vld [vmem:[#allocation11 + $0x18] sm:$0xff]
  %v624 = vld [vmem:[#allocation11 + $0x20] sm:$0xff]
  %v625 = vld [vmem:[%s27] sm:$0xff]
  %v626 = vld [vmem:[%s27 + $0x8] sm:$0xff]
  %628 = vset.pattern.permute.xlu0 0
  %629 = vperm.xlu0 %628, %v625
  %v630 = vpop.permute.xlu0 %629
  %633 = vset.pattern.permute.xlu0 0
  %634 = vperm.xlu0 %633, %v626
  %v635 = vpop.permute.xlu0 %634
  %vm637 = vcmask 326656
  %v639 = vsel %vm637, %v618, 0
  %v642 = vsel %vm637, %v619, 0
  %644 = vmatpush.msra.mxu0 0.0
  %645 = vmatpush.msra.mxu0 0.0
  %646 = vmatpush.msra.mxu0 0.0
  %647 = vmatpush.msra.mxu0 0.0
  %648 = vmatpush.msra.mxu0 0.0
  %649 = vmatpush.msra.mxu0 0.0
  %650 = vmatpush.msra.mxu0 0.0
  %651 = vmatpush.msra.mxu0 0.0
  %652 = vmatpush.msra.mxu0 0.0
  %653 = vmatpush.msra.mxu0 0.0
  %654 = vmatpush.msra.mxu0 0.0
  %655 = vmatpush.msra.mxu0 %v624
  %656 = vmatpush.msra.mxu0 %v623
  %657 = vmatpush.msra.mxu0 %v622
  %658 = vmatpush.msra.mxu0 %v621
  %659 = vmatpush.msra.mxu0 %v620
  %660 = vmatmul.f32.gmra.mxu0 %v639
  %v661 = vpop.f32.mrf.mxu0
  %v662 = vadd.f32 %v630, %v661
  %663 = vmatmul.f32.gmra.mxu0 %v642
  %v664 = vpop.f32.mrf.mxu0
  %v665 = vadd.f32 %v635, %v664
  %666 = vdwg.mxu0
  %vm667 = vcmp.lt.s32.totalorder %v163, 20
  %vm668 = vmand %vm223, %vm667
  %v669 = vmul.f32 %v662, 0.70710677
  %v670 = vmul.f32 %v665, 0.70710677
  %v671 = vand.u32 2147483647, %v669
  %v672 = vand.u32 2147483647, %v670
  %v673 = vmul.f32 %v671, 0.3275911
  %v674 = vmul.f32 %v672, 0.3275911
  %v675 = vadd.f32 %v673, 1.0
  %v676 = vadd.f32 %v674, 1.0
  %v677 = vrcp.pop %v675
  %v678 = vrcp.pop %v676
  %v679 = vmul.f32 %v675, %v677
  %v680 = vmul.f32 %v676, %v678
  %v681 = vsub.f32 2.0, %v679
  %v682 = vsub.f32 2.0, %v680
  %v683 = vmul.f32 %v677, %v681
  %v684 = vmul.f32 %v678, %v682
  %v685 = vmul.f32 %v683, 1.0614054
  %v686 = vmul.f32 %v684, 1.0614054
  %v687 = vadd.f32 %v685, -1.4531521
  %v688 = vadd.f32 %v686, -1.4531521
  %v689 = vmul.f32 %v683, %v687
  %v690 = vmul.f32 %v684, %v688
  %v691 = vadd.f32 %v689, 1.4214138
  %v692 = vadd.f32 %v690, 1.4214138
  %v693 = vmul.f32 %v683, %v691
  %v694 = vmul.f32 %v684, %v692
  %v695 = vadd.f32 %v693, -0.28449672
  %v696 = vadd.f32 %v694, -0.28449672
  %v697 = vmul.f32 %v683, %v695
  %v698 = vmul.f32 %v684, %v696
  %v699 = vadd.f32 %v697, 0.2548296
  %v700 = vadd.f32 %v698, 0.2548296
  %v701 = vmul.f32 %v683, %v699
  %v702 = vmul.f32 %v684, %v700
  %v703 = vsub.f32 0.0, %v671
  %v704 = vsub.f32 0.0, %v672
  %v705 = vmul.f32 %v703, %v671
  %v706 = vmul.f32 %v704, %v672
  %v707 = vmul.f32 %v705, 1.442695
  %v708 = vpow.pop %v707
  %v709 = vmul.f32 %v706, 1.442695
  %v710 = vpow.pop %v709
  %v711 = vmul.f32 %v701, %v708
  %v712 = vmul.f32 %v702, %v710
  %v713 = vsub.f32 1.0, %v711
  %v714 = vsub.f32 1.0, %v712
  %vm715 = vcmp.lt.f32.partialorder %v669, 0.0
  %vm716 = vcmp.lt.f32.partialorder %v670, 0.0
  %v717 = vsub.f32 0.0, %v713
  %v718 = vsub.f32 0.0, %v714
  %v719 = vsel %vm715, %v717, %v713
  %v720 = vsel %vm716, %v718, %v714
  %v721 = vmul.f32 %v662, 0.5
  %v722 = vmul.f32 %v665, 0.5
  %v723 = vadd.f32 %v719, 1.0
  %v724 = vadd.f32 %v720, 1.0
  %v725 = vmul.f32 %v721, %v723
  %v726 = vmul.f32 %v722, %v724
  %v727 = vsel %vm668, 1, 0
  %vm728 = vcmp.eq.s32.totalorder %v727, 1
  %v729 = vsel %vm728, %v725, 0.0
  %v730 = vsel %vm728, %v726, 0.0
  %731 = vadd.xlane.f32.xlu0 %v729
  %v732 = vpop.xlane.xlu0 %731
  %733 = vadd.xlane.f32.xlu0 %v730
  %v734 = vpop.xlane.xlu0 %733
  %v735 = vmul.f32 %v729, %v729
  %v736 = vmul.f32 %v730, %v730
  %737 = vadd.xlane.f32.xlu0 %v735
  %v738 = vpop.xlane.xlu0 %737
  %739 = vadd.xlane.f32.xlu0 %v736
  %v740 = vpop.xlane.xlu0 %739
  %v741 = vmul.f32 %v732, 0.055555556
  %v742 = vmul.f32 %v734, 0.055555556
  %v743 = vmul.f32 %v738, 0.055555556
  %v744 = vmul.f32 %v740, 0.055555556
  %v745 = vmul.f32 %v741, %v741
  %v746 = vmul.f32 %v742, %v742
  %v747 = vsub.f32 %v743, %v745
  %v748 = vsub.f32 %v744, %v746
  %v749 = vmax.f32 %v747, 0.0
  %v750 = vmax.f32 %v748, 0.0
  %v751 = vadd.f32 %v749, 1e-05
  %v752 = vadd.f32 %v750, 1e-05
  %v753 = vrsqrt.pop %v751
  %v754 = vmul.f32 %v753, %v751
  %v755 = vmul.f32 %v754, %v753
  %v756 = vmul.f32 0.5, %v755
  %v757 = vsub.f32 1.5, %v756
  %v758 = vmul.f32 %v753, %v757
  %vm759 = vweird.f32 %v751
  %vm760 = vweird.f32 %v753
  %vm761 = vmor %vm759, %vm760
  %v762 = vsel %vm761, %v753, %v758
  %v763 = vrsqrt.pop %v752
  %v764 = vmul.f32 %v763, %v752
  %v765 = vmul.f32 %v764, %v763
  %v766 = vmul.f32 0.5, %v765
  %v767 = vsub.f32 1.5, %v766
  %v768 = vmul.f32 %v763, %v767
  %vm769 = vweird.f32 %v752
  %vm770 = vweird.f32 %v763
  %vm771 = vmor %vm769, %vm770
  %v772 = vsel %vm771, %v763, %v768
  %v773 = vld [vmem:[%s29] sm:$0xff]
  %v774 = vld [vmem:[%s29 + $0x8] sm:$0xff]
  %v775 = vmul.f32 %v762, %v773
  %v776 = vmul.f32 %v772, %v774
  %v777 = vld [vmem:[%s31] sm:$0xff]
  %v778 = vld [vmem:[%s31 + $0x8] sm:$0xff]
  %v779 = vmul.f32 %v741, %v775
  %v780 = vmul.f32 %v742, %v776
  %v781 = vsub.f32 %v777, %v779
  %v782 = vsub.f32 %v778, %v780
  %784 = vset.pattern.permute.xlu0 0
  %785 = vperm.xlu0 %784, %v775
  %v786 = vpop.permute.xlu0 %785
  %789 = vset.pattern.permute.xlu0 0
  %790 = vperm.xlu0 %789, %v776
  %v791 = vpop.permute.xlu0 %790
  %v793 = vmul.f32 %v725, %v786
  %v794 = vmul.f32 %v726, %v791
  %796 = vset.pattern.permute.xlu0 0
  %797 = vperm.xlu0 %796, %v781
  %v798 = vpop.permute.xlu0 %797
  %801 = vset.pattern.permute.xlu0 0
  %802 = vperm.xlu0 %801, %v782
  %v803 = vpop.permute.xlu0 %802
  %v805 = vadd.f32 %v793, %v798
  %v806 = vadd.f32 %v794, %v803
  %v807 = vsel %vm728, %v805, 0.0
  %v808 = vsel %vm728, %v806, 0.0
  %809 = vst [vmem:[#allocation5] sm:$0xff] %v807
  %810 = vst [vmem:[#allocation5 + $0x10] sm:$0xff] %v808
  %v811 = vld [vmem:[#allocation5] sm:$0xff]
  %v812 = vld [vmem:[#allocation5 + $0x10] sm:$0xff]
  %813 = vst [vmem:[#allocation11] sm:$0xff] %v811
  %814 = vst [vmem:[#allocation11 + $0x8] sm:$0xff] %v812
  %v815 = vld [vmem:[#allocation5] sm:$0xff]
  %v816 = vld [vmem:[#allocation5 + $0x8] sm:$0xff]
  %v817 = vld [vmem:[#allocation5 + $0x10] sm:$0xff]
  %v818 = vld [vmem:[#allocation5 + $0x18] sm:$0xff]
  %823 = vrot.lane.b32.xlu0 %v815, 127
  %v824 = vpop.permute.xlu0 %823
  %825 = vrot.lane.b32.xlu0 %v816, 127
  %v826 = vpop.permute.xlu0 %825
  %827 = vrot.lane.b32.xlu0 %v817, 127
  %v828 = vpop.permute.xlu0 %827
  %829 = vrot.lane.b32.xlu0 %v818, 127
  %v830 = vpop.permute.xlu0 %829
  %v831 = vsel %vm181, %v824, %v826
  %v832 = vsel %vm181, %v828, %v830
  %835 = vst [vmem:[#allocation11 + $0x10] sm:$0xff] %v831
  %836 = vst [vmem:[#allocation11 + $0x18] sm:$0xff] %v832
  %v837 = vld [vmem:[#allocation5] sm:$0xff]
  %v838 = vld [vmem:[#allocation5 + $0x8] sm:$0xff]
  %v839 = vld [vmem:[#allocation5 + $0x10] sm:$0xff]
  %v840 = vld [vmem:[#allocation5 + $0x18] sm:$0xff]
  %845 = vrot.lane.b32.xlu0 %v837, 126
  %v846 = vpop.permute.xlu0 %845
  %847 = vrot.lane.b32.xlu0 %v838, 126
  %v848 = vpop.permute.xlu0 %847
  %849 = vrot.lane.b32.xlu0 %v839, 126
  %v850 = vpop.permute.xlu0 %849
  %851 = vrot.lane.b32.xlu0 %v840, 126
  %v852 = vpop.permute.xlu0 %851
  %v853 = vsel %vm456, %v846, %v848
  %v854 = vsel %vm456, %v850, %v852
  %857 = vst [vmem:[#allocation11 + $0x20] sm:$0xff] %v853
  %858 = vst [vmem:[#allocation11 + $0x28] sm:$0xff] %v854
  %v859 = vld [vmem:[#allocation5] sm:$0xff]
  %v860 = vld [vmem:[#allocation5 + $0x8] sm:$0xff]
  %v861 = vld [vmem:[#allocation5 + $0x10] sm:$0xff]
  %v862 = vld [vmem:[#allocation5 + $0x18] sm:$0xff]
  %867 = vrot.lane.b32.xlu0 %v859, 125
  %v868 = vpop.permute.xlu0 %867
  %869 = vrot.lane.b32.xlu0 %v860, 125
  %v870 = vpop.permute.xlu0 %869
  %871 = vrot.lane.b32.xlu0 %v861, 125
  %v872 = vpop.permute.xlu0 %871
  %873 = vrot.lane.b32.xlu0 %v862, 125
  %v874 = vpop.permute.xlu0 %873
  %v875 = vsel %vm602, %v868, %v870
  %v876 = vsel %vm602, %v872, %v874
  %879 = vst [vmem:[#allocation11 + $0x30] sm:$0xff] %v875
  %880 = vst [vmem:[#allocation11 + $0x38] sm:$0xff] %v876
  %v881 = vld [vmem:[#allocation5] sm:$0xff]
  %v882 = vld [vmem:[#allocation5 + $0x8] sm:$0xff]
  %v883 = vld [vmem:[#allocation5 + $0x10] sm:$0xff]
  %v884 = vld [vmem:[#allocation5 + $0x18] sm:$0xff]
  %889 = vrot.lane.b32.xlu0 %v881, 124
  %v890 = vpop.permute.xlu0 %889
  %891 = vrot.lane.b32.xlu0 %v882, 124
  %v892 = vpop.permute.xlu0 %891
  %893 = vrot.lane.b32.xlu0 %v883, 124
  %v894 = vpop.permute.xlu0 %893
  %895 = vrot.lane.b32.xlu0 %v884, 124
  %v896 = vpop.permute.xlu0 %895
  %v897 = vsel %vm614, %v890, %v892
  %v898 = vsel %vm614, %v894, %v896
  %901 = vst [vmem:[#allocation11 + $0x40] sm:$0xff] %v897
  %902 = vst [vmem:[#allocation11 + $0x48] sm:$0xff] %v898
  %v903 = vld [vmem:[%s33] sm:$0xff]
  %v904 = vld [vmem:[%s33 + $0x8] sm:$0xff]
  %v905 = vld [vmem:[%s33 + $0x10] sm:$0xff]
  %v906 = vld [vmem:[%s33 + $0x18] sm:$0xff]
  %v907 = vld [vmem:[#allocation11] sm:$0xff]
  %v908 = vld [vmem:[#allocation11 + $0x8] sm:$0xff]
  %v909 = vld [vmem:[#allocation11 + $0x10] sm:$0xff]
  %v910 = vld [vmem:[#allocation11 + $0x18] sm:$0xff]
  %v911 = vld [vmem:[#allocation11 + $0x20] sm:$0xff]
  %v912 = vld [vmem:[#allocation11 + $0x28] sm:$0xff]
  %v913 = vld [vmem:[#allocation11 + $0x30] sm:$0xff]
  %v914 = vld [vmem:[#allocation11 + $0x38] sm:$0xff]
  %v915 = vld [vmem:[#allocation11 + $0x40] sm:$0xff]
  %v916 = vld [vmem:[#allocation11 + $0x48] sm:$0xff]
  %v917 = vld [vmem:[%s35] sm:$0xff]
  %v918 = vld [vmem:[%s35 + $0x8] sm:$0xff]
  %v919 = vld [vmem:[%s35 + $0x10] sm:$0xff]
  %v920 = vld [vmem:[%s35 + $0x18] sm:$0xff]
  %922 = vset.pattern.permute.xlu0 0
  %923 = vperm.xlu0 %922, %v917
  %v924 = vpop.permute.xlu0 %923
  %927 = vset.pattern.permute.xlu0 0
  %928 = vperm.xlu0 %927, %v918
  %v929 = vpop.permute.xlu0 %928
  %932 = vset.pattern.permute.xlu0 0
  %933 = vperm.xlu0 %932, %v919
  %v934 = vpop.permute.xlu0 %933
  %937 = vset.pattern.permute.xlu0 0
  %938 = vperm.xlu0 %937, %v920
  %v939 = vpop.permute.xlu0 %938
  %vm941 = vcmask 654336
  %v943 = vsel %vm941, %v903, 0
  %v946 = vsel %vm941, %v904, 0
  %v949 = vsel %vm941, %v905, 0
  %v952 = vsel %vm941, %v906, 0
  %954 = vmatpush.msra.mxu0 0.0
  %955 = vmatpush.msra.mxu0 0.0
  %956 = vmatpush.msra.mxu0 0.0
  %957 = vmatpush.msra.mxu0 0.0
  %958 = vmatpush.msra.mxu0 0.0
  %959 = vmatpush.msra.mxu0 0.0
  %960 = vmatpush.msra.mxu0 %v916
  %961 = vmatpush.msra.mxu0 %v915
  %962 = vmatpush.msra.mxu0 %v914
  %963 = vmatpush.msra.mxu0 %v913
  %964 = vmatpush.msra.mxu0 %v912
  %965 = vmatpush.msra.mxu0 %v911
  %966 = vmatpush.msra.mxu0 %v910
  %967 = vmatpush.msra.mxu0 %v909
  %968 = vmatpush.msra.mxu0 %v908
  %969 = vmatpush.msra.mxu0 %v907
  %970 = vmatmul.f32.gmra.mxu0 %v943
  %v971 = vpop.f32.mrf.mxu0
  %v972 = vadd.f32 %v924, %v971
  %973 = vmatmul.f32.gmra.mxu0 %v946
  %v974 = vpop.f32.mrf.mxu0
  %v975 = vadd.f32 %v929, %v974
  %976 = vmatmul.f32.gmra.mxu0 %v949
  %v977 = vpop.f32.mrf.mxu0
  %v978 = vadd.f32 %v934, %v977
  %979 = vmatmul.f32.gmra.mxu0 %v952
  %v980 = vpop.f32.mrf.mxu0
  %v981 = vadd.f32 %v939, %v980
  %982 = vdwg.mxu0
  %vm983 = vcmp.lt.s32.totalorder %v163, 16
  %vm984 = vmand %vm223, %vm983
  %v985 = vmul.f32 %v972, 0.70710677
  %v986 = vmul.f32 %v975, 0.70710677
  %v987 = vmul.f32 %v978, 0.70710677
  %v988 = vmul.f32 %v981, 0.70710677
  %v989 = vand.u32 2147483647, %v985
  %v990 = vand.u32 2147483647, %v986
  %v991 = vand.u32 2147483647, %v987
  %v992 = vand.u32 2147483647, %v988
  %v993 = vmul.f32 %v989, 0.3275911
  %v994 = vmul.f32 %v990, 0.3275911
  %v995 = vmul.f32 %v991, 0.3275911
  %v996 = vmul.f32 %v992, 0.3275911
  %v997 = vadd.f32 %v993, 1.0
  %v998 = vadd.f32 %v994, 1.0
  %v999 = vadd.f32 %v995, 1.0
  %v1000 = vadd.f32 %v996, 1.0
  %v1001 = vrcp.pop %v997
  %v1002 = vrcp.pop %v998
  %v1003 = vrcp.pop %v999
  %v1004 = vrcp.pop %v1000
  %v1005 = vmul.f32 %v997, %v1001
  %v1006 = vmul.f32 %v998, %v1002
  %v1007 = vmul.f32 %v999, %v1003
  %v1008 = vmul.f32 %v1000, %v1004
  %v1009 = vsub.f32 2.0, %v1005
  %v1010 = vsub.f32 2.0, %v1006
  %v1011 = vsub.f32 2.0, %v1007
  %v1012 = vsub.f32 2.0, %v1008
  %v1013 = vmul.f32 %v1001, %v1009
  %v1014 = vmul.f32 %v1002, %v1010
  %v1015 = vmul.f32 %v1003, %v1011
  %v1016 = vmul.f32 %v1004, %v1012
  %v1017 = vmul.f32 %v1013, 1.0614054
  %v1018 = vmul.f32 %v1014, 1.0614054
  %v1019 = vmul.f32 %v1015, 1.0614054
  %v1020 = vmul.f32 %v1016, 1.0614054
  %v1021 = vadd.f32 %v1017, -1.4531521
  %v1022 = vadd.f32 %v1018, -1.4531521
  %v1023 = vadd.f32 %v1019, -1.4531521
  %v1024 = vadd.f32 %v1020, -1.4531521
  %v1025 = vmul.f32 %v1013, %v1021
  %v1026 = vmul.f32 %v1014, %v1022
  %v1027 = vmul.f32 %v1015, %v1023
  %v1028 = vmul.f32 %v1016, %v1024
  %v1029 = vadd.f32 %v1025, 1.4214138
  %v1030 = vadd.f32 %v1026, 1.4214138
  %v1031 = vadd.f32 %v1027, 1.4214138
  %v1032 = vadd.f32 %v1028, 1.4214138
  %v1033 = vmul.f32 %v1013, %v1029
  %v1034 = vmul.f32 %v1014, %v1030
  %v1035 = vmul.f32 %v1015, %v1031
  %v1036 = vmul.f32 %v1016, %v1032
  %v1037 = vadd.f32 %v1033, -0.28449672
  %v1038 = vadd.f32 %v1034, -0.28449672
  %v1039 = vadd.f32 %v1035, -0.28449672
  %v1040 = vadd.f32 %v1036, -0.28449672
  %v1041 = vmul.f32 %v1013, %v1037
  %v1042 = vmul.f32 %v1014, %v1038
  %v1043 = vmul.f32 %v1015, %v1039
  %v1044 = vmul.f32 %v1016, %v1040
  %v1045 = vadd.f32 %v1041, 0.2548296
  %v1046 = vadd.f32 %v1042, 0.2548296
  %v1047 = vadd.f32 %v1043, 0.2548296
  %v1048 = vadd.f32 %v1044, 0.2548296
  %v1049 = vmul.f32 %v1013, %v1045
  %v1050 = vmul.f32 %v1014, %v1046
  %v1051 = vmul.f32 %v1015, %v1047
  %v1052 = vmul.f32 %v1016, %v1048
  %v1053 = vsub.f32 0.0, %v989
  %v1054 = vsub.f32 0.0, %v990
  %v1055 = vsub.f32 0.0, %v991
  %v1056 = vsub.f32 0.0, %v992
  %v1057 = vmul.f32 %v1053, %v989
  %v1058 = vmul.f32 %v1054, %v990
  %v1059 = vmul.f32 %v1055, %v991
  %v1060 = vmul.f32 %v1056, %v992
  %v1061 = vmul.f32 %v1057, 1.442695
  %v1062 = vpow.pop %v1061
  %v1063 = vmul.f32 %v1058, 1.442695
  %v1064 = vpow.pop %v1063
  %v1065 = vmul.f32 %v1059, 1.442695
  %v1066 = vpow.pop %v1065
  %v1067 = vmul.f32 %v1060, 1.442695
  %v1068 = vpow.pop %v1067
  %v1069 = vmul.f32 %v1049, %v1062
  %v1070 = vmul.f32 %v1050, %v1064
  %v1071 = vmul.f32 %v1051, %v1066
  %v1072 = vmul.f32 %v1052, %v1068
  %v1073 = vsub.f32 1.0, %v1069
  %v1074 = vsub.f32 1.0, %v1070
  %v1075 = vsub.f32 1.0, %v1071
  %v1076 = vsub.f32 1.0, %v1072
  %vm1077 = vcmp.lt.f32.partialorder %v985, 0.0
  %vm1078 = vcmp.lt.f32.partialorder %v986, 0.0
  %vm1079 = vcmp.lt.f32.partialorder %v987, 0.0
  %vm1080 = vcmp.lt.f32.partialorder %v988, 0.0
  %v1081 = vsub.f32 0.0, %v1073
  %v1082 = vsub.f32 0.0, %v1074
  %v1083 = vsub.f32 0.0, %v1075
  %v1084 = vsub.f32 0.0, %v1076
  %v1085 = vsel %vm1077, %v1081, %v1073
  %v1086 = vsel %vm1078, %v1082, %v1074
  %v1087 = vsel %vm1079, %v1083, %v1075
  %v1088 = vsel %vm1080, %v1084, %v1076
  %v1089 = vmul.f32 %v972, 0.5
  %v1090 = vmul.f32 %v975, 0.5
  %v1091 = vmul.f32 %v978, 0.5
  %v1092 = vmul.f32 %v981, 0.5
  %v1093 = vadd.f32 %v1085, 1.0
  %v1094 = vadd.f32 %v1086, 1.0
  %v1095 = vadd.f32 %v1087, 1.0
  %v1096 = vadd.f32 %v1088, 1.0
  %v1097 = vmul.f32 %v1089, %v1093
  %v1098 = vmul.f32 %v1090, %v1094
  %v1099 = vmul.f32 %v1091, %v1095
  %v1100 = vmul.f32 %v1092, %v1096
  %v1101 = vsel %vm984, 1, 0
  %vm1102 = vcmp.eq.s32.totalorder %v1101, 1
  %v1103 = vsel %vm1102, %v1097, 0.0
  %v1104 = vsel %vm1102, %v1098, 0.0
  %v1105 = vsel %vm1102, %v1099, 0.0
  %v1106 = vsel %vm1102, %v1100, 0.0
  %1107 = vadd.xlane.f32.xlu0 %v1103
  %v1108 = vpop.xlane.xlu0 %1107
  %1109 = vadd.xlane.f32.xlu0 %v1104
  %v1110 = vpop.xlane.xlu0 %1109
  %1111 = vadd.xlane.f32.xlu0 %v1105
  %v1112 = vpop.xlane.xlu0 %1111
  %1113 = vadd.xlane.f32.xlu0 %v1106
  %v1114 = vpop.xlane.xlu0 %1113
  %v1115 = vmul.f32 %v1103, %v1103
  %v1116 = vmul.f32 %v1104, %v1104
  %v1117 = vmul.f32 %v1105, %v1105
  %v1118 = vmul.f32 %v1106, %v1106
  %1119 = vadd.xlane.f32.xlu0 %v1115
  %v1120 = vpop.xlane.xlu0 %1119
  %1121 = vadd.xlane.f32.xlu0 %v1116
  %v1122 = vpop.xlane.xlu0 %1121
  %1123 = vadd.xlane.f32.xlu0 %v1117
  %v1124 = vpop.xlane.xlu0 %1123
  %1125 = vadd.xlane.f32.xlu0 %v1118
  %v1126 = vpop.xlane.xlu0 %1125
  %v1127 = vmul.f32 %v1108, 0.1
  %v1128 = vmul.f32 %v1110, 0.1
  %v1129 = vmul.f32 %v1112, 0.1
  %v1130 = vmul.f32 %v1114, 0.1
  %v1131 = vmul.f32 %v1120, 0.1
  %v1132 = vmul.f32 %v1122, 0.1
  %v1133 = vmul.f32 %v1124, 0.1
  %v1134 = vmul.f32 %v1126, 0.1
  %v1135 = vmul.f32 %v1127, %v1127
  %v1136 = vmul.f32 %v1128, %v1128
  %v1137 = vmul.f32 %v1129, %v1129
  %v1138 = vmul.f32 %v1130, %v1130
  %v1139 = vsub.f32 %v1131, %v1135
  %v1140 = vsub.f32 %v1132, %v1136
  %v1141 = vsub.f32 %v1133, %v1137
  %v1142 = vsub.f32 %v1134, %v1138
  %v1143 = vmax.f32 %v1139, 0.0
  %v1144 = vmax.f32 %v1140, 0.0
  %v1145 = vmax.f32 %v1141, 0.0
  %v1146 = vmax.f32 %v1142, 0.0
  %v1147 = vadd.f32 %v1143, 1e-05
  %v1148 = vadd.f32 %v1144, 1e-05
  %v1149 = vadd.f32 %v1145, 1e-05
  %v1150 = vadd.f32 %v1146, 1e-05
  %v1151 = vrsqrt.pop %v1147
  %v1152 = vmul.f32 %v1151, %v1147
  %v1153 = vmul.f32 %v1152, %v1151
  %v1154 = vmul.f32 0.5, %v1153
  %v1155 = vsub.f32 1.5, %v1154
  %v1156 = vmul.f32 %v1151, %v1155
  %vm1157 = vweird.f32 %v1147
  %vm1158 = vweird.f32 %v1151
  %vm1159 = vmor %vm1157, %vm1158
  %v1160 = vsel %vm1159, %v1151, %v1156
  %v1161 = vrsqrt.pop %v1148
  %v1162 = vmul.f32 %v1161, %v1148
  %v1163 = vmul.f32 %v1162, %v1161
  %v1164 = vmul.f32 0.5, %v1163
  %v1165 = vsub.f32 1.5, %v1164
  %v1166 = vmul.f32 %v1161, %v1165
  %vm1167 = vweird.f32 %v1148
  %vm1168 = vweird.f32 %v1161
  %vm1169 = vmor %vm1167, %vm1168
  %v1170 = vsel %vm1169, %v1161, %v1166
  %v1171 = vrsqrt.pop %v1149
  %v1172 = vmul.f32 %v1171, %v1149
  %v1173 = vmul.f32 %v1172, %v1171
  %v1174 = vmul.f32 0.5, %v1173
  %v1175 = vsub.f32 1.5, %v1174
  %v1176 = vmul.f32 %v1171, %v1175
  %vm1177 = vweird.f32 %v1149
  %vm1178 = vweird.f32 %v1171
  %vm1179 = vmor %vm1177, %vm1178
  %v1180 = vsel %vm1179, %v1171, %v1176
  %v1181 = vrsqrt.pop %v1150
  %v1182 = vmul.f32 %v1181, %v1150
  %v1183 = vmul.f32 %v1182, %v1181
  %v1184 = vmul.f32 0.5, %v1183
  %v1185 = vsub.f32 1.5, %v1184
  %v1186 = vmul.f32 %v1181, %v1185
  %vm1187 = vweird.f32 %v1150
  %vm1188 = vweird.f32 %v1181
  %vm1189 = vmor %vm1187, %vm1188
  %v1190 = vsel %vm1189, %v1181, %v1186
  %v1191 = vld [vmem:[%s37] sm:$0xff]
  %v1192 = vld [vmem:[%s37 + $0x8] sm:$0xff]
  %v1193 = vld [vmem:[%s37 + $0x10] sm:$0xff]
  %v1194 = vld [vmem:[%s37 + $0x18] sm:$0xff]
  %v1195 = vmul.f32 %v1160, %v1191
  %v1196 = vmul.f32 %v1170, %v1192
  %v1197 = vmul.f32 %v1180, %v1193
  %v1198 = vmul.f32 %v1190, %v1194
  %v1199 = vld [vmem:[%s39] sm:$0xff]
  %v1200 = vld [vmem:[%s39 + $0x8] sm:$0xff]
  %v1201 = vld [vmem:[%s39 + $0x10] sm:$0xff]
  %v1202 = vld [vmem:[%s39 + $0x18] sm:$0xff]
  %v1203 = vmul.f32 %v1127, %v1195
  %v1204 = vmul.f32 %v1128, %v1196
  %v1205 = vmul.f32 %v1129, %v1197
  %v1206 = vmul.f32 %v1130, %v1198
  %v1207 = vsub.f32 %v1199, %v1203
  %v1208 = vsub.f32 %v1200, %v1204
  %v1209 = vsub.f32 %v1201, %v1205
  %v1210 = vsub.f32 %v1202, %v1206
  %1212 = vset.pattern.permute.xlu0 0
  %1213 = vperm.xlu0 %1212, %v1195
  %v1214 = vpop.permute.xlu0 %1213
  %1217 = vset.pattern.permute.xlu0 0
  %1218 = vperm.xlu0 %1217, %v1196
  %v1219 = vpop.permute.xlu0 %1218
  %1222 = vset.pattern.permute.xlu0 0
  %1223 = vperm.xlu0 %1222, %v1197
  %v1224 = vpop.permute.xlu0 %1223
  %1227 = vset.pattern.permute.xlu0 0
  %1228 = vperm.xlu0 %1227, %v1198
  %v1229 = vpop.permute.xlu0 %1228
  %v1231 = vmul.f32 %v1097, %v1214
  %v1232 = vmul.f32 %v1098, %v1219
  %v1233 = vmul.f32 %v1099, %v1224
  %v1234 = vmul.f32 %v1100, %v1229
  %1236 = vset.pattern.permute.xlu0 0
  %1237 = vperm.xlu0 %1236, %v1207
  %v1238 = vpop.permute.xlu0 %1237
  %1241 = vset.pattern.permute.xlu0 0
  %1242 = vperm.xlu0 %1241, %v1208
  %v1243 = vpop.permute.xlu0 %1242
  %1246 = vset.pattern.permute.xlu0 0
  %1247 = vperm.xlu0 %1246, %v1209
  %v1248 = vpop.permute.xlu0 %1247
  %1251 = vset.pattern.permute.xlu0 0
  %1252 = vperm.xlu0 %1251, %v1210
  %v1253 = vpop.permute.xlu0 %1252
  %v1255 = vadd.f32 %v1231, %v1238
  %v1256 = vadd.f32 %v1232, %v1243
  %v1257 = vadd.f32 %v1233, %v1248
  %v1258 = vadd.f32 %v1234, %v1253
  %v1259 = vsel %vm1102, %v1255, 0.0
  %v1260 = vsel %vm1102, %v1256, 0.0
  %v1261 = vsel %vm1102, %v1257, 0.0
  %v1262 = vsel %vm1102, %v1258, 0.0
  %1263 = vst [vmem:[#allocation6] sm:$0xff] %v1259
  %1264 = vst [vmem:[#allocation6 + $0x10] sm:$0xff] %v1260
  %1265 = vst [vmem:[#allocation6 + $0x20] sm:$0xff] %v1261
  %1266 = vst [vmem:[#allocation6 + $0x30] sm:$0xff] %v1262
  %1267 = vst [vmem:[%s73] sm:$0xff] %v1259
  %1268 = vst [vmem:[%s73 + $0x8] sm:$0xff] %v1260
  %1269 = vst [vmem:[%s73 + $0x10] sm:$0xff] %v1261
  %1270 = vst [vmem:[%s73 + $0x18] sm:$0xff] %v1262
  %v1271 = vld [vmem:[#allocation6] sm:$0xff]
  %v1272 = vld [vmem:[#allocation6 + $0x10] sm:$0xff]
  %v1273 = vld [vmem:[#allocation6 + $0x20] sm:$0xff]
  %v1274 = vld [vmem:[#allocation6 + $0x30] sm:$0xff]
  %1275 = vst [vmem:[#allocation11] sm:$0xff] %v1271
  %1276 = vst [vmem:[#allocation11 + $0x8] sm:$0xff] %v1272
  %1277 = vst [vmem:[#allocation11 + $0x10] sm:$0xff] %v1273
  %1278 = vst [vmem:[#allocation11 + $0x18] sm:$0xff] %v1274
  %v1279 = vld [vmem:[#allocation6] sm:$0xff]
  %v1280 = vld [vmem:[#allocation6 + $0x8] sm:$0xff]
  %v1281 = vld [vmem:[#allocation6 + $0x10] sm:$0xff]
  %v1282 = vld [vmem:[#allocation6 + $0x18] sm:$0xff]
  %v1283 = vld [vmem:[#allocation6 + $0x20] sm:$0xff]
  %v1284 = vld [vmem:[#allocation6 + $0x28] sm:$0xff]
  %v1285 = vld [vmem:[#allocation6 + $0x30] sm:$0xff]
  %v1286 = vld [vmem:[#allocation6 + $0x38] sm:$0xff]
  %1295 = vrot.lane.b32.xlu0 %v1279, 127
  %v1296 = vpop.permute.xlu0 %1295
  %1297 = vrot.lane.b32.xlu0 %v1280, 127
  %v1298 = vpop.permute.xlu0 %1297
  %1299 = vrot.lane.b32.xlu0 %v1281, 127
  %v1300 = vpop.permute.xlu0 %1299
  %1301 = vrot.lane.b32.xlu0 %v1282, 127
  %v1302 = vpop.permute.xlu0 %1301
  %1303 = vrot.lane.b32.xlu0 %v1283, 127
  %v1304 = vpop.permute.xlu0 %1303
  %1305 = vrot.lane.b32.xlu0 %v1284, 127
  %v1306 = vpop.permute.xlu0 %1305
  %1307 = vrot.lane.b32.xlu0 %v1285, 127
  %v1308 = vpop.permute.xlu0 %1307
  %1309 = vrot.lane.b32.xlu0 %v1286, 127
  %v1310 = vpop.permute.xlu0 %1309
  %v1311 = vsel %vm181, %v1296, %v1298
  %v1312 = vsel %vm181, %v1300, %v1302
  %v1313 = vsel %vm181, %v1304, %v1306
  %v1314 = vsel %vm181, %v1308, %v1310
  %1319 = vst [vmem:[#allocation11 + $0x20] sm:$0xff] %v1311
  %1320 = vst [vmem:[#allocation11 + $0x28] sm:$0xff] %v1312
  %1321 = vst [vmem:[#allocation11 + $0x30] sm:$0xff] %v1313
  %1322 = vst [vmem:[#allocation11 + $0x38] sm:$0xff] %v1314
  %v1323 = vld [vmem:[#allocation6] sm:$0xff]
  %v1324 = vld [vmem:[#allocation6 + $0x8] sm:$0xff]
  %v1325 = vld [vmem:[#allocation6 + $0x10] sm:$0xff]
  %v1326 = vld [vmem:[#allocation6 + $0x18] sm:$0xff]
  %v1327 = vld [vmem:[#allocation6 + $0x20] sm:$0xff]
  %v1328 = vld [vmem:[#allocation6 + $0x28] sm:$0xff]
  %v1329 = vld [vmem:[#allocation6 + $0x30] sm:$0xff]
  %v1330 = vld [vmem:[#allocation6 + $0x38] sm:$0xff]
  %1339 = vrot.lane.b32.xlu0 %v1323, 126
  %v1340 = vpop.permute.xlu0 %1339
  %1341 = vrot.lane.b32.xlu0 %v1324, 126
  %v1342 = vpop.permute.xlu0 %1341
  %1343 = vrot.lane.b32.xlu0 %v1325, 126
  %v1344 = vpop.permute.xlu0 %1343
  %1345 = vrot.lane.b32.xlu0 %v1326, 126
  %v1346 = vpop.permute.xlu0 %1345
  %1347 = vrot.lane.b32.xlu0 %v1327, 126
  %v1348 = vpop.permute.xlu0 %1347
  %1349 = vrot.lane.b32.xlu0 %v1328, 126
  %v1350 = vpop.permute.xlu0 %1349
  %1351 = vrot.lane.b32.xlu0 %v1329, 126
  %v1352 = vpop.permute.xlu0 %1351
  %1353 = vrot.lane.b32.xlu0 %v1330, 126
  %v1354 = vpop.permute.xlu0 %1353
  %v1355 = vsel %vm456, %v1340, %v1342
  %v1356 = vsel %vm456, %v1344, %v1346
  %v1357 = vsel %vm456, %v1348, %v1350
  %v1358 = vsel %vm456, %v1352, %v1354
  %1363 = vst [vmem:[#allocation11 + $0x40] sm:$0xff] %v1355
  %1364 = vst [vmem:[#allocation11 + $0x48] sm:$0xff] %v1356
  %1365 = vst [vmem:[#allocation11 + $0x50] sm:$0xff] %v1357
  %1366 = vst [vmem:[#allocation11 + $0x58] sm:$0xff] %v1358
  %v1367 = vld [vmem:[#allocation6] sm:$0xff]
  %v1368 = vld [vmem:[#allocation6 + $0x8] sm:$0xff]
  %v1369 = vld [vmem:[#allocation6 + $0x10] sm:$0xff]
  %v1370 = vld [vmem:[#allocation6 + $0x18] sm:$0xff]
  %v1371 = vld [vmem:[#allocation6 + $0x20] sm:$0xff]
  %v1372 = vld [vmem:[#allocation6 + $0x28] sm:$0xff]
  %v1373 = vld [vmem:[#allocation6 + $0x30] sm:$0xff]
  %v1374 = vld [vmem:[#allocation6 + $0x38] sm:$0xff]
  %1383 = vrot.lane.b32.xlu0 %v1367, 125
  %v1384 = vpop.permute.xlu0 %1383
  %1385 = vrot.lane.b32.xlu0 %v1368, 125
  %v1386 = vpop.permute.xlu0 %1385
  %1387 = vrot.lane.b32.xlu0 %v1369, 125
  %v1388 = vpop.permute.xlu0 %1387
  %1389 = vrot.lane.b32.xlu0 %v1370, 125
  %v1390 = vpop.permute.xlu0 %1389
  %1391 = vrot.lane.b32.xlu0 %v1371, 125
  %v1392 = vpop.permute.xlu0 %1391
  %1393 = vrot.lane.b32.xlu0 %v1372, 125
  %v1394 = vpop.permute.xlu0 %1393
  %1395 = vrot.lane.b32.xlu0 %v1373, 125
  %v1396 = vpop.permute.xlu0 %1395
  %1397 = vrot.lane.b32.xlu0 %v1374, 125
  %v1398 = vpop.permute.xlu0 %1397
  %v1399 = vsel %vm602, %v1384, %v1386
  %v1400 = vsel %vm602, %v1388, %v1390
  %v1401 = vsel %vm602, %v1392, %v1394
  %v1402 = vsel %vm602, %v1396, %v1398
  %1407 = vst [vmem:[#allocation11 + $0x60] sm:$0xff] %v1399
  %1408 = vst [vmem:[#allocation11 + $0x68] sm:$0xff] %v1400
  %1409 = vst [vmem:[#allocation11 + $0x70] sm:$0xff] %v1401
  %1410 = vst [vmem:[#allocation11 + $0x78] sm:$0xff] %v1402
  %v1411 = vld [vmem:[#allocation6] sm:$0xff]
  %v1412 = vld [vmem:[#allocation6 + $0x8] sm:$0xff]
  %v1413 = vld [vmem:[#allocation6 + $0x10] sm:$0xff]
  %v1414 = vld [vmem:[#allocation6 + $0x18] sm:$0xff]
  %v1415 = vld [vmem:[#allocation6 + $0x20] sm:$0xff]
  %v1416 = vld [vmem:[#allocation6 + $0x28] sm:$0xff]
  %v1417 = vld [vmem:[#allocation6 + $0x30] sm:$0xff]
  %v1418 = vld [vmem:[#allocation6 + $0x38] sm:$0xff]
  %1427 = vrot.lane.b32.xlu0 %v1411, 124
  %v1428 = vpop.permute.xlu0 %1427
  %1429 = vrot.lane.b32.xlu0 %v1412, 124
  %v1430 = vpop.permute.xlu0 %1429
  %1431 = vrot.lane.b32.xlu0 %v1413, 124
  %v1432 = vpop.permute.xlu0 %1431
  %1433 = vrot.lane.b32.xlu0 %v1414, 124
  %v1434 = vpop.permute.xlu0 %1433
  %1435 = vrot.lane.b32.xlu0 %v1415, 124
  %v1436 = vpop.permute.xlu0 %1435
  %1437 = vrot.lane.b32.xlu0 %v1416, 124
  %v1438 = vpop.permute.xlu0 %1437
  %1439 = vrot.lane.b32.xlu0 %v1417, 124
  %v1440 = vpop.permute.xlu0 %1439
  %1441 = vrot.lane.b32.xlu0 %v1418, 124
  %v1442 = vpop.permute.xlu0 %1441
  %v1443 = vsel %vm614, %v1428, %v1430
  %v1444 = vsel %vm614, %v1432, %v1434
  %v1445 = vsel %vm614, %v1436, %v1438
  %v1446 = vsel %vm614, %v1440, %v1442
  %1451 = vst [vmem:[#allocation11 + $0x80] sm:$0xff] %v1443
  %1452 = vst [vmem:[#allocation11 + $0x88] sm:$0xff] %v1444
  %1453 = vst [vmem:[#allocation11 + $0x90] sm:$0xff] %v1445
  %1454 = vst [vmem:[#allocation11 + $0x98] sm:$0xff] %v1446
  %v1455 = vld [vmem:[%s41] sm:$0xff]
  %v1456 = vld [vmem:[%s41 + $0x8] sm:$0xff]
  %v1457 = vld [vmem:[%s41 + $0x10] sm:$0xff]
  %v1458 = vld [vmem:[%s41 + $0x18] sm:$0xff]
  %v1459 = vld [vmem:[#allocation11] sm:$0xff]
  %v1460 = vld [vmem:[#allocation11 + $0x8] sm:$0xff]
  %v1461 = vld [vmem:[#allocation11 + $0x10] sm:$0xff]
  %v1462 = vld [vmem:[#allocation11 + $0x18] sm:$0xff]
  %v1463 = vld [vmem:[#allocation11 + $0x20] sm:$0xff]
  %v1464 = vld [vmem:[#allocation11 + $0x28] sm:$0xff]
  %v1465 = vld [vmem:[#allocation11 + $0x30] sm:$0xff]
  %v1466 = vld [vmem:[#allocation11 + $0x38] sm:$0xff]
  %v1467 = vld [vmem:[#allocation11 + $0x40] sm:$0xff]
  %v1468 = vld [vmem:[#allocation11 + $0x48] sm:$0xff]
  %v1469 = vld [vmem:[#allocation11 + $0x50] sm:$0xff]
  %v1470 = vld [vmem:[#allocation11 + $0x58] sm:$0xff]
  %v1471 = vld [vmem:[#allocation11 + $0x60] sm:$0xff]
  %v1472 = vld [vmem:[#allocation11 + $0x68] sm:$0xff]
  %v1473 = vld [vmem:[#allocation11 + $0x70] sm:$0xff]
  %v1474 = vld [vmem:[#allocation11 + $0x78] sm:$0xff]
  %v1475 = vld [vmem:[#allocation11 + $0x80] sm:$0xff]
  %v1476 = vld [vmem:[#allocation11 + $0x88] sm:$0xff]
  %v1477 = vld [vmem:[#allocation11 + $0x90] sm:$0xff]
  %v1478 = vld [vmem:[#allocation11 + $0x98] sm:$0xff]
  %v1479 = vld [vmem:[%s43] sm:$0xff]
  %v1480 = vld [vmem:[%s43 + $0x8] sm:$0xff]
  %1482 = vset.pattern.permute.xlu0 0
  %1483 = vperm.xlu0 %1482, %v1479
  %v1484 = vpop.permute.xlu0 %1483
  %1487 = vset.pattern.permute.xlu0 0
  %1488 = vperm.xlu0 %1487, %v1480
  %v1489 = vpop.permute.xlu0 %1488
  %vm1491 = vcmask 261120
  %v1493 = vsel %vm1491, %v1456, 0
  %v1496 = vsel %vm1491, %v1458, 0
  %1498 = vmatpush.msra.mxu0 %v1474
  %1499 = vmatpush.msra.mxu0 %v1473
  %1500 = vmatpush.msra.mxu0 %v1472
  %1501 = vmatpush.msra.mxu0 %v1471
  %1502 = vmatpush.msra.mxu0 %v1470
  %1503 = vmatpush.msra.mxu0 %v1469
  %1504 = vmatpush.msra.mxu0 %v1468
  %1505 = vmatpush.msra.mxu0 %v1467
  %1506 = vmatpush.msra.mxu0 %v1466
  %1507 = vmatpush.msra.mxu0 %v1465
  %1508 = vmatpush.msra.mxu0 %v1464
  %1509 = vmatpush.msra.mxu0 %v1463
  %1510 = vmatpush.msra.mxu0 %v1462
  %1511 = vmatpush.msra.mxu0 %v1461
  %1512 = vmatpush.msra.mxu0 %v1460
  %1513 = vmatpush.msra.mxu0 %v1459
  %1514 = vmatmul.f32.gmra.mxu0 %v1455
  %v1515 = vpop.f32.mrf.mxu0
  %v1516 = vadd.f32 %v1484, %v1515
  %1517 = vmatmul.f32.gmra.mxu0 %v1457
  %v1518 = vpop.f32.mrf.mxu0
  %v1519 = vadd.f32 %v1489, %v1518
  %1520 = vdwg.mxu0
  %1521 = vmatpush.msra.mxu0 0.0
  %1522 = vmatpush.msra.mxu0 0.0
  %1523 = vmatpush.msra.mxu0 0.0
  %1524 = vmatpush.msra.mxu0 0.0
  %1525 = vmatpush.msra.mxu0 0.0
  %1526 = vmatpush.msra.mxu0 0.0
  %1527 = vmatpush.msra.mxu0 0.0
  %1528 = vmatpush.msra.mxu0 0.0
  %1529 = vmatpush.msra.mxu0 0.0
  %1530 = vmatpush.msra.mxu0 0.0
  %1531 = vmatpush.msra.mxu0 0.0
  %1532 = vmatpush.msra.mxu0 0.0
  %1533 = vmatpush.msra.mxu0 %v1478
  %1534 = vmatpush.msra.mxu0 %v1477
  %1535 = vmatpush.msra.mxu0 %v1476
  %1536 = vmatpush.msra.mxu0 %v1475
  %1537 = vmatmul.f32.gmra.mxu0 %v1493
  %v1538 = vpop.f32.mrf.mxu0
  %v1539 = vadd.f32 %v1516, %v1538
  %1540 = vmatmul.f32.gmra.mxu0 %v1496
  %v1541 = vpop.f32.mrf.mxu0
  %v1542 = vadd.f32 %v1519, %v1541
  %1543 = vdwg.mxu0
  %vm1544 = vcmp.ge.s32.totalorder %v163, 7
  %vm1545 = vmand %vm1544, %vm983
  %v1546 = vmul.f32 %v1539, 0.70710677
  %v1547 = vmul.f32 %v1542, 0.70710677
  %v1548 = vand.u32 2147483647, %v1546
  %v1549 = vand.u32 2147483647, %v1547
  %v1550 = vmul.f32 %v1548, 0.3275911
  %v1551 = vmul.f32 %v1549, 0.3275911
  %v1552 = vadd.f32 %v1550, 1.0
  %v1553 = vadd.f32 %v1551, 1.0
  %v1554 = vrcp.pop %v1552
  %v1555 = vrcp.pop %v1553
  %v1556 = vmul.f32 %v1552, %v1554
  %v1557 = vmul.f32 %v1553, %v1555
  %v1558 = vsub.f32 2.0, %v1556
  %v1559 = vsub.f32 2.0, %v1557
  %v1560 = vmul.f32 %v1554, %v1558
  %v1561 = vmul.f32 %v1555, %v1559
  %v1562 = vmul.f32 %v1560, 1.0614054
  %v1563 = vmul.f32 %v1561, 1.0614054
  %v1564 = vadd.f32 %v1562, -1.4531521
  %v1565 = vadd.f32 %v1563, -1.4531521
  %v1566 = vmul.f32 %v1560, %v1564
  %v1567 = vmul.f32 %v1561, %v1565
  %v1568 = vadd.f32 %v1566, 1.4214138
  %v1569 = vadd.f32 %v1567, 1.4214138
  %v1570 = vmul.f32 %v1560, %v1568
  %v1571 = vmul.f32 %v1561, %v1569
  %v1572 = vadd.f32 %v1570, -0.28449672
  %v1573 = vadd.f32 %v1571, -0.28449672
  %v1574 = vmul.f32 %v1560, %v1572
  %v1575 = vmul.f32 %v1561, %v1573
  %v1576 = vadd.f32 %v1574, 0.2548296
  %v1577 = vadd.f32 %v1575, 0.2548296
  %v1578 = vmul.f32 %v1560, %v1576
  %v1579 = vmul.f32 %v1561, %v1577
  %v1580 = vsub.f32 0.0, %v1548
  %v1581 = vsub.f32 0.0, %v1549
  %v1582 = vmul.f32 %v1580, %v1548
  %v1583 = vmul.f32 %v1581, %v1549
  %v1584 = vmul.f32 %v1582, 1.442695
  %v1585 = vpow.pop %v1584
  %v1586 = vmul.f32 %v1583, 1.442695
  %v1587 = vpow.pop %v1586
  %v1588 = vmul.f32 %v1578, %v1585
  %v1589 = vmul.f32 %v1579, %v1587
  %v1590 = vsub.f32 1.0, %v1588
  %v1591 = vsub.f32 1.0, %v1589
  %vm1592 = vcmp.lt.f32.partialorder %v1546, 0.0
  %vm1593 = vcmp.lt.f32.partialorder %v1547, 0.0
  %v1594 = vsub.f32 0.0, %v1590
  %v1595 = vsub.f32 0.0, %v1591
  %v1596 = vsel %vm1592, %v1594, %v1590
  %v1597 = vsel %vm1593, %v1595, %v1591
  %v1598 = vmul.f32 %v1539, 0.5
  %v1599 = vmul.f32 %v1542, 0.5
  %v1600 = vadd.f32 %v1596, 1.0
  %v1601 = vadd.f32 %v1597, 1.0
  %v1602 = vmul.f32 %v1598, %v1600
  %v1603 = vmul.f32 %v1599, %v1601
  %v1604 = vsel %vm1545, 1, 0
  %vm1605 = vcmp.eq.s32.totalorder %v1604, 1
  %v1606 = vsel %vm1605, %v1602, 0.0
  %v1607 = vsel %vm1605, %v1603, 0.0
  %1608 = vadd.xlane.f32.xlu0 %v1606
  %v1609 = vpop.xlane.xlu0 %1608
  %1610 = vadd.xlane.f32.xlu0 %v1607
  %v1611 = vpop.xlane.xlu0 %1610
  %v1612 = vmul.f32 %v1606, %v1606
  %v1613 = vmul.f32 %v1607, %v1607
  %1614 = vadd.xlane.f32.xlu0 %v1612
  %v1615 = vpop.xlane.xlu0 %1614
  %1616 = vadd.xlane.f32.xlu0 %v1613
  %v1617 = vpop.xlane.xlu0 %1616
  %v1618 = vmul.f32 %v1609, 0.055555556
  %v1619 = vmul.f32 %v1611, 0.055555556
  %v1620 = vmul.f32 %v1615, 0.055555556
  %v1621 = vmul.f32 %v1617, 0.055555556
  %v1622 = vmul.f32 %v1618, %v1618
  %v1623 = vmul.f32 %v1619, %v1619
  %v1624 = vsub.f32 %v1620, %v1622
  %v1625 = vsub.f32 %v1621, %v1623
  %v1626 = vmax.f32 %v1624, 0.0
  %v1627 = vmax.f32 %v1625, 0.0
  %v1628 = vadd.f32 %v1626, 1e-05
  %v1629 = vadd.f32 %v1627, 1e-05
  %v1630 = vrsqrt.pop %v1628
  %v1631 = vmul.f32 %v1630, %v1628
  %v1632 = vmul.f32 %v1631, %v1630
  %v1633 = vmul.f32 0.5, %v1632
  %v1634 = vsub.f32 1.5, %v1633
  %v1635 = vmul.f32 %v1630, %v1634
  %vm1636 = vweird.f32 %v1628
  %vm1637 = vweird.f32 %v1630
  %vm1638 = vmor %vm1636, %vm1637
  %v1639 = vsel %vm1638, %v1630, %v1635
  %v1640 = vrsqrt.pop %v1629
  %v1641 = vmul.f32 %v1640, %v1629
  %v1642 = vmul.f32 %v1641, %v1640
  %v1643 = vmul.f32 0.5, %v1642
  %v1644 = vsub.f32 1.5, %v1643
  %v1645 = vmul.f32 %v1640, %v1644
  %vm1646 = vweird.f32 %v1629
  %vm1647 = vweird.f32 %v1640
  %vm1648 = vmor %vm1646, %vm1647
  %v1649 = vsel %vm1648, %v1640, %v1645
  %v1650 = vld [vmem:[%s45] sm:$0xff]
  %v1651 = vld [vmem:[%s45 + $0x8] sm:$0xff]
  %v1652 = vmul.f32 %v1639, %v1650
  %v1653 = vmul.f32 %v1649, %v1651
  %v1654 = vld [vmem:[%s47] sm:$0xff]
  %v1655 = vld [vmem:[%s47 + $0x8] sm:$0xff]
  %v1656 = vmul.f32 %v1618, %v1652
  %v1657 = vmul.f32 %v1619, %v1653
  %v1658 = vsub.f32 %v1654, %v1656
  %v1659 = vsub.f32 %v1655, %v1657
  %1661 = vset.pattern.permute.xlu0 0
  %1662 = vperm.xlu0 %1661, %v1652
  %v1663 = vpop.permute.xlu0 %1662
  %1666 = vset.pattern.permute.xlu0 0
  %1667 = vperm.xlu0 %1666, %v1653
  %v1668 = vpop.permute.xlu0 %1667
  %v1670 = vmul.f32 %v1602, %v1663
  %v1671 = vmul.f32 %v1603, %v1668
  %1673 = vset.pattern.permute.xlu0 0
  %1674 = vperm.xlu0 %1673, %v1658
  %v1675 = vpop.permute.xlu0 %1674
  %1678 = vset.pattern.permute.xlu0 0
  %1679 = vperm.xlu0 %1678, %v1659
  %v1680 = vpop.permute.xlu0 %1679
  %v1682 = vadd.f32 %v1670, %v1675
  %v1683 = vadd.f32 %v1671, %v1680
  %v1684 = vsel %vm1605, %v1682, 0.0
  %v1685 = vsel %vm1605, %v1683, 0.0
  %1686 = vst [vmem:[#allocation7] sm:$0xff] %v1684
  %1687 = vst [vmem:[#allocation7 + $0x10] sm:$0xff] %v1685
  %v1688 = vld [vmem:[#allocation7] sm:$0xff]
  %v1689 = vld [vmem:[#allocation7 + $0x10] sm:$0xff]
  %1690 = vst [vmem:[#allocation11] sm:$0xff] %v1688
  %1691 = vst [vmem:[#allocation11 + $0x8] sm:$0xff] %v1689
  %v1692 = vld [vmem:[#allocation7] sm:$0xff]
  %v1693 = vld [vmem:[#allocation7 + $0x8] sm:$0xff]
  %v1694 = vld [vmem:[#allocation7 + $0x10] sm:$0xff]
  %v1695 = vld [vmem:[#allocation7 + $0x18] sm:$0xff]
  %1700 = vrot.lane.b32.xlu0 %v1692, 127
  %v1701 = vpop.permute.xlu0 %1700
  %1702 = vrot.lane.b32.xlu0 %v1693, 127
  %v1703 = vpop.permute.xlu0 %1702
  %1704 = vrot.lane.b32.xlu0 %v1694, 127
  %v1705 = vpop.permute.xlu0 %1704
  %1706 = vrot.lane.b32.xlu0 %v1695, 127
  %v1707 = vpop.permute.xlu0 %1706
  %v1708 = vsel %vm181, %v1701, %v1703
  %v1709 = vsel %vm181, %v1705, %v1707
  %1712 = vst [vmem:[#allocation11 + $0x10] sm:$0xff] %v1708
  %1713 = vst [vmem:[#allocation11 + $0x18] sm:$0xff] %v1709
  %v1714 = vld [vmem:[#allocation7] sm:$0xff]
  %v1715 = vld [vmem:[#allocation7 + $0x8] sm:$0xff]
  %v1716 = vld [vmem:[#allocation7 + $0x10] sm:$0xff]
  %v1717 = vld [vmem:[#allocation7 + $0x18] sm:$0xff]
  %1722 = vrot.lane.b32.xlu0 %v1714, 126
  %v1723 = vpop.permute.xlu0 %1722
  %1724 = vrot.lane.b32.xlu0 %v1715, 126
  %v1725 = vpop.permute.xlu0 %1724
  %1726 = vrot.lane.b32.xlu0 %v1716, 126
  %v1727 = vpop.permute.xlu0 %1726
  %1728 = vrot.lane.b32.xlu0 %v1717, 126
  %v1729 = vpop.permute.xlu0 %1728
  %v1730 = vsel %vm456, %v1723, %v1725
  %v1731 = vsel %vm456, %v1727, %v1729
  %1734 = vst [vmem:[#allocation11 + $0x20] sm:$0xff] %v1730
  %1735 = vst [vmem:[#allocation11 + $0x28] sm:$0xff] %v1731
  %v1736 = vld [vmem:[#allocation7] sm:$0xff]
  %v1737 = vld [vmem:[#allocation7 + $0x8] sm:$0xff]
  %v1738 = vld [vmem:[#allocation7 + $0x10] sm:$0xff]
  %v1739 = vld [vmem:[#allocation7 + $0x18] sm:$0xff]
  %1744 = vrot.lane.b32.xlu0 %v1736, 125
  %v1745 = vpop.permute.xlu0 %1744
  %1746 = vrot.lane.b32.xlu0 %v1737, 125
  %v1747 = vpop.permute.xlu0 %1746
  %1748 = vrot.lane.b32.xlu0 %v1738, 125
  %v1749 = vpop.permute.xlu0 %1748
  %1750 = vrot.lane.b32.xlu0 %v1739, 125
  %v1751 = vpop.permute.xlu0 %1750
  %v1752 = vsel %vm602, %v1745, %v1747
  %v1753 = vsel %vm602, %v1749, %v1751
  %1756 = vst [vmem:[#allocation11 + $0x30] sm:$0xff] %v1752
  %1757 = vst [vmem:[#allocation11 + $0x38] sm:$0xff] %v1753
  %v1758 = vld [vmem:[#allocation7] sm:$0xff]
  %v1759 = vld [vmem:[#allocation7 + $0x8] sm:$0xff]
  %v1760 = vld [vmem:[#allocation7 + $0x10] sm:$0xff]
  %v1761 = vld [vmem:[#allocation7 + $0x18] sm:$0xff]
  %1766 = vrot.lane.b32.xlu0 %v1758, 124
  %v1767 = vpop.permute.xlu0 %1766
  %1768 = vrot.lane.b32.xlu0 %v1759, 124
  %v1769 = vpop.permute.xlu0 %1768
  %1770 = vrot.lane.b32.xlu0 %v1760, 124
  %v1771 = vpop.permute.xlu0 %1770
  %1772 = vrot.lane.b32.xlu0 %v1761, 124
  %v1773 = vpop.permute.xlu0 %1772
  %v1774 = vsel %vm614, %v1767, %v1769
  %v1775 = vsel %vm614, %v1771, %v1773
  %1778 = vst [vmem:[#allocation11 + $0x40] sm:$0xff] %v1774
  %1779 = vst [vmem:[#allocation11 + $0x48] sm:$0xff] %v1775
  %v1780 = vld [vmem:[%s49] sm:$0xff]
  %v1781 = vld [vmem:[#allocation11] sm:$0xff]
  %v1782 = vld [vmem:[#allocation11 + $0x8] sm:$0xff]
  %v1783 = vld [vmem:[#allocation11 + $0x10] sm:$0xff]
  %v1784 = vld [vmem:[#allocation11 + $0x18] sm:$0xff]
  %v1785 = vld [vmem:[#allocation11 + $0x20] sm:$0xff]
  %v1786 = vld [vmem:[#allocation11 + $0x28] sm:$0xff]
  %v1787 = vld [vmem:[#allocation11 + $0x30] sm:$0xff]
  %v1788 = vld [vmem:[#allocation11 + $0x38] sm:$0xff]
  %v1789 = vld [vmem:[#allocation11 + $0x40] sm:$0xff]
  %v1790 = vld [vmem:[#allocation11 + $0x48] sm:$0xff]
  %v1791 = vld [vmem:[%s51] sm:$0xff]
  %1793 = vset.pattern.permute.xlu0 0
  %1794 = vperm.xlu0 %1793, %v1791
  %v1795 = vpop.permute.xlu0 %1794
  %v1798 = vsel %vm941, %v1780, 0
  %1800 = vmatpush.msra.mxu0 0.0
  %1801 = vmatpush.msra.mxu0 0.0
  %1802 = vmatpush.msra.mxu0 0.0
  %1803 = vmatpush.msra.mxu0 0.0
  %1804 = vmatpush.msra.mxu0 0.0
  %1805 = vmatpush.msra.mxu0 0.0
  %1806 = vmatpush.msra.mxu0 %v1790
  %1807 = vmatpush.msra.mxu0 %v1789
  %1808 = vmatpush.msra.mxu0 %v1788
  %1809 = vmatpush.msra.mxu0 %v1787
  %1810 = vmatpush.msra.mxu0 %v1786
  %1811 = vmatpush.msra.mxu0 %v1785
  %1812 = vmatpush.msra.mxu0 %v1784
  %1813 = vmatpush.msra.mxu0 %v1783
  %1814 = vmatpush.msra.mxu0 %v1782
  %1815 = vmatpush.msra.mxu0 %v1781
  %1816 = vmatmul.f32.gmra.mxu0 %v1798
  %v1817 = vpop.f32.mrf.mxu0
  %v1818 = vadd.f32 %v1795, %v1817
  %1819 = vdwg.mxu0
  %vm1820 = vcmp.ge.s32.totalorder %v163, 3
  %vm1821 = vmand %vm1820, %vm983
  %v1822 = vmul.f32 %v1818, 0.70710677
  %v1823 = vand.u32 2147483647, %v1822
  %v1824 = vmul.f32 %v1823, 0.3275911
  %v1825 = vadd.f32 %v1824, 1.0
  %v1826 = vrcp.pop %v1825
  %v1827 = vmul.f32 %v1825, %v1826
  %v1828 = vsub.f32 2.0, %v1827
  %v1829 = vmul.f32 %v1826, %v1828
  %v1830 = vmul.f32 %v1829, 1.0614054
  %v1831 = vadd.f32 %v1830, -1.4531521
  %v1832 = vmul.f32 %v1829, %v1831
  %v1833 = vadd.f32 %v1832, 1.4214138
  %v1834 = vmul.f32 %v1829, %v1833
  %v1835 = vadd.f32 %v1834, -0.28449672
  %v1836 = vmul.f32 %v1829, %v1835
  %v1837 = vadd.f32 %v1836, 0.2548296
  %v1838 = vmul.f32 %v1829, %v1837
  %v1839 = vsub.f32 0.0, %v1823
  %v1840 = vmul.f32 %v1839, %v1823
  %v1841 = vmul.f32 %v1840, 1.442695
  %v1842 = vpow.pop %v1841
  %v1843 = vmul.f32 %v1838, %v1842
  %v1844 = vsub.f32 1.0, %v1843
  %vm1845 = vcmp.lt.f32.partialorder %v1822, 0.0
  %v1846 = vsub.f32 0.0, %v1844
  %v1847 = vsel %vm1845, %v1846, %v1844
  %v1848 = vmul.f32 %v1818, 0.5
  %v1849 = vadd.f32 %v1847, 1.0
  %v1850 = vmul.f32 %v1848, %v1849
  %v1851 = vsel %vm1821, 1, 0
  %vm1852 = vcmp.eq.s32.totalorder %v1851, 1
  %v1853 = vsel %vm1852, %v1850, 0.0
  %1854 = vadd.xlane.f32.xlu0 %v1853
  %v1855 = vpop.xlane.xlu0 %1854
  %v1856 = vmul.f32 %v1853, %v1853
  %1857 = vadd.xlane.f32.xlu0 %v1856
  %v1858 = vpop.xlane.xlu0 %1857
  %v1859 = vmul.f32 %v1855, 0.03846154
  %v1860 = vmul.f32 %v1858, 0.03846154
  %v1861 = vmul.f32 %v1859, %v1859
  %v1862 = vsub.f32 %v1860, %v1861
  %v1863 = vmax.f32 %v1862, 0.0
  %v1864 = vadd.f32 %v1863, 1e-05
  %v1865 = vrsqrt.pop %v1864
  %v1866 = vmul.f32 %v1865, %v1864
  %v1867 = vmul.f32 %v1866, %v1865
  %v1868 = vmul.f32 0.5, %v1867
  %v1869 = vsub.f32 1.5, %v1868
  %v1870 = vmul.f32 %v1865, %v1869
  %vm1871 = vweird.f32 %v1864
  %vm1872 = vweird.f32 %v1865
  %vm1873 = vmor %vm1871, %vm1872
  %v1874 = vsel %vm1873, %v1865, %v1870
  %v1875 = vld [vmem:[%s53] sm:$0xff]
  %v1876 = vmul.f32 %v1874, %v1875
  %v1877 = vld [vmem:[%s55] sm:$0xff]
  %v1878 = vmul.f32 %v1859, %v1876
  %v1879 = vsub.f32 %v1877, %v1878
  %1881 = vset.pattern.permute.xlu0 0
  %1882 = vperm.xlu0 %1881, %v1876
  %v1883 = vpop.permute.xlu0 %1882
  %v1885 = vmul.f32 %v1850, %v1883
  %1887 = vset.pattern.permute.xlu0 0
  %1888 = vperm.xlu0 %1887, %v1879
  %v1889 = vpop.permute.xlu0 %1888
  %v1891 = vadd.f32 %v1885, %v1889
  %v1892 = vsel %vm1852, %v1891, 0.0
  %1893 = vst [vmem:[#allocation8] sm:$0xff] %v1892
  %v1894 = vld [vmem:[#allocation8] sm:$0xff]
  %v1895 = vld [vmem:[#allocation8 + $0x8] sm:$0xff]
  %1898 = vrot.lane.b32.xlu0 %v1894, 126
  %v1899 = vpop.permute.xlu0 %1898
  %1900 = vrot.lane.b32.xlu0 %v1895, 126
  %v1901 = vpop.permute.xlu0 %1900
  %v1902 = vsel %vm456, %v1899, %v1901
  %1904 = vst [vmem:[#allocation11] sm:$0xff] %v1902
  %v1905 = vld [vmem:[#allocation8] sm:$0xff]
  %v1906 = vld [vmem:[#allocation8 + $0x8] sm:$0xff]
  %1909 = vrot.lane.b32.xlu0 %v1905, 127
  %v1910 = vpop.permute.xlu0 %1909
  %1911 = vrot.lane.b32.xlu0 %v1906, 127
  %v1912 = vpop.permute.xlu0 %1911
  %v1913 = vsel %vm181, %v1910, %v1912
  %1915 = vst [vmem:[#allocation11 + $0x8] sm:$0xff] %v1913
  %v1916 = vld [vmem:[#allocation8] sm:$0xff]
  %1917 = vst [vmem:[#allocation11 + $0x10] sm:$0xff] %v1916
  %v1918 = vld [vmem:[%s57] sm:$0xf]
  %v1919 = vld [vmem:[#allocation11] sm:$0xff]
  %v1920 = vld [vmem:[#allocation11 + $0x8] sm:$0xff]
  %v1921 = vld [vmem:[#allocation11 + $0x10] sm:$0xff]
  %v1922 = vld [vmem:[%s61] sm:$0xf]
  %1924 = vset.pattern.permute.xlu0 0
  %1925 = vperm.xlu0 %1924, %v1922
  %v1926 = vpop.permute.xlu0 %1925
  %vm1928 = vcmask 195584
  %v1930 = vsel %vm1928, %v1918, 0
  %1932 = vmatpush.msra.mxu0 0.0
  %1933 = vmatpush.msra.mxu0 0.0
  %1934 = vmatpush.msra.mxu0 0.0
  %1935 = vmatpush.msra.mxu0 0.0
  %1936 = vmatpush.msra.mxu0 0.0
  %1937 = vmatpush.msra.mxu0 0.0
  %1938 = vmatpush.msra.mxu0 0.0
  %1939 = vmatpush.msra.mxu0 0.0
  %1940 = vmatpush.msra.mxu0 0.0
  %1941 = vmatpush.msra.mxu0 0.0
  %1942 = vmatpush.msra.mxu0 0.0
  %1943 = vmatpush.msra.mxu0 0.0
  %1944 = vmatpush.msra.mxu0 0.0
  %1945 = vmatpush.msra.mxu0 %v1921
  %1946 = vmatpush.msra.mxu0 %v1920
  %1947 = vmatpush.msra.mxu0 %v1919
  %1948 = vmatmul.f32.gmra.mxu0 %v1930
  %v1949 = vpop.f32.mrf.mxu0
  %v1950 = vadd.f32 %v1926, %v1949
  %1951 = vdwg.mxu0
  %vm1952 = vcmp.ge.s32.totalorder %v163, 1
  %vm1953 = vmand %vm1952, %vm983
  %v1954 = vld [vmem:[#allocation8] sm:$0xff]
  %v1955 = vld [vmem:[#allocation8 + $0x8] sm:$0xff]
  %1958 = vrot.lane.b32.xlu0 %v1954, 126
  %v1959 = vpop.permute.xlu0 %1958
  %1960 = vrot.lane.b32.xlu0 %v1955, 126
  %v1961 = vpop.permute.xlu0 %1960
  %v1962 = vsel %vm456, %v1959, %v1961
  %1964 = vst [vmem:[#allocation11] sm:$0xff] %v1962
  %v1965 = vld [vmem:[#allocation8] sm:$0xff]
  %v1966 = vld [vmem:[#allocation8 + $0x8] sm:$0xff]
  %1969 = vrot.lane.b32.xlu0 %v1965, 127
  %v1970 = vpop.permute.xlu0 %1969
  %1971 = vrot.lane.b32.xlu0 %v1966, 127
  %v1972 = vpop.permute.xlu0 %1971
  %v1973 = vsel %vm181, %v1970, %v1972
  %1975 = vst [vmem:[#allocation11 + $0x8] sm:$0xff] %v1973
  %v1976 = vld [vmem:[%s59] sm:$0xf]
  %v1977 = vld [vmem:[#allocation11] sm:$0xff]
  %v1978 = vld [vmem:[#allocation11 + $0x8] sm:$0xff]
  %v1979 = vld [vmem:[%s61] sm:$0xf]
  %1981 = vset.pattern.permute.xlu0 0
  %1982 = vperm.xlu0 %1981, %v1979
  %v1983 = vpop.permute.xlu0 %1982
  %vm1985 = vcmask 130048
  %v1987 = vsel %vm1985, %v1976, 0
  %1989 = vmatpush.msra.mxu0 0.0
  %1990 = vmatpush.msra.mxu0 0.0
  %1991 = vmatpush.msra.mxu0 0.0
  %1992 = vmatpush.msra.mxu0 0.0
  %1993 = vmatpush.msra.mxu0 0.0
  %1994 = vmatpush.msra.mxu0 0.0
  %1995 = vmatpush.msra.mxu0 0.0
  %1996 = vmatpush.msra.mxu0 0.0
  %1997 = vmatpush.msra.mxu0 0.0
  %1998 = vmatpush.msra.mxu0 0.0
  %1999 = vmatpush.msra.mxu0 0.0
  %2000 = vmatpush.msra.mxu0 0.0
  %2001 = vmatpush.msra.mxu0 0.0
  %2002 = vmatpush.msra.mxu0 0.0
  %2003 = vmatpush.msra.mxu0 %v1978
  %2004 = vmatpush.msra.mxu0 %v1977
  %2005 = vmatmul.f32.gmra.mxu0 %v1987
  %v2006 = vpop.f32.mrf.mxu0
  %v2007 = vadd.f32 %v1983, %v2006
  %2008 = vdwg.mxu0
  %vm2009 = vcmp.lt.s32.totalorder %v163, 15
  %vm2010 = vmand %vm1952, %vm2009
  %v2011 = vmul.f32 %v1950, 0.70710677
  %v2012 = vand.u32 2147483647, %v2011
  %v2013 = vmul.f32 %v2012, 0.3275911
  %v2014 = vadd.f32 %v2013, 1.0
  %v2015 = vrcp.pop %v2014
  %v2016 = vmul.f32 %v2014, %v2015
  %v2017 = vsub.f32 2.0, %v2016
  %v2018 = vmul.f32 %v2015, %v2017
  %v2019 = vmul.f32 %v2018, 1.0614054
  %v2020 = vadd.f32 %v2019, -1.4531521
  %v2021 = vmul.f32 %v2018, %v2020
  %v2022 = vadd.f32 %v2021, 1.4214138
  %v2023 = vmul.f32 %v2018, %v2022
  %v2024 = vadd.f32 %v2023, -0.28449672
  %v2025 = vmul.f32 %v2018, %v2024
  %v2026 = vadd.f32 %v2025, 0.2548296
  %v2027 = vmul.f32 %v2018, %v2026
  %v2028 = vsub.f32 0.0, %v2012
  %v2029 = vmul.f32 %v2028, %v2012
  %v2030 = vmul.f32 %v2029, 1.442695
  %v2031 = vpow.pop %v2030
  %v2032 = vmul.f32 %v2027, %v2031
  %v2033 = vsub.f32 1.0, %v2032
  %vm2034 = vcmp.lt.f32.partialorder %v2011, 0.0
  %v2035 = vsub.f32 0.0, %v2033
  %v2036 = vsel %vm2034, %v2035, %v2033
  %v2037 = vmul.f32 %v1950, 0.5
  %v2038 = vadd.f32 %v2036, 1.0
  %v2039 = vmul.f32 %v2037, %v2038
  %v2040 = vmul.f32 %v2007, 0.70710677
  %v2041 = vand.u32 2147483647, %v2040
  %v2042 = vmul.f32 %v2041, 0.3275911
  %v2043 = vadd.f32 %v2042, 1.0
  %v2044 = vrcp.pop %v2043
  %v2045 = vmul.f32 %v2043, %v2044
  %v2046 = vsub.f32 2.0, %v2045
  %v2047 = vmul.f32 %v2044, %v2046
  %v2048 = vmul.f32 %v2047, 1.0614054
  %v2049 = vadd.f32 %v2048, -1.4531521
  %v2050 = vmul.f32 %v2047, %v2049
  %v2051 = vadd.f32 %v2050, 1.4214138
  %v2052 = vmul.f32 %v2047, %v2051
  %v2053 = vadd.f32 %v2052, -0.28449672
  %v2054 = vmul.f32 %v2047, %v2053
  %v2055 = vadd.f32 %v2054, 0.2548296
  %v2056 = vmul.f32 %v2047, %v2055
  %v2057 = vsub.f32 0.0, %v2041
  %v2058 = vmul.f32 %v2057, %v2041
  %v2059 = vmul.f32 %v2058, 1.442695
  %v2060 = vpow.pop %v2059
  %v2061 = vmul.f32 %v2056, %v2060
  %v2062 = vsub.f32 1.0, %v2061
  %vm2063 = vcmp.lt.f32.partialorder %v2040, 0.0
  %v2064 = vsub.f32 0.0, %v2062
  %v2065 = vsel %vm2063, %v2064, %v2062
  %v2066 = vmul.f32 %v2007, 0.5
  %v2067 = vadd.f32 %v2065, 1.0
  %v2068 = vmul.f32 %v2066, %v2067
  %v2069 = vsel %vm1953, 1, 0
  %vm2070 = vcmp.eq.s32.totalorder %v2069, 1
  %v2071 = vsel %vm2070, %v2039, 0.0
  %v2072 = vsel %vm199, %v2071, 0.0
  %2073 = vadd.xlane.f32.xlu0 %v2072
  %v2074 = vpop.xlane.xlu0 %2073
  %v2075 = vmul.f32 %v2071, %v2071
  %v2076 = vsel %vm199, %v2075, 0.0
  %2077 = vadd.xlane.f32.xlu0 %v2076
  %v2078 = vpop.xlane.xlu0 %2077
  %v2079 = vsel %vm2010, 1, 0
  %vm2080 = vcmp.eq.s32.totalorder %v2079, 1
  %v2081 = vsel %vm2080, %v2068, 0.0
  %v2082 = vsel %vm199, %v2081, 0.0
  %2083 = vadd.xlane.f32.xlu0 %v2082
  %v2084 = vpop.xlane.xlu0 %2083
  %v2085 = vmul.f32 %v2081, %v2081
  %v2086 = vsel %vm199, %v2085, 0.0
  %2087 = vadd.xlane.f32.xlu0 %v2086
  %v2088 = vpop.xlane.xlu0 %2087
  %v2089 = vadd.f32 %v2074, %v2084
  %v2090 = vadd.f32 %v2078, %v2088
  %v2091 = vmul.f32 %v2089, 0.01724138
  %v2092 = vmul.f32 %v2090, 0.01724138
  %v2093 = vmul.f32 %v2091, %v2091
  %v2094 = vsub.f32 %v2092, %v2093
  %v2095 = vmax.f32 %v2094, 0.0
  %v2096 = vadd.f32 %v2095, 1e-05
  %v2097 = vrsqrt.pop %v2096
  %v2098 = vmul.f32 %v2097, %v2096
  %v2099 = vmul.f32 %v2098, %v2097
  %v2100 = vmul.f32 0.5, %v2099
  %v2101 = vsub.f32 1.5, %v2100
  %v2102 = vmul.f32 %v2097, %v2101
  %vm2103 = vweird.f32 %v2096
  %vm2104 = vweird.f32 %v2097
  %vm2105 = vmor %vm2103, %vm2104
  %v2106 = vsel %vm2105, %v2097, %v2102
  %v2107 = vld [vmem:[%s63] sm:$0xf]
  %v2108 = vmul.f32 %v2106, %v2107
  %v2109 = vld [vmem:[%s65] sm:$0xf]
  %v2110 = vmul.f32 %v2091, %v2108
  %v2111 = vsub.f32 %v2109, %v2110
  %2113 = vset.pattern.permute.xlu0 0
  %2114 = vperm.xlu0 %2113, %v2108
  %v2115 = vpop.permute.xlu0 %2114
  %v2117 = vmul.f32 %v2039, %v2115
  %2119 = vset.pattern.permute.xlu0 0
  %2120 = vperm.xlu0 %2119, %v2111
  %v2121 = vpop.permute.xlu0 %2120
  %v2123 = vadd.f32 %v2117, %v2121
  %v2124 = vsel %vm2070, %v2123, 0.0
  %2125 = vst [vmem:[#allocation9] sm:$0xf] %v2124
  %v2126 = vmul.f32 %v2068, %v2115
  %v2127 = vadd.f32 %v2126, %v2121
  %v2128 = vsel %vm2080, %v2127, 0.0
  %2129 = vst [vmem:[#allocation10] sm:$0xf] %v2128
  %v2130 = vld [vmem:[#allocation9] sm:$0xff]
  %2132 = vst [vmem:[#allocation1] ss:$2 sm:$0xff] %v2130
  %v2133 = vld.sshfl [vmem:[#allocation1] sm:$0xff pattern:$0x75316420]
  %v2134 = vld.sshfl [vmem:[#allocation1 + $0x8] sm:$0xff pattern:$0x75316420]
  %2135 = vrot.lane.b32.xlu0 %v2133, 127
  %v2136 = vpop.permute.xlu0 %2135
  %2137 = vrot.lane.b32.xlu0 %v2134, 127
  %v2138 = vpop.permute.xlu0 %2137
  %v2139 = vsel %vm181, %v2136, %v2138
  %2141 = vst [vmem:[#allocation11] sm:$0xf] %v2139
  %v2142 = vld [vmem:[#allocation10] sm:$0xf]
  %2143 = vst [vmem:[#allocation11 + $0x4] sm:$0xf] %v2142
  %v2144 = vld [vmem:[#allocation9] sm:$0xf]
  %2145 = vst [vmem:[#allocation11 + $0x8] sm:$0xf] %v2144
  %v2146 = vld [vmem:[%s67] sm:$0xf]
  %v2147 = vld [vmem:[#allocation11] sm:$0xff]
  %v2148 = vld [vmem:[#allocation11 + $0x8] sm:$0xf]
  %v2149 = vld [vmem:[%s71] sm:$0xf]
  %2151 = vset.pattern.permute.xlu0 0
  %2152 = vperm.xlu0 %2151, %v2149
  %v2153 = vpop.permute.xlu0 %2152
  %vm2155 = vcmask 97280
  %v2157 = vsel %vm2155, %v2146, 0
  %v2160 = vsel %vm199, %v2148, 0
  %2162 = vmatpush.msra.mxu0 0.0
  %2163 = vmatpush.msra.mxu0 0.0
  %2164 = vmatpush.msra.mxu0 0.0
  %2165 = vmatpush.msra.mxu0 0.0
  %2166 = vmatpush.msra.mxu0 0.0
  %2167 = vmatpush.msra.mxu0 0.0
  %2168 = vmatpush.msra.mxu0 0.0
  %2169 = vmatpush.msra.mxu0 0.0
  %2170 = vmatpush.msra.mxu0 0.0
  %2171 = vmatpush.msra.mxu0 0.0
  %2172 = vmatpush.msra.mxu0 0.0
  %2173 = vmatpush.msra.mxu0 0.0
  %2174 = vmatpush.msra.mxu0 0.0
  %2175 = vmatpush.msra.mxu0 0.0
  %2176 = vmatpush.msra.mxu0 %v2160
  %2177 = vmatpush.msra.mxu0 %v2147
  %2178 = vmatmul.f32.gmra.mxu0 %v2157
  %v2179 = vpop.f32.mrf.mxu0
  %v2180 = vadd.f32 %v2153, %v2179
  %2181 = vdwg.mxu0
  %v2182 = vxor.u32 %v2180, 2147483648
  %v2183 = vmul.f32 %v2182, 1.442695
  %v2184 = vpow.pop %v2183
  %v2185 = vadd.f32 %v2184, 1.0
  %v2186 = vrcp.pop %v2185
  %v2187 = vmul.f32 %v2185, %v2186
  %v2188 = vsub.f32 1.0, %v2187
  %v2189 = vmul.f32 %v2186, %v2188
  %v2190 = vadd.f32 %v2186, %v2189
  %vm2191 = vweird.f32 %v2185
  %vm2192 = vweird.f32 %v2186
  %vm2193 = vmor %vm2191, %vm2192
  %v2194 = vsel %vm2193, %v2186, %v2190
  %v2195 = vand.u32 2147483647, %v2185
  %vm2196 = vcmp.eq.f32.partialorder %v2195, 8.507059e+37
  %v2197 = vand.u32 %v2185, 2147483648
  %v2198 = vor.u32 1.1754944e-38, %v2197
  %v2199 = vsel %vm2196, %v2198, %v2194
  %v2200 = vmul.f32 1.0, %v2199
  %2201 = vst [vmem:[%s75] sm:$0xf] %v2200
  %v2202 = vld [vmem:[#allocation9] sm:$0xff]
  %2204 = vst [vmem:[#allocation1] ss:$2 sm:$0xff] %v2202
  %v2205 = vld.sshfl [vmem:[#allocation1] sm:$0xff pattern:$0x75316420]
  %v2206 = vld.sshfl [vmem:[#allocation1 + $0x8] sm:$0xff pattern:$0x75316420]
  %2207 = vrot.lane.b32.xlu0 %v2205, 127
  %v2208 = vpop.permute.xlu0 %2207
  %2209 = vrot.lane.b32.xlu0 %v2206, 127
  %v2210 = vpop.permute.xlu0 %2209
  %v2211 = vsel %vm181, %v2208, %v2210
  %2213 = vst [vmem:[#allocation11] sm:$0xf] %v2211
  %v2214 = vld [vmem:[#allocation10] sm:$0xf]
  %2215 = vst [vmem:[#allocation11 + $0x4] sm:$0xf] %v2214
  %v2216 = vld [vmem:[%s69] sm:$0xf]
  %v2217 = vld [vmem:[#allocation11] sm:$0xff]
  %v2218 = vld [vmem:[%s71] sm:$0xf]
  %2220 = vset.pattern.permute.xlu0 0
  %2221 = vperm.xlu0 %2220, %v2218
  %v2222 = vpop.permute.xlu0 %2221
  %vm2224 = vcmask 64512
  %v2226 = vsel %vm2224, %v2216, 0
  %2228 = vmatpush.msra.mxu0 0.0
  %2229 = vmatpush.msra.mxu0 0.0
  %2230 = vmatpush.msra.mxu0 0.0
  %2231 = vmatpush.msra.mxu0 0.0
  %2232 = vmatpush.msra.mxu0 0.0
  %2233 = vmatpush.msra.mxu0 0.0
  %2234 = vmatpush.msra.mxu0 0.0
  %2235 = vmatpush.msra.mxu0 0.0
  %2236 = vmatpush.msra.mxu0 0.0
  %2237 = vmatpush.msra.mxu0 0.0
  %2238 = vmatpush.msra.mxu0 0.0
  %2239 = vmatpush.msra.mxu0 0.0
  %2240 = vmatpush.msra.mxu0 0.0
  %2241 = vmatpush.msra.mxu0 0.0
  %2242 = vmatpush.msra.mxu0 0.0
  %2243 = vmatpush.msra.mxu0 %v2217
  %2244 = vmatmul.f32.gmra.mxu0 %v2226
  %v2245 = vpop.f32.mrf.mxu0
  %v2246 = vadd.f32 %v2222, %v2245
  %2247 = vdwg.mxu0
  %v2248 = vxor.u32 %v2246, 2147483648
  %v2249 = vmul.f32 %v2248, 1.442695
  %v2250 = vpow.pop %v2249
  %v2251 = vadd.f32 %v2250, 1.0
  %v2252 = vrcp.pop %v2251
  %v2253 = vmul.f32 %v2251, %v2252
  %v2254 = vsub.f32 1.0, %v2253
  %v2255 = vmul.f32 %v2252, %v2254
  %v2256 = vadd.f32 %v2252, %v2255
  %vm2257 = vweird.f32 %v2251
  %vm2258 = vweird.f32 %v2252
  %vm2259 = vmor %vm2257, %vm2258
  %v2260 = vsel %vm2259, %v2252, %v2256
  %v2261 = vand.u32 2147483647, %v2251
  %vm2262 = vcmp.eq.f32.partialorder %v2261, 8.507059e+37
  %v2263 = vand.u32 %v2251, 2147483648
  %v2264 = vor.u32 1.1754944e-38, %v2263
  %v2265 = vsel %vm2262, %v2264, %v2260
  %v2266 = vmul.f32 1.0, %v2265
  %2267 = vst [vmem:[%s77] sm:$0xf] %v2266
  %v2268 = vld [vmem:[#allocation10] sm:$0xff]
  %2270 = vst [vmem:[#allocation1] ss:$2 sm:$0xff] %v2268
  %v2271 = vld.sshfl [vmem:[#allocation1] sm:$0xff pattern:$0x75316420]
  %v2272 = vld.sshfl [vmem:[#allocation1 + $0x8] sm:$0xff pattern:$0x75316420]
  %2273 = vrot.lane.b32.xlu0 %v2271, 127
  %v2274 = vpop.permute.xlu0 %2273
  %2275 = vrot.lane.b32.xlu0 %v2272, 127
  %v2276 = vpop.permute.xlu0 %2275
  %v2277 = vsel %vm181, %v2274, %v2276
  %2279 = vst [vmem:[#allocation11] sm:$0xf] %v2277
  %v2280 = vld [vmem:[#allocation9] sm:$0xff]
  %2282 = vst [vmem:[#allocation1] ss:$2 sm:$0xff] %v2280
  %v2283 = vld.sshfl [vmem:[#allocation1] sm:$0xff pattern:$0x75316420]
  %v2284 = vld.sshfl [vmem:[#allocation1 + $0x8] sm:$0xff pattern:$0x75316420]
  %2285 = vrot.lane.b32.xlu0 %v2283, 127
  %v2286 = vpop.permute.xlu0 %2285
  %2287 = vrot.lane.b32.xlu0 %v2284, 127
  %v2288 = vpop.permute.xlu0 %2287
  %v2289 = vsel %vm181, %v2286, %v2288
  %2291 = vst [vmem:[#allocation11 + $0x4] sm:$0xf] %v2289
  %v2292 = vld [vmem:[#allocation10] sm:$0xf]
  %2293 = vst [vmem:[#allocation11 + $0x8] sm:$0xf] %v2292
  %v2294 = vld [vmem:[%s67] sm:$0xf]
  %v2295 = vld [vmem:[#allocation11] sm:$0xff]
  %v2296 = vld [vmem:[#allocation11 + $0x8] sm:$0xf]
  %v2297 = vld [vmem:[%s71] sm:$0xf]
  %2299 = vset.pattern.permute.xlu0 0
  %2300 = vperm.xlu0 %2299, %v2297
  %v2301 = vpop.permute.xlu0 %2300
  %v2304 = vsel %vm2155, %v2294, 0
  %v2307 = vsel %vm199, %v2296, 0
  %2309 = vmatpush.msra.mxu0 0.0
  %2310 = vmatpush.msra.mxu0 0.0
  %2311 = vmatpush.msra.mxu0 0.0
  %2312 = vmatpush.msra.mxu0 0.0
  %2313 = vmatpush.msra.mxu0 0.0
  %2314 = vmatpush.msra.mxu0 0.0
  %2315 = vmatpush.msra.mxu0 0.0
  %2316 = vmatpush.msra.mxu0 0.0
  %2317 = vmatpush.msra.mxu0 0.0
  %2318 = vmatpush.msra.mxu0 0.0
  %2319 = vmatpush.msra.mxu0 0.0
  %2320 = vmatpush.msra.mxu0 0.0
  %2321 = vmatpush.msra.mxu0 0.0
  %2322 = vmatpush.msra.mxu0 0.0
  %2323 = vmatpush.msra.mxu0 %v2307
  %2324 = vmatpush.msra.mxu0 %v2295
  %2325 = vmatmul.f32.gmra.mxu0 %v2304
  %v2326 = vpop.f32.mrf.mxu0
  %v2327 = vadd.f32 %v2301, %v2326
  %2328 = vdwg.mxu0
  %v2329 = vxor.u32 %v2327, 2147483648
  %v2330 = vmul.f32 %v2329, 1.442695
  %v2331 = vpow.pop %v2330
  %v2332 = vadd.f32 %v2331, 1.0
  %v2333 = vrcp.pop %v2332
  %v2334 = vmul.f32 %v2332, %v2333
  %v2335 = vsub.f32 1.0, %v2334
  %v2336 = vmul.f32 %v2333, %v2335
  %v2337 = vadd.f32 %v2333, %v2336
  %vm2338 = vweird.f32 %v2332
  %vm2339 = vweird.f32 %v2333
  %vm2340 = vmor %vm2338, %vm2339
  %v2341 = vsel %vm2340, %v2333, %v2337
  %v2342 = vand.u32 2147483647, %v2332
  %vm2343 = vcmp.eq.f32.partialorder %v2342, 8.507059e+37
  %v2344 = vand.u32 %v2332, 2147483648
  %v2345 = vor.u32 1.1754944e-38, %v2344
  %v2346 = vsel %vm2343, %v2345, %v2341
  %v2347 = vmul.f32 1.0, %v2346
  %2348 = vst [vmem:[%s79] sm:$0xf] %v2347
  %v2349 = vld [vmem:[#allocation10] sm:$0xff]
  %2351 = vst [vmem:[#allocation1] ss:$2 sm:$0xff] %v2349
  %v2352 = vld.sshfl [vmem:[#allocation1] sm:$0xff pattern:$0x75316420]
  %v2353 = vld.sshfl [vmem:[#allocation1 + $0x8] sm:$0xff pattern:$0x75316420]
  %2354 = vrot.lane.b32.xlu0 %v2352, 127
  %v2355 = vpop.permute.xlu0 %2354
  %2356 = vrot.lane.b32.xlu0 %v2353, 127
  %v2357 = vpop.permute.xlu0 %2356
  %v2358 = vsel %vm181, %v2355, %v2357
  %2360 = vst [vmem:[#allocation11] sm:$0xf] %v2358
  %v2361 = vld [vmem:[#allocation9] sm:$0xff]
  %2363 = vst [vmem:[#allocation1] ss:$2 sm:$0xff] %v2361
  %v2364 = vld.sshfl [vmem:[#allocation1] sm:$0xff pattern:$0x75316420]
  %v2365 = vld.sshfl [vmem:[#allocation1 + $0x8] sm:$0xff pattern:$0x75316420]
  %2366 = vrot.lane.b32.xlu0 %v2364, 127
  %v2367 = vpop.permute.xlu0 %2366
  %2368 = vrot.lane.b32.xlu0 %v2365, 127
  %v2369 = vpop.permute.xlu0 %2368
  %v2370 = vsel %vm181, %v2367, %v2369
  %2372 = vst [vmem:[#allocation11 + $0x4] sm:$0xf] %v2370
  %v2373 = vld [vmem:[%s69] sm:$0xf]
  %v2374 = vld [vmem:[#allocation11] sm:$0xff]
  %v2375 = vld [vmem:[%s71] sm:$0xf]
  %2377 = vset.pattern.permute.xlu0 0
  %2378 = vperm.xlu0 %2377, %v2375
  %v2379 = vpop.permute.xlu0 %2378
  %v2382 = vsel %vm2224, %v2373, 0
  %2384 = vmatpush.msra.mxu0 0.0
  %2385 = vmatpush.msra.mxu0 0.0
  %2386 = vmatpush.msra.mxu0 0.0
  %2387 = vmatpush.msra.mxu0 0.0
  %2388 = vmatpush.msra.mxu0 0.0
  %2389 = vmatpush.msra.mxu0 0.0
  %2390 = vmatpush.msra.mxu0 0.0
  %2391 = vmatpush.msra.mxu0 0.0
  %2392 = vmatpush.msra.mxu0 0.0
  %2393 = vmatpush.msra.mxu0 0.0
  %2394 = vmatpush.msra.mxu0 0.0
  %2395 = vmatpush.msra.mxu0 0.0
  %2396 = vmatpush.msra.mxu0 0.0
  %2397 = vmatpush.msra.mxu0 0.0
  %2398 = vmatpush.msra.mxu0 0.0
  %2399 = vmatpush.msra.mxu0 %v2374
  %2400 = vmatmul.f32.gmra.mxu0 %v2382
  %v2401 = vpop.f32.mrf.mxu0
  %v2402 = vadd.f32 %v2379, %v2401
  %2403 = vdwg.mxu0
  %v2404 = vxor.u32 %v2402, 2147483648
  %v2405 = vmul.f32 %v2404, 1.442695
  %v2406 = vpow.pop %v2405
  %v2407 = vadd.f32 %v2406, 1.0
  %v2408 = vrcp.pop %v2407
  %v2409 = vmul.f32 %v2407, %v2408
  %v2410 = vsub.f32 1.0, %v2409
  %v2411 = vmul.f32 %v2408, %v2410
  %v2412 = vadd.f32 %v2408, %v2411
  %vm2413 = vweird.f32 %v2407
  %vm2414 = vweird.f32 %v2408
  %vm2415 = vmor %vm2413, %vm2414
  %v2416 = vsel %vm2415, %v2408, %v2412
  %v2417 = vand.u32 2147483647, %v2407
  %vm2418 = vcmp.eq.f32.partialorder %v2417, 8.507059e+37
  %v2419 = vand.u32 %v2407, 2147483648
  %v2420 = vor.u32 1.1754944e-38, %v2419
  %v2421 = vsel %vm2418, %v2420, %v2416
  %v2422 = vmul.f32 1.0, %v2421
  %2423 = vst [vmem:[%s81] sm:$0xf] %v2422
  // Predicated region
  $region146: #{cae4_bn_forward.1} parent=0 // pred_check
    _
  $region147: #{cae4_bn_forward.1} parent=0 // pred_check_branch
    %2425 = sbr.rel (0) target = $region149
  $region148: #{cae4_bn_forward.1} parent=0 // pred_region
    _
  $region149: #{cae4_bn_forward.1} parent=0 // pred_fallthru
    _
  // Predicated region
  $region150: #{cae4_bn_forward.1} parent=0 // pred_check
    _
  $region151: #{cae4_bn_forward.1} parent=0 // pred_check_branch
    %2427 = sbr.rel (0) target = $region153
  $region152: #{cae4_bn_forward.1} parent=0 // pred_region
    _
  $region153: #{cae4_bn_forward.1} parent=0 // pred_fallthru
    _
  // Predicated region
  $region154: #{cae4_bn_forward.1} parent=0 // pred_check
    _
  $region155: #{cae4_bn_forward.1} parent=0 // pred_check_branch
    %2429 = sbr.rel (0) target = $region157
  $region156: #{cae4_bn_forward.1} parent=0 // pred_region
    _
  $region157: #{cae4_bn_forward.1} parent=0 // pred_fallthru
    _
  // Predicated region
  $region158: #{cae4_bn_forward.1} parent=0 // pred_check
    _
  $region159: #{cae4_bn_forward.1} parent=0 // pred_check_branch
    %2431 = sbr.rel (0) target = $region161
  $region160: #{cae4_bn_forward.1} parent=0 // pred_region
    _
  $region161: #{cae4_bn_forward.1} parent=0 // pred_fallthru
    _
  // Predicated region
  $region162: #{cae4_bn_forward.1} parent=0 // pred_check
    _
  $region163: #{cae4_bn_forward.1} parent=0 // pred_check_branch
    %2433 = sbr.rel (0) target = $region165
  $region164: #{cae4_bn_forward.1} parent=0 // pred_region
    _
  $region165: #{cae4_bn_forward.1} parent=0 // pred_fallthru
    _
  // Predicated region
  $region166: #{cae4_bn_forward.1} parent=0 // pred_check
    _
  $region167: #{cae4_bn_forward.1} parent=0 // pred_check_branch
    %2435 = sbr.rel (0) target = $region169
  $region168: #{cae4_bn_forward.1} parent=0 // pred_region
    _
  $region169: #{cae4_bn_forward.1} parent=0 // pred_fallthru
    _
  // Predicated region
  $region170: #{cae4_bn_forward.1} parent=0 // pred_check
    _
  $region171: #{cae4_bn_forward.1} parent=0 // pred_check_branch
    %2437 = sbr.rel (0) target = $region173
  $region172: #{cae4_bn_forward.1} parent=0 // pred_region
    _
  $region173: #{cae4_bn_forward.1} parent=0 // pred_fallthru
    _
  // Predicated region
  $region174: #{cae4_bn_forward.1} parent=0 // pred_check
    _
  $region175: #{cae4_bn_forward.1} parent=0 // pred_check_branch
    %2439 = sbr.rel (0) target = $region177
  $region176: #{cae4_bn_forward.1} parent=0 // pred_region
    _
  $region177: #{cae4_bn_forward.1} parent=0 // pred_fallthru
    _
  // Predicated region
  $region178: #{cae4_bn_forward.1} parent=0 // pred_check
    _
  $region179: #{cae4_bn_forward.1} parent=0 // pred_check_branch
    %2441 = sbr.rel (0) target = $region181
  $region180: #{cae4_bn_forward.1} parent=0 // pred_region
    _
  $region181: #{cae4_bn_forward.1} parent=0 // pred_fallthru
    _
  // Predicated region
  $region182: #{cae4_bn_forward.1} parent=0 // pred_check
    _
  $region183: #{cae4_bn_forward.1} parent=0 // pred_check_branch
    %2443 = sbr.rel (0) target = $region185
  $region184: #{cae4_bn_forward.1} parent=0 // pred_region
    _
  $region185: #{cae4_bn_forward.1} parent=0 // pred_fallthru
    _

</llo_original>
